<compile_context>
chip_gen: v7x
topology: tpu7x:2x2x1
jax: 0.10.0
libtpu: 0.0.40
codegen_flags: <defaults>
</compile_context>

<pallas_src>
import jax
import jax.numpy as jnp
from jax.experimental import pallas as pl
from jax.experimental.pallas import tpu as pltpu

VMEM_SPEC = pl.BlockSpec(memory_space=pltpu.MemorySpace.VMEM)


# ----------------------------- Pallas kernels ------------------------------

def _conv_relu_pool_kernel(p00_ref, p01_ref, p10_ref, p11_ref,
                           w_ref, b_ref, o_ref):
    """Four pool-phase patch tiles -> max(relu(conv)) pooled output tile.

    Each p*_ref is [tm, K] (K = kh*kw*Cin, (ki,kj,ci)-ordered), w_ref is
    [K, Cout], b_ref is [1, Cout]. Bias add and ReLU commute with the max,
    so they are applied once after the 4-way elementwise max.
    """
    w = w_ref[...]
    y = jnp.maximum(
        jnp.maximum(
            jnp.dot(p00_ref[...], w, preferred_element_type=jnp.float32),
            jnp.dot(p01_ref[...], w, preferred_element_type=jnp.float32)),
        jnp.maximum(
            jnp.dot(p10_ref[...], w, preferred_element_type=jnp.float32),
            jnp.dot(p11_ref[...], w, preferred_element_type=jnp.float32)))
    o_ref[...] = jnp.maximum(y + b_ref[...], 0.0)


def _mlp_head_kernel(x_ref, w1_ref, b1_ref, w2_ref, b2_ref, o_ref):
    """Fused Linear(1024,128)+ReLU -> Linear(128,2) -> softmax."""
    h = jnp.dot(x_ref[...], w1_ref[...],
                preferred_element_type=jnp.float32) + b1_ref[...]
    h = jnp.maximum(h, 0.0)
    # TODO(synk): nn.Dropout(p=0.3) is identity in eval/inference mode; no mask.
    logits = jnp.dot(h, w2_ref[...],
                     preferred_element_type=jnp.float32) + b2_ref[...]
    m = jnp.max(logits, axis=1, keepdims=True)
    e = jnp.exp(logits - m)
    o_ref[...] = e / jnp.sum(e, axis=1, keepdims=True)


# ------------------------------ wrappers ------------------------------------

def _pick_tm(m):
    for tm in (256, 512, 128, 64, 32, 16, 8):
        if m % tm == 0:
            return tm
    return m


def conv_relu_pool(x_nhwc, w_mat, b_row, kh, kw, stride, pad):
    """Conv2d + ReLU + MaxPool(2,2) fused.

    x_nhwc : [B, H, W, C]  (channels-last)
    w_mat  : [kh*kw*C, Cout]  ((ki,kj,ci)-ordered contraction dim)
    b_row  : [1, Cout]
    returns: [B, oh//2, ow//2, Cout]  (channels-last, pooled)
    """
    B, H, W, C = x_nhwc.shape
    Cout = w_mat.shape[1]
    xp = jnp.pad(x_nhwc, ((0, 0), (pad, pad), (pad, pad), (0, 0)))
    Hp, Wp = H + 2 * pad, W + 2 * pad
    oh = (Hp - kh) // stride + 1
    ow = (Wp - kw) // stride + 1
    assert oh % 2 == 0 and ow % 2 == 0, "MaxPool2d(2,2) path assumes even conv output"
    ohp, owp = oh // 2, ow // 2
    K = kh * kw * C

    # One patch matrix per 2x2 pool phase (di, dj): rows = pooled positions.
    def phase(di, dj):
        cols = []
        for ki in range(kh):
            for kj in range(kw):
                r0 = stride * di + ki
                c0 = stride * dj + kj
                sl = xp[:,
                        r0:r0 + 2 * stride * (ohp - 1) + 1:2 * stride,
                        c0:c0 + 2 * stride * (owp - 1) + 1:2 * stride,
                        :]                       # [B, ohp, owp, C]
                cols.append(sl)
        p = jnp.concatenate(cols, axis=-1)        # [B, ohp, owp, kh*kw*C]
        return p.reshape(B * ohp * owp, K)

    phases = (phase(0, 0), phase(0, 1), phase(1, 0), phase(1, 1))

    M = B * ohp * owp
    tm = _pick_tm(M)
    patch_spec = pl.BlockSpec((tm, K), lambda i: (i, 0))
    out = pl.pallas_call(
        _conv_relu_pool_kernel,
        out_shape=jax.ShapeDtypeStruct((M, Cout), jnp.float32),
        grid=(M // tm,),
        in_specs=[patch_spec] * 4 + [
            pl.BlockSpec((K, Cout), lambda i: (0, 0)),   # weight resident
            pl.BlockSpec((1, Cout), lambda i: (0, 0)),   # bias resident
        ],
        out_specs=pl.BlockSpec((tm, Cout), lambda i: (i, 0)),
        compiler_params=pltpu.CompilerParams(
            dimension_semantics=("parallel",)),
    )(*phases, w_mat, b_row)
    return out.reshape(B, ohp, owp, Cout)


def mlp_head(x, w1, b1, w2, b2):
    """x:[B,1024] -> probs:[B,2] (fc1+ReLU+fc2+softmax in one kernel)."""
    B = x.shape[0]
    N = w2.shape[1]
    return pl.pallas_call(
        _mlp_head_kernel,
        out_shape=jax.ShapeDtypeStruct((B, N), jnp.float32),
        in_specs=[VMEM_SPEC] * 5,
        out_specs=VMEM_SPEC,
    )(x, w1, b1, w2, b2)


# ------------------------------ params --------------------------------------

def init_params(key):
    """Deterministic PyTorch-style uniform(-1/sqrt(fan_in), 1/sqrt(fan_in))."""
    ks = jax.random.split(key, 8)

    def u(k, shape, fan_in):
        bound = 1.0 / jnp.sqrt(jnp.float32(fan_in))
        return jax.random.uniform(k, shape, jnp.float32, -bound, bound)

    return {
        "c1_w": u(ks[0], (32, 3, 3, 3), 3 * 3 * 3),
        "c1_b": u(ks[1], (32,), 3 * 3 * 3),
        "c2_w": u(ks[2], (64, 32, 5, 5), 32 * 5 * 5),
        "c2_b": u(ks[3], (64,), 32 * 5 * 5),
        "f1_w": u(ks[4], (128, 4 * 4 * 64), 4 * 4 * 64),
        "f1_b": u(ks[5], (128,), 4 * 4 * 64),
        "f2_w": u(ks[6], (2, 128), 128),
        "f2_b": u(ks[7], (2,), 128),
    }


def prepare_params(p):
    """One-time layout prep (run eagerly, outside the per-step forward):
    * conv weights [Cout,Cin,kh,kw] -> [kh*kw*Cin, Cout] matching the
      (ki,kj,ci) patch ordering used by conv_relu_pool,
    * fc1 weight permuted from torch's (C,H,W) flatten order to our (H,W,C)
      channels-last flatten order and stored as [K,N],
    * fc2 weight stored as [K,N]; biases as [1,N] rows.
    """
    c1_w = p["c1_w"].transpose(2, 3, 1, 0).reshape(3 * 3 * 3, 32)
    c2_w = p["c2_w"].transpose(2, 3, 1, 0).reshape(5 * 5 * 32, 64)
    f1_w = p["f1_w"].reshape(128, 64, 4, 4).transpose(2, 3, 1, 0)
    f1_w = f1_w.reshape(4 * 4 * 64, 128)
    return {
        "c1_w": c1_w, "c1_b": p["c1_b"].reshape(1, 32),
        "c2_w": c2_w, "c2_b": p["c2_b"].reshape(1, 64),
        "f1_w": f1_w, "f1_b": p["f1_b"].reshape(1, 128),
        "f2_w": p["f2_w"].T, "f2_b": p["f2_b"].reshape(1, 2),
    }


# ------------------------------ forward --------------------------------------

def net_forward(params, x):
    # x: [B, 3, 64, 64] NCHW (torch layout). One transpose to NHWC; all
    # activations stay channels-last afterwards (no per-conv transposes).
    x = x.transpose(0, 2, 3, 1)                                   # [B,64,64,3]
    y = conv_relu_pool(x, params["c1_w"], params["c1_b"],
                       kh=3, kw=3, stride=2, pad=1)               # [B,16,16,32]
    y = conv_relu_pool(y, params["c2_w"], params["c2_b"],
                       kh=5, kw=5, stride=2, pad=2)               # [B,4,4,64]
    B = y.shape[0]
    y = y.reshape(B, 4 * 4 * 64)   # (H,W,C) flatten; f1_w pre-permuted to match
    return mlp_head(y, params["f1_w"], params["f1_b"],
                    params["f2_w"], params["f2_b"])               # [B, 2]


if __name__ == "__main__":
    key = jax.random.PRNGKey(0)
    pkey, xkey = jax.random.split(key)
    params = prepare_params(init_params(pkey))   # one-time weight layout prep
    x = jax.random.normal(xkey, (2, 3, 64, 64), jnp.float32)

    out = jax.jit(net_forward)(params, x)
    out = jax.block_until_ready(out)

    assert out.shape == (2, 2), out.shape
    assert bool(jnp.all(jnp.isfinite(out)))
    assert bool(jnp.allclose(jnp.sum(out, axis=1), 1.0, atol=1e-5))
    print("KERNEL_OK")
</pallas_src>

<mosaic_0001>
module attributes {stable_mosaic.version = 11 : i64} {
  func.func @_conv_relu_pool_kernel(%arg0: i32, %arg1: memref<256x27xf32, #tpu.memory_space<vmem>>, %arg2: memref<256x27xf32, #tpu.memory_space<vmem>>, %arg3: memref<256x27xf32, #tpu.memory_space<vmem>>, %arg4: memref<256x27xf32, #tpu.memory_space<vmem>>, %arg5: memref<27x32xf32, #tpu.memory_space<vmem>>, %arg6: memref<1x32xf32, #tpu.memory_space<vmem>>, %arg7: memref<256x32xf32, #tpu.memory_space<vmem>>) attributes {dimension_semantics = [#tpu.dimension_semantics<parallel>], iteration_bounds = array<i64: 2>, scalar_prefetch = 0 : i64, scratch_operands = 0 : i64, tpu.core_type = #tpu.core_type<tc>, window_params = [{transform_indices = @transform_0, window_bounds = array<i64: 256, 27>}, {transform_indices = @transform_1, window_bounds = array<i64: 256, 27>}, {transform_indices = @transform_2, window_bounds = array<i64: 256, 27>}, {transform_indices = @transform_3, window_bounds = array<i64: 256, 27>}, {pipeline_mode = #tpu.pipeline_mode<synchronous>, transform_indices = @transform_4, window_bounds = array<i64: 27, 32>}, {pipeline_mode = #tpu.pipeline_mode<synchronous>, transform_indices = @transform_5, window_bounds = array<i64: 1, 32>}, {transform_indices = @transform_6, window_bounds = array<i64: 256, 32>}]} {
    %c0 = arith.constant 0 : index
    %c0_0 = arith.constant 0 : index
    %0 = vector.load %arg5[%c0, %c0_0] : memref<27x32xf32, #tpu.memory_space<vmem>>, vector<27x32xf32>
    %c0_1 = arith.constant 0 : index
    %c0_2 = arith.constant 0 : index
    %1 = vector.load %arg1[%c0_1, %c0_2] : memref<256x27xf32, #tpu.memory_space<vmem>>, vector<256x27xf32>
    %cst = arith.constant dense<0.000000e+00> : vector<256x32xf32>
    %2 = tpu.matmul %1, %0, %cst {dimension_numbers = #tpu.dot_dimension_numbers<[1], [0], [0], [1], [0, 0, 1, 1], [], []>} : vector<256x27xf32>, vector<27x32xf32>, vector<256x32xf32> -> vector<256x32xf32>
    %c0_3 = arith.constant 0 : index
    %c0_4 = arith.constant 0 : index
    %3 = vector.load %arg2[%c0_3, %c0_4] : memref<256x27xf32, #tpu.memory_space<vmem>>, vector<256x27xf32>
    %cst_5 = arith.constant dense<0.000000e+00> : vector<256x32xf32>
    %4 = tpu.matmul %3, %0, %cst_5 {dimension_numbers = #tpu.dot_dimension_numbers<[1], [0], [0], [1], [0, 0, 1, 1], [], []>} : vector<256x27xf32>, vector<27x32xf32>, vector<256x32xf32> -> vector<256x32xf32>
    %5 = arith.maximumf %2, %4 : vector<256x32xf32>
    %c0_6 = arith.constant 0 : index
    %c0_7 = arith.constant 0 : index
    %6 = vector.load %arg3[%c0_6, %c0_7] : memref<256x27xf32, #tpu.memory_space<vmem>>, vector<256x27xf32>
    %cst_8 = arith.constant dense<0.000000e+00> : vector<256x32xf32>
    %7 = tpu.matmul %6, %0, %cst_8 {dimension_numbers = #tpu.dot_dimension_numbers<[1], [0], [0], [1], [0, 0, 1, 1], [], []>} : vector<256x27xf32>, vector<27x32xf32>, vector<256x32xf32> -> vector<256x32xf32>
    %c0_9 = arith.constant 0 : index
    %c0_10 = arith.constant 0 : index
    %8 = vector.load %arg4[%c0_9, %c0_10] : memref<256x27xf32, #tpu.memory_space<vmem>>, vector<256x27xf32>
    %cst_11 = arith.constant dense<0.000000e+00> : vector<256x32xf32>
    %9 = tpu.matmul %8, %0, %cst_11 {dimension_numbers = #tpu.dot_dimension_numbers<[1], [0], [0], [1], [0, 0, 1, 1], [], []>} : vector<256x27xf32>, vector<27x32xf32>, vector<256x32xf32> -> vector<256x32xf32>
    %10 = arith.maximumf %7, %9 : vector<256x32xf32>
    %11 = arith.maximumf %5, %10 : vector<256x32xf32>
    %c0_12 = arith.constant 0 : index
    %c0_13 = arith.constant 0 : index
    %12 = vector.load %arg6[%c0_12, %c0_13] : memref<1x32xf32, #tpu.memory_space<vmem>>, vector<1x32xf32>
    %13 = vector.broadcast %12 : vector<1x32xf32> to vector<256x32xf32>
    %14 = arith.addf %11, %13 : vector<256x32xf32>
    %cst_14 = arith.constant 0.000000e+00 : f32
    %15 = vector.broadcast %cst_14 : f32 to vector<256x32xf32>
    %16 = arith.maximumf %14, %15 : vector<256x32xf32>
    %c0_15 = arith.constant 0 : index
    %c0_16 = arith.constant 0 : index
    %17 = vector.load %arg7[%c0_15, %c0_16] : memref<256x32xf32, #tpu.memory_space<vmem>>, vector<256x32xf32>
    tpu.vector_store %arg7[%c0_15, %c0_16], %16 {strides = array<i32>} : memref<256x32xf32, #tpu.memory_space<vmem>>, vector<256x32xf32>,
    return
  }
  func.func @transform_0(%arg0: i32) -> (i32, i32) {
    %c0_i32 = arith.constant 0 : i32
    %c0_i32_0 = arith.constant 0 : i32
    return %arg0, %c0_i32 : i32, i32
  }
  func.func @transform_1(%arg0: i32) -> (i32, i32) {
    %c0_i32 = arith.constant 0 : i32
    %c0_i32_0 = arith.constant 0 : i32
    return %arg0, %c0_i32 : i32, i32
  }
  func.func @transform_2(%arg0: i32) -> (i32, i32) {
    %c0_i32 = arith.constant 0 : i32
    %c0_i32_0 = arith.constant 0 : i32
    return %arg0, %c0_i32 : i32, i32
  }
  func.func @transform_3(%arg0: i32) -> (i32, i32) {
    %c0_i32 = arith.constant 0 : i32
    %c0_i32_0 = arith.constant 0 : i32
    return %arg0, %c0_i32 : i32, i32
  }
  func.func @transform_4(%arg0: i32) -> (i32, i32) {
    %c0_i32 = arith.constant 0 : i32
    %c0_i32_0 = arith.constant 0 : i32
    %c0_i32_1 = arith.constant 0 : i32
    return %c0_i32, %c0_i32_0 : i32, i32
  }
  func.func @transform_5(%arg0: i32) -> (i32, i32) {
    %c0_i32 = arith.constant 0 : i32
    %c0_i32_0 = arith.constant 0 : i32
    %c0_i32_1 = arith.constant 0 : i32
    return %c0_i32, %c0_i32_0 : i32, i32
  }
  func.func @transform_6(%arg0: i32) -> (i32, i32) {
    %c0_i32 = arith.constant 0 : i32
    %c0_i32_0 = arith.constant 0 : i32
    return %arg0, %c0_i32 : i32, i32
  }
}

module attributes {stable_mosaic.version = 11 : i64} {
  func.func @_mlp_head_kernel(%arg0: memref<2x1024xf32, #tpu.memory_space<vmem>>, %arg1: memref<1024x128xf32, #tpu.memory_space<vmem>>, %arg2: memref<1x128xf32, #tpu.memory_space<vmem>>, %arg3: memref<128x2xf32, #tpu.memory_space<vmem>>, %arg4: memref<1x2xf32, #tpu.memory_space<vmem>>, %arg5: memref<2x2xf32, #tpu.memory_space<vmem>>) attributes {dimension_semantics = [], scalar_prefetch = 0 : i64, scratch_operands = 0 : i64, tpu.core_type = #tpu.core_type<tc>} {
    %c0 = arith.constant 0 : index
    %c0_0 = arith.constant 0 : index
    %0 = vector.load %arg0[%c0, %c0_0] : memref<2x1024xf32, #tpu.memory_space<vmem>>, vector<2x1024xf32>
    %c0_1 = arith.constant 0 : index
    %c0_2 = arith.constant 0 : index
    %1 = vector.load %arg1[%c0_1, %c0_2] : memref<1024x128xf32, #tpu.memory_space<vmem>>, vector<1024x128xf32>
    %cst = arith.constant dense<0.000000e+00> : vector<2x128xf32>
    %2 = tpu.matmul %0, %1, %cst {dimension_numbers = #tpu.dot_dimension_numbers<[1], [0], [0], [1], [0, 0, 1, 1], [], []>} : vector<2x1024xf32>, vector<1024x128xf32>, vector<2x128xf32> -> vector<2x128xf32>
    %c0_3 = arith.constant 0 : index
    %c0_4 = arith.constant 0 : index
    %3 = vector.load %arg2[%c0_3, %c0_4] : memref<1x128xf32, #tpu.memory_space<vmem>>, vector<1x128xf32>
    %4 = vector.broadcast %3 : vector<1x128xf32> to vector<2x128xf32>
    %5 = arith.addf %2, %4 : vector<2x128xf32>
    %cst_5 = arith.constant 0.000000e+00 : f32
    %6 = vector.broadcast %cst_5 : f32 to vector<2x128xf32>
    %7 = arith.maximumf %5, %6 : vector<2x128xf32>
    %c0_6 = arith.constant 0 : index
    %c0_7 = arith.constant 0 : index
    %8 = vector.load %arg3[%c0_6, %c0_7] : memref<128x2xf32, #tpu.memory_space<vmem>>, vector<128x2xf32>
    %cst_8 = arith.constant dense<0.000000e+00> : vector<2x2xf32>
    %9 = tpu.matmul %7, %8, %cst_8 {dimension_numbers = #tpu.dot_dimension_numbers<[1], [0], [0], [1], [0, 0, 1, 1], [], []>} : vector<2x128xf32>, vector<128x2xf32>, vector<2x2xf32> -> vector<2x2xf32>
    %c0_9 = arith.constant 0 : index
    %c0_10 = arith.constant 0 : index
    %10 = vector.load %arg4[%c0_9, %c0_10] : memref<1x2xf32, #tpu.memory_space<vmem>>, vector<1x2xf32>
    %11 = vector.broadcast %10 : vector<1x2xf32> to vector<2x2xf32>
    %12 = arith.addf %9, %11 : vector<2x2xf32>
    %cst_11 = arith.constant dense<0xFF800000> : vector<2xf32>
    %13 = vector.multi_reduction <maximumf>, %12, %cst_11 [1] : vector<2x2xf32> to vector<2xf32>
    %14 = vector.shape_cast %13 : vector<2xf32> to vector<2x1xf32>
    %15 = vector.broadcast %14 : vector<2x1xf32> to vector<2x2xf32>
    %16 = arith.subf %12, %15 : vector<2x2xf32>
    %17 = math.exp %16 : vector<2x2xf32>
    %cst_12 = arith.constant dense<0.000000e+00> : vector<2xf32>
    %18 = vector.multi_reduction <add>, %17, %cst_12 [1] : vector<2x2xf32> to vector<2xf32>
    %19 = vector.shape_cast %18 : vector<2xf32> to vector<2x1xf32>
    %20 = vector.broadcast %19 : vector<2x1xf32> to vector<2x2xf32>
    %21 = arith.divf %17, %20 : vector<2x2xf32>
    %c0_13 = arith.constant 0 : index
    %c0_14 = arith.constant 0 : index
    %22 = vector.load %arg5[%c0_13, %c0_14] : memref<2x2xf32, #tpu.memory_space<vmem>>, vector<2x2xf32>
    tpu.vector_store %arg5[%c0_13, %c0_14], %21 {strides = array<i32>} : memref<2x2xf32, #tpu.memory_space<vmem>>, vector<2x2xf32>,
    return
  }
}

module attributes {stable_mosaic.version = 11 : i64} {
  func.func @_conv_relu_pool_kernel(%arg0: i32, %arg1: memref<32x800xf32, #tpu.memory_space<vmem>>, %arg2: memref<32x800xf32, #tpu.memory_space<vmem>>, %arg3: memref<32x800xf32, #tpu.memory_space<vmem>>, %arg4: memref<32x800xf32, #tpu.memory_space<vmem>>, %arg5: memref<800x64xf32, #tpu.memory_space<vmem>>, %arg6: memref<1x64xf32, #tpu.memory_space<vmem>>, %arg7: memref<32x64xf32, #tpu.memory_space<vmem>>) attributes {dimension_semantics = [#tpu.dimension_semantics<parallel>], iteration_bounds = array<i64: 1>, scalar_prefetch = 0 : i64, scratch_operands = 0 : i64, tpu.core_type = #tpu.core_type<tc>, window_params = [{transform_indices = @transform_0, window_bounds = array<i64: 32, 800>}, {transform_indices = @transform_1, window_bounds = array<i64: 32, 800>}, {transform_indices = @transform_2, window_bounds = array<i64: 32, 800>}, {transform_indices = @transform_3, window_bounds = array<i64: 32, 800>}, {pipeline_mode = #tpu.pipeline_mode<synchronous>, transform_indices = @transform_4, window_bounds = array<i64: 800, 64>}, {pipeline_mode = #tpu.pipeline_mode<synchronous>, transform_indices = @transform_5, window_bounds = array<i64: 1, 64>}, {transform_indices = @transform_6, window_bounds = array<i64: 32, 64>}]} {
    %c0 = arith.constant 0 : index
    %c0_0 = arith.constant 0 : index
    %0 = vector.load %arg5[%c0, %c0_0] : memref<800x64xf32, #tpu.memory_space<vmem>>, vector<800x64xf32>
    %c0_1 = arith.constant 0 : index
    %c0_2 = arith.constant 0 : index
    %1 = vector.load %arg1[%c0_1, %c0_2] : memref<32x800xf32, #tpu.memory_space<vmem>>, vector<32x800xf32>
    %cst = arith.constant dense<0.000000e+00> : vector<32x64xf32>
    %2 = tpu.matmul %1, %0, %cst {dimension_numbers = #tpu.dot_dimension_numbers<[1], [0], [0], [1], [0, 0, 1, 1], [], []>} : vector<32x800xf32>, vector<800x64xf32>, vector<32x64xf32> -> vector<32x64xf32>
    %c0_3 = arith.constant 0 : index
    %c0_4 = arith.constant 0 : index
    %3 = vector.load %arg2[%c0_3, %c0_4] : memref<32x800xf32, #tpu.memory_space<vmem>>, vector<32x800xf32>
    %cst_5 = arith.constant dense<0.000000e+00> : vector<32x64xf32>
    %4 = tpu.matmul %3, %0, %cst_5 {dimension_numbers = #tpu.dot_dimension_numbers<[1], [0], [0], [1], [0, 0, 1, 1], [], []>} : vector<32x800xf32>, vector<800x64xf32>, vector<32x64xf32> -> vector<32x64xf32>
    %5 = arith.maximumf %2, %4 : vector<32x64xf32>
    %c0_6 = arith.constant 0 : index
    %c0_7 = arith.constant 0 : index
    %6 = vector.load %arg3[%c0_6, %c0_7] : memref<32x800xf32, #tpu.memory_space<vmem>>, vector<32x800xf32>
    %cst_8 = arith.constant dense<0.000000e+00> : vector<32x64xf32>
    %7 = tpu.matmul %6, %0, %cst_8 {dimension_numbers = #tpu.dot_dimension_numbers<[1], [0], [0], [1], [0, 0, 1, 1], [], []>} : vector<32x800xf32>, vector<800x64xf32>, vector<32x64xf32> -> vector<32x64xf32>
    %c0_9 = arith.constant 0 : index
    %c0_10 = arith.constant 0 : index
    %8 = vector.load %arg4[%c0_9, %c0_10] : memref<32x800xf32, #tpu.memory_space<vmem>>, vector<32x800xf32>
    %cst_11 = arith.constant dense<0.000000e+00> : vector<32x64xf32>
    %9 = tpu.matmul %8, %0, %cst_11 {dimension_numbers = #tpu.dot_dimension_numbers<[1], [0], [0], [1], [0, 0, 1, 1], [], []>} : vector<32x800xf32>, vector<800x64xf32>, vector<32x64xf32> -> vector<32x64xf32>
    %10 = arith.maximumf %7, %9 : vector<32x64xf32>
    %11 = arith.maximumf %5, %10 : vector<32x64xf32>
    %c0_12 = arith.constant 0 : index
    %c0_13 = arith.constant 0 : index
    %12 = vector.load %arg6[%c0_12, %c0_13] : memref<1x64xf32, #tpu.memory_space<vmem>>, vector<1x64xf32>
    %13 = vector.broadcast %12 : vector<1x64xf32> to vector<32x64xf32>
    %14 = arith.addf %11, %13 : vector<32x64xf32>
    %cst_14 = arith.constant 0.000000e+00 : f32
    %15 = vector.broadcast %cst_14 : f32 to vector<32x64xf32>
    %16 = arith.maximumf %14, %15 : vector<32x64xf32>
    %c0_15 = arith.constant 0 : index
    %c0_16 = arith.constant 0 : index
    %17 = vector.load %arg7[%c0_15, %c0_16] : memref<32x64xf32, #tpu.memory_space<vmem>>, vector<32x64xf32>
    tpu.vector_store %arg7[%c0_15, %c0_16], %16 {strides = array<i32>} : memref<32x64xf32, #tpu.memory_space<vmem>>, vector<32x64xf32>,
    return
  }
  func.func @transform_0(%arg0: i32) -> (i32, i32) {
    %c0_i32 = arith.constant 0 : i32
    %c0_i32_0 = arith.constant 0 : i32
    return %arg0, %c0_i32 : i32, i32
  }
  func.func @transform_1(%arg0: i32) -> (i32, i32) {
    %c0_i32 = arith.constant 0 : i32
    %c0_i32_0 = arith.constant 0 : i32
    return %arg0, %c0_i32 : i32, i32
  }
  func.func @transform_2(%arg0: i32) -> (i32, i32) {
    %c0_i32 = arith.constant 0 : i32
    %c0_i32_0 = arith.constant 0 : i32
    return %arg0, %c0_i32 : i32, i32
  }
  func.func @transform_3(%arg0: i32) -> (i32, i32) {
    %c0_i32 = arith.constant 0 : i32
    %c0_i32_0 = arith.constant 0 : i32
    return %arg0, %c0_i32 : i32, i32
  }
  func.func @transform_4(%arg0: i32) -> (i32, i32) {
    %c0_i32 = arith.constant 0 : i32
    %c0_i32_0 = arith.constant 0 : i32
    %c0_i32_1 = arith.constant 0 : i32
    return %c0_i32, %c0_i32_0 : i32, i32
  }
  func.func @transform_5(%arg0: i32) -> (i32, i32) {
    %c0_i32 = arith.constant 0 : i32
    %c0_i32_0 = arith.constant 0 : i32
    %c0_i32_1 = arith.constant 0 : i32
    return %c0_i32, %c0_i32_0 : i32, i32
  }
  func.func @transform_6(%arg0: i32) -> (i32, i32) {
    %c0_i32 = arith.constant 0 : i32
    %c0_i32_0 = arith.constant 0 : i32
    return %arg0, %c0_i32 : i32, i32
  }
}

</mosaic_0001>

<llo_original>
// kernel: net_forward.3
$region0: #{net_forward.3}
  #allocation0 [shape = 'u32[]', space=smem, size = 0x4, offset = 0x4, fixed_abs, tag = 'smem constant byte address 0x4 - core index']
  #allocation1 [shape = 'u32[144,128]{1,0:T(1,128)}', space=vmem, size = 0x12000, scoped, tag = 'internal scratch']
  %s0 = inlined_call_operand.vmem [shape: f32[512,27], index: 0, kind: input, shape index: {}]
  %s1 = inlined_call_operand.vmem [shape: f32[512,27], index: 1, kind: input, shape index: {}]
  %s2 = inlined_call_operand.vmem [shape: f32[512,27], index: 2, kind: input, shape index: {}]
  %s3 = inlined_call_operand.vmem [shape: f32[512,27], index: 3, kind: input, shape index: {}]
  %s4 = inlined_call_operand.vmem [shape: f32[27,32], index: 4, kind: input, shape index: {}]
  %s5 = inlined_call_operand.vmem [shape: f32[1,32], index: 5, kind: input, shape index: {}]
  %s6 = inlined_call_operand.vmem [shape: f32[512,32], index: 6, kind: output, shape index: {}]
  %s7 = sld [smem:[#allocation0]]
  $region57: #{net_forward.3} parent=0
    _
  %s9 = ssub.s32 1, %s7
  %s10 = scalar_select 0, %s9, %s7
  loop: start=0, step=1, limit=4
  $region2: #{net_forward.3} parent=0 // loop_pre_header
    _
  $region3: #{net_forward.3} parent=0 // loop_header
    %s12 = sphi 0, %s16
    %p13 = scmp.ge.s32.totalorder %s12, 4
    %s22 = sphi 0, %s24
    %s25 = sphi 0, %s22
    %s26 = sphi 0, %s25
    %s42 = sphi 0, %s26
    %s48 = sphi 0, %s50
    %s51 = sphi 0, %s48
    %s52 = sphi 0, %s51
    %s68 = sphi 0, %s52
    %s74 = sphi 0, %s76
    %s77 = sphi 0, %s74
    %s78 = sphi 0, %s77
    %s94 = sphi 0, %s78
    %s100 = sphi 0, %s102
    %s103 = sphi 0, %s100
    %s104 = sphi 0, %s103
    %s120 = sphi 0, %s104
    %s124 = sphi 0, %s124
    %s126 = sphi 0, %s124
    %s127 = sphi 0, %s126
    %s141 = sphi 0, %s127
    %s145 = sphi 0, %s145
    %s147 = sphi 0, %s145
    %s148 = sphi 0, %s147
    %s162 = sphi 0, %s148
    %s168 = sphi 0, %s170
    %s171 = sphi 0, %s168
    %s172 = sphi 0, %s171
    %s188 = sphi 0, %s172
  $region4: #{net_forward.3} parent=0 // loop_header_branch
    %15 = sbr.rel (%p13) target = $region8
  $region5: #{net_forward.3} parent=0 // loop_body
    %s17 = ssub.s32 %s12, 1
    %s18 = ssub.s32 %s12, 2
    %s19 = sadd.s32 %s12, 1
    %s20 = ssub.s32 %s12, %s19
    %p21 = scmp.eq.s32.totalorder %s20, 0
    %s23 = sadd.s32 %s22, 1
    %s24 = scalar_select %p21, %s22, %s23
    %p27 = pneg %p21
    %p28 = scmp.eq.s32.totalorder %s12, 1
    %p29 = por %p27, %p28
    %p30 = scmp.ne.s32.totalorder %s22, %s25
    %p31 = scmp.eq.s32.totalorder %s12, 0
    %p32 = por %p30, %p31
    %p33 = scmp.ne.s32.totalorder %s22, %s25
    %p34 = scmp.eq.s32.totalorder %s17, 1
    %p35 = por %p33, %p34
    %p36 = scmp.ne.s32.totalorder %s25, %s26
    %p37 = scmp.eq.s32.totalorder %s17, 0
    %p38 = por %p36, %p37
    %p39 = scmp.ne.s32.totalorder %s25, %s26
    %p40 = scmp.eq.s32.totalorder %s18, 1
    %p41 = por %p39, %p40
    %p43 = scmp.ne.s32.totalorder %s26, %s42
    %p44 = scmp.eq.s32.totalorder %s18, 0
    %p45 = por %p43, %p44
    %s46 = ssub.s32 %s12, %s19
    %p47 = scmp.eq.s32.totalorder %s46, 0
    %s49 = sadd.s32 %s48, 1
    %s50 = scalar_select %p47, %s48, %s49
    %p53 = pneg %p47
    %p54 = scmp.eq.s32.totalorder %s12, 1
    %p55 = por %p53, %p54
    %p56 = scmp.ne.s32.totalorder %s48, %s51
    %p57 = scmp.eq.s32.totalorder %s12, 0
    %p58 = por %p56, %p57
    %p59 = scmp.ne.s32.totalorder %s48, %s51
    %p60 = scmp.eq.s32.totalorder %s17, 1
    %p61 = por %p59, %p60
    %p62 = scmp.ne.s32.totalorder %s51, %s52
    %p63 = scmp.eq.s32.totalorder %s17, 0
    %p64 = por %p62, %p63
    %p65 = scmp.ne.s32.totalorder %s51, %s52
    %p66 = scmp.eq.s32.totalorder %s18, 1
    %p67 = por %p65, %p66
    %p69 = scmp.ne.s32.totalorder %s52, %s68
    %p70 = scmp.eq.s32.totalorder %s18, 0
    %p71 = por %p69, %p70
    %s72 = ssub.s32 %s12, %s19
    %p73 = scmp.eq.s32.totalorder %s72, 0
    %s75 = sadd.s32 %s74, 1
    %s76 = scalar_select %p73, %s74, %s75
    %p79 = pneg %p73
    %p80 = scmp.eq.s32.totalorder %s12, 1
    %p81 = por %p79, %p80
    %p82 = scmp.ne.s32.totalorder %s74, %s77
    %p83 = scmp.eq.s32.totalorder %s12, 0
    %p84 = por %p82, %p83
    %p85 = scmp.ne.s32.totalorder %s74, %s77
    %p86 = scmp.eq.s32.totalorder %s17, 1
    %p87 = por %p85, %p86
    %p88 = scmp.ne.s32.totalorder %s77, %s78
    %p89 = scmp.eq.s32.totalorder %s17, 0
    %p90 = por %p88, %p89
    %p91 = scmp.ne.s32.totalorder %s77, %s78
    %p92 = scmp.eq.s32.totalorder %s18, 1
    %p93 = por %p91, %p92
    %p95 = scmp.ne.s32.totalorder %s78, %s94
    %p96 = scmp.eq.s32.totalorder %s18, 0
    %p97 = por %p95, %p96
    %s98 = ssub.s32 %s12, %s19
    %p99 = scmp.eq.s32.totalorder %s98, 0
    %s101 = sadd.s32 %s100, 1
    %s102 = scalar_select %p99, %s100, %s101
    %p105 = pneg %p99
    %p106 = scmp.eq.s32.totalorder %s12, 1
    %p107 = por %p105, %p106
    %p108 = scmp.ne.s32.totalorder %s100, %s103
    %p109 = scmp.eq.s32.totalorder %s12, 0
    %p110 = por %p108, %p109
    %p111 = scmp.ne.s32.totalorder %s100, %s103
    %p112 = scmp.eq.s32.totalorder %s17, 1
    %p113 = por %p111, %p112
    %p114 = scmp.ne.s32.totalorder %s103, %s104
    %p115 = scmp.eq.s32.totalorder %s17, 0
    %p116 = por %p114, %p115
    %p117 = scmp.ne.s32.totalorder %s103, %s104
    %p118 = scmp.eq.s32.totalorder %s18, 1
    %p119 = por %p117, %p118
    %p121 = scmp.ne.s32.totalorder %s104, %s120
    %p122 = scmp.eq.s32.totalorder %s18, 0
    %p123 = por %p121, %p122
    %s125 = sadd.s32 %s124, 1
    %p128 = scmp.eq.s32.totalorder %s12, 1
    %p129 = scmp.ne.s32.totalorder %s124, %s126
    %p130 = scmp.eq.s32.totalorder %s12, 0
    %p131 = por %p129, %p130
    %p132 = scmp.ne.s32.totalorder %s124, %s126
    %p133 = scmp.eq.s32.totalorder %s17, 1
    %p134 = por %p132, %p133
    %p135 = scmp.ne.s32.totalorder %s126, %s127
    %p136 = scmp.eq.s32.totalorder %s17, 0
    %p137 = por %p135, %p136
    %p138 = scmp.ne.s32.totalorder %s126, %s127
    %p139 = scmp.eq.s32.totalorder %s18, 1
    %p140 = por %p138, %p139
    %p142 = scmp.ne.s32.totalorder %s127, %s141
    %p143 = scmp.eq.s32.totalorder %s18, 0
    %p144 = por %p142, %p143
    %s146 = sadd.s32 %s145, 1
    %p149 = scmp.eq.s32.totalorder %s12, 1
    %p150 = scmp.ne.s32.totalorder %s145, %s147
    %p151 = scmp.eq.s32.totalorder %s12, 0
    %p152 = por %p150, %p151
    %p153 = scmp.ne.s32.totalorder %s145, %s147
    %p154 = scmp.eq.s32.totalorder %s17, 1
    %p155 = por %p153, %p154
    %p156 = scmp.ne.s32.totalorder %s147, %s148
    %p157 = scmp.eq.s32.totalorder %s17, 0
    %p158 = por %p156, %p157
    %p159 = scmp.ne.s32.totalorder %s147, %s148
    %p160 = scmp.eq.s32.totalorder %s18, 1
    %p161 = por %p159, %p160
    %p163 = scmp.ne.s32.totalorder %s148, %s162
    %p164 = scmp.eq.s32.totalorder %s18, 0
    %p165 = por %p163, %p164
    %s166 = ssub.s32 %s12, %s19
    %p167 = scmp.eq.s32.totalorder %s166, 0
    %s169 = sadd.s32 %s168, 1
    %s170 = scalar_select %p167, %s168, %s169
    %p173 = pneg %p167
    %p174 = scmp.eq.s32.totalorder %s12, 1
    %p175 = por %p173, %p174
    %p176 = scmp.ne.s32.totalorder %s168, %s171
    %p177 = scmp.eq.s32.totalorder %s12, 0
    %p178 = por %p176, %p177
    %p179 = scmp.ne.s32.totalorder %s168, %s171
    %p180 = scmp.eq.s32.totalorder %s17, 1
    %p181 = por %p179, %p180
    %p182 = scmp.ne.s32.totalorder %s171, %s172
    %p183 = scmp.eq.s32.totalorder %s17, 0
    %p184 = por %p182, %p183
    %p185 = scmp.ne.s32.totalorder %s171, %s172
    %p186 = scmp.eq.s32.totalorder %s18, 1
    %p187 = por %p185, %p186
    %p189 = scmp.ne.s32.totalorder %s172, %s188
    %p190 = scmp.eq.s32.totalorder %s18, 0
    %p191 = por %p189, %p190
    %p192 = scmp.le.s32.totalorder 1, %s12
    %p193 = scmp.lt.s32.totalorder %s12, 3
    %p194 = pnand %p192, %p193
    %p195 = pneg %p194
    // Predicated region
    $region9: #{net_forward.3} parent=5 // pred_check
      _
    $region10: #{net_forward.3} parent=5 // pred_check_branch
      %197 = sbr.rel (%p194) target = $region12
    $region11: #{net_forward.3} parent=5 // pred_region
      %s198 = ssub.s32 %s12, 1
      // Predicated region
      $region13: #{net_forward.3} parent=11 // pred_check
        %p199 = pneg %p137
      $region14: #{net_forward.3} parent=11 // pred_check_branch
        %201 = sbr.rel (%p199) target = $region16
      $region15: #{net_forward.3} parent=11 // pred_region
        _
      $region16: #{net_forward.3} parent=11 // pred_fallthru
        _
      // Predicated region
      $region17: #{net_forward.3} parent=11 // pred_check
        %p202 = pneg %p158
      $region18: #{net_forward.3} parent=11 // pred_check_branch
        %204 = sbr.rel (%p202) target = $region20
      $region19: #{net_forward.3} parent=11 // pred_region
        _
      $region20: #{net_forward.3} parent=11 // pred_fallthru
        _
    $region12: #{net_forward.3} parent=5 // pred_fallthru
      _
    %p205 = scmp.lt.s32.totalorder %s12, 2
    // Predicated region
    $region21: #{net_forward.3} parent=5 // pred_check
      %p206 = pneg %p205
    $region22: #{net_forward.3} parent=5 // pred_check_branch
      %208 = sbr.rel (%p206) target = $region24
    $region23: #{net_forward.3} parent=5 // pred_region
      // Predicated region
      $region25: #{net_forward.3} parent=23 // pred_check
        %p209 = pneg %p32
      $region26: #{net_forward.3} parent=23 // pred_check_branch
        %211 = sbr.rel (%p209) target = $region28
      $region27: #{net_forward.3} parent=23 // pred_region
        %s212 = smul.u32 32, %s12
        %p213 = scmp.lt.s32.totalorder %s212, 63
        %s214 = scalar_select %p213, %s212, 63
        %s215 = smul.addr %s214, 8
        %s216 = scalar_lea.vmem %s0, %s215
        %s217 = smul.u32 32, %s12
      $region28: #{net_forward.3} parent=23 // pred_fallthru
        _
      // Predicated region
      $region29: #{net_forward.3} parent=23 // pred_check
        %p218 = pneg %p58
      $region30: #{net_forward.3} parent=23 // pred_check_branch
        %220 = sbr.rel (%p218) target = $region32
      $region31: #{net_forward.3} parent=23 // pred_region
        %s221 = smul.u32 32, %s12
        %p222 = scmp.lt.s32.totalorder %s221, 63
        %s223 = scalar_select %p222, %s221, 63
        %s224 = smul.addr %s223, 8
        %s225 = scalar_lea.vmem %s1, %s224
        %s226 = smul.u32 32, %s12
      $region32: #{net_forward.3} parent=23 // pred_fallthru
        _
      // Predicated region
      $region33: #{net_forward.3} parent=23 // pred_check
        %p227 = pneg %p84
      $region34: #{net_forward.3} parent=23 // pred_check_branch
        %229 = sbr.rel (%p227) target = $region36
      $region35: #{net_forward.3} parent=23 // pred_region
        %s230 = smul.u32 32, %s12
        %p231 = scmp.lt.s32.totalorder %s230, 63
        %s232 = scalar_select %p231, %s230, 63
        %s233 = smul.addr %s232, 8
        %s234 = scalar_lea.vmem %s2, %s233
        %s235 = smul.u32 32, %s12
      $region36: #{net_forward.3} parent=23 // pred_fallthru
        _
      // Predicated region
      $region37: #{net_forward.3} parent=23 // pred_check
        %p236 = pneg %p110
      $region38: #{net_forward.3} parent=23 // pred_check_branch
        %238 = sbr.rel (%p236) target = $region40
      $region39: #{net_forward.3} parent=23 // pred_region
        %s239 = smul.u32 32, %s12
        %p240 = scmp.lt.s32.totalorder %s239, 63
        %s241 = scalar_select %p240, %s239, 63
        %s242 = smul.addr %s241, 8
        %s243 = scalar_lea.vmem %s3, %s242
        %s244 = smul.u32 32, %s12
      $region40: #{net_forward.3} parent=23 // pred_fallthru
        _
    $region24: #{net_forward.3} parent=5 // pred_fallthru
      _
    %p245 = scmp.le.s32.totalorder 1, %s12
    %p246 = scmp.lt.s32.totalorder %s12, 3
    %p247 = pnand %p245, %p246
    %p248 = pneg %p247
    // Predicated region
    $region41: #{net_forward.3} parent=5 // pred_check
      _
    $region42: #{net_forward.3} parent=5 // pred_check_branch
      %250 = sbr.rel (%p247) target = $region44
    $region43: #{net_forward.3} parent=5 // pred_region
      %s251 = ssub.s32 %s12, 1
      %s252 = smul.u32 32, %s17
      %p253 = scmp.lt.s32.totalorder %s252, 63
      %s254 = scalar_select %p253, %s252, 63
      %s255 = smul.addr %s254, 8
      %s256 = scalar_lea.vmem %s0, %s255
      %p257 = pneg %p38
      %p258 = pneg %p35
      %s259 = smul.u32 32, %s17
      %p260 = scmp.lt.s32.totalorder %s259, 63
      %s261 = scalar_select %p260, %s259, 63
      %s262 = smul.addr %s261, 8
      %s263 = scalar_lea.vmem %s1, %s262
      %p264 = pneg %p64
      %p265 = pneg %p61
      %s266 = smul.u32 32, %s17
      %p267 = scmp.lt.s32.totalorder %s266, 63
      %s268 = scalar_select %p267, %s266, 63
      %s269 = smul.addr %s268, 8
      %s270 = scalar_lea.vmem %s2, %s269
      %p271 = pneg %p90
      %p272 = pneg %p87
      %s273 = smul.u32 32, %s17
      %p274 = scmp.lt.s32.totalorder %s273, 63
      %s275 = scalar_select %p274, %s273, 63
      %s276 = smul.addr %s275, 8
      %s277 = scalar_lea.vmem %s3, %s276
      %p278 = pneg %p116
      %p279 = pneg %p113
      %p280 = pneg %p137
      %p281 = pneg %p134
      %p282 = pneg %p158
      %p283 = pneg %p155
      %p284 = pneg %p184
      %p285 = pneg %p181
      %s286 = smul.u32 32, %s17
      %p287 = scmp.lt.s32.totalorder %s286, 63
      %s288 = scalar_select %p287, %s286, 63
      %s289 = smul.addr %s288, 8
      %s290 = scalar_lea.vmem %s6, %s289
      %s291 = smul.u32 32, %s17
      %p292 = scmp.lt.s32.totalorder %s291, 63
      %s293 = scalar_select %p292, %s291, 63
      %s294 = smul.addr %s293, 8
      %s295 = scalar_lea.vmem %s0, %s294
      %s296 = smul.u32 32, %s17
      %s297 = smul.u32 32, %s17
      %p298 = scmp.lt.s32.totalorder %s297, 63
      %s299 = scalar_select %p298, %s297, 63
      %s300 = smul.addr %s299, 8
      %s301 = scalar_lea.vmem %s1, %s300
      %s302 = smul.u32 32, %s17
      %s303 = smul.u32 32, %s17
      %p304 = scmp.lt.s32.totalorder %s303, 63
      %s305 = scalar_select %p304, %s303, 63
      %s306 = smul.addr %s305, 8
      %s307 = scalar_lea.vmem %s2, %s306
      %s308 = smul.u32 32, %s17
      %s309 = smul.u32 32, %s17
      %p310 = scmp.lt.s32.totalorder %s309, 63
      %s311 = scalar_select %p310, %s309, 63
      %s312 = smul.addr %s311, 8
      %s313 = scalar_lea.vmem %s3, %s312
      %s314 = smul.u32 32, %s17
      %s315 = smul.u32 32, %s17
      %p316 = scmp.lt.s32.totalorder %s315, 63
      %s317 = scalar_select %p316, %s315, 63
      %s318 = smul.addr %s317, 8
      %s319 = scalar_lea.vmem %s6, %s318
      %s320 = smul.u32 32, %s17
      %v321 = vld [vmem:[%s4] sm:$0xff]
      %v322 = vld [vmem:[%s4 + $0x8] sm:$0xff]
      %v323 = vld [vmem:[%s4 + $0x10] sm:$0xff]
      %v324 = vld [vmem:[%s4 + $0x18] sm:$0x7]
      %v325 = vld [vmem:[%s295] sm:$0xff]
      %v326 = vld [vmem:[%s295 + $0x8] sm:$0xff]
      %v327 = vld [vmem:[%s295 + $0x10] sm:$0xff]
      %v328 = vld [vmem:[%s295 + $0x18] sm:$0xff]
      %v329 = vld [vmem:[%s295 + $0x20] sm:$0xff]
      %v330 = vld [vmem:[%s295 + $0x28] sm:$0xff]
      %v331 = vld [vmem:[%s295 + $0x30] sm:$0xff]
      %v332 = vld [vmem:[%s295 + $0x38] sm:$0xff]
      %v333 = vld [vmem:[%s295 + $0x40] sm:$0xff]
      %v334 = vld [vmem:[%s295 + $0x48] sm:$0xff]
      %v335 = vld [vmem:[%s295 + $0x50] sm:$0xff]
      %v336 = vld [vmem:[%s295 + $0x58] sm:$0xff]
      %v337 = vld [vmem:[%s295 + $0x60] sm:$0xff]
      %v338 = vld [vmem:[%s295 + $0x68] sm:$0xff]
      %v339 = vld [vmem:[%s295 + $0x70] sm:$0xff]
      %v340 = vld [vmem:[%s295 + $0x78] sm:$0xff]
      %v341 = vld [vmem:[%s295 + $0x80] sm:$0xff]
      %v342 = vld [vmem:[%s295 + $0x88] sm:$0xff]
      %v343 = vld [vmem:[%s295 + $0x90] sm:$0xff]
      %v344 = vld [vmem:[%s295 + $0x98] sm:$0xff]
      %v345 = vld [vmem:[%s295 + $0xa0] sm:$0xff]
      %v346 = vld [vmem:[%s295 + $0xa8] sm:$0xff]
      %v347 = vld [vmem:[%s295 + $0xb0] sm:$0xff]
      %v348 = vld [vmem:[%s295 + $0xb8] sm:$0xff]
      %v349 = vld [vmem:[%s295 + $0xc0] sm:$0xff]
      %v350 = vld [vmem:[%s295 + $0xc8] sm:$0xff]
      %v351 = vld [vmem:[%s295 + $0xd0] sm:$0xff]
      %v352 = vld [vmem:[%s295 + $0xd8] sm:$0xff]
      %v353 = vld [vmem:[%s295 + $0xe0] sm:$0xff]
      %v354 = vld [vmem:[%s295 + $0xe8] sm:$0xff]
      %v355 = vld [vmem:[%s295 + $0xf0] sm:$0xff]
      %v356 = vld [vmem:[%s295 + $0xf8] sm:$0xff]
      %vm357 = vcmask 220160
      %v359 = vsel %vm357, %v325, 0
      %v362 = vsel %vm357, %v326, 0
      %v365 = vsel %vm357, %v327, 0
      %v368 = vsel %vm357, %v328, 0
      %v371 = vsel %vm357, %v329, 0
      %v374 = vsel %vm357, %v330, 0
      %v377 = vsel %vm357, %v331, 0
      %v380 = vsel %vm357, %v332, 0
      %v383 = vsel %vm357, %v333, 0
      %v386 = vsel %vm357, %v334, 0
      %v389 = vsel %vm357, %v335, 0
      %v392 = vsel %vm357, %v336, 0
      %v395 = vsel %vm357, %v337, 0
      %v398 = vsel %vm357, %v338, 0
      %v401 = vsel %vm357, %v339, 0
      %v404 = vsel %vm357, %v340, 0
      %v407 = vsel %vm357, %v341, 0
      %v410 = vsel %vm357, %v342, 0
      %v413 = vsel %vm357, %v343, 0
      %v416 = vsel %vm357, %v344, 0
      %v419 = vsel %vm357, %v345, 0
      %v422 = vsel %vm357, %v346, 0
      %v425 = vsel %vm357, %v347, 0
      %v428 = vsel %vm357, %v348, 0
      %v431 = vsel %vm357, %v349, 0
      %v434 = vsel %vm357, %v350, 0
      %v437 = vsel %vm357, %v351, 0
      %v440 = vsel %vm357, %v352, 0
      %v443 = vsel %vm357, %v353, 0
      %v446 = vsel %vm357, %v354, 0
      %v449 = vsel %vm357, %v355, 0
      %v452 = vsel %vm357, %v356, 0
      %vm454 = vcmask 1042432
      %v456 = vsel %vm454, %v324, 0
      %458 = vmatprep.subr.mxu0 0.0
      %459 = vmatpush1.msra.mxu0 %v321
      %460 = vmatprep.subr.mxu0 0.0
      %461 = vmatpush1.msra.mxu0 %v322
      %462 = vmatprep.subr.mxu0 0.0
      %463 = vmatpush1.msra.mxu0 %v323
      %464 = vmatprep.subr.mxu0 0.0
      %465 = vmatpush1.msra.mxu0 %v456
      %466 = vmatprep.subr.mxu0 0.0
      %467 = vmatpush1.msra.mxu0 0.0
      %468 = vmatprep.subr.mxu0 0.0
      %469 = vmatpush1.msra.mxu0 0.0
      %470 = vmatprep.subr.mxu0 0.0
      %471 = vmatpush1.msra.mxu0 0.0
      %472 = vmatprep.subr.mxu0 0.0
      %473 = vmatpush1.msra.mxu0 0.0
      %474 = vmatprep.subr.mxu0 0.0
      %475 = vmatpush1.msra.mxu0 0.0
      %476 = vmatprep.subr.mxu0 0.0
      %477 = vmatpush1.msra.mxu0 0.0
      %478 = vmatprep.subr.mxu0 0.0
      %479 = vmatpush1.msra.mxu0 0.0
      %480 = vmatprep.subr.mxu0 0.0
      %481 = vmatpush1.msra.mxu0 0.0
      %482 = vmatprep.subr.mxu0 0.0
      %483 = vmatpush1.msra.mxu0 0.0
      %484 = vmatprep.subr.mxu0 0.0
      %485 = vmatpush1.msra.mxu0 0.0
      %486 = vmatprep.subr.mxu0 0.0
      %487 = vmatpush1.msra.mxu0 0.0
      %488 = vmatprep.subr.mxu0 0.0
      %489 = vmatpush1.msra.mxu0 0.0
      %490 = vmatprep.subr.mxu0 0.0
      %491 = vmatpush1.msra.mxu0 0.0
      %492 = vmatprep.subr.mxu0 0.0
      %493 = vmatpush1.msra.mxu0 0.0
      %494 = vmatprep.subr.mxu0 0.0
      %495 = vmatpush1.msra.mxu0 0.0
      %496 = vmatprep.subr.mxu0 0.0
      %497 = vmatpush1.msra.mxu0 0.0
      %498 = vmatprep.subr.mxu0 0.0
      %499 = vmatpush1.msra.mxu0 0.0
      %500 = vmatprep.subr.mxu0 0.0
      %501 = vmatpush1.msra.mxu0 0.0
      %502 = vmatprep.subr.mxu0 0.0
      %503 = vmatpush1.msra.mxu0 0.0
      %504 = vmatprep.subr.mxu0 0.0
      %505 = vmatpush1.msra.mxu0 0.0
      %506 = vmatprep.subr.mxu0 0.0
      %507 = vmatpush1.msra.mxu0 0.0
      %508 = vmatprep.subr.mxu0 0.0
      %509 = vmatpush1.msra.mxu0 0.0
      %510 = vmatprep.subr.mxu0 0.0
      %511 = vmatpush1.msra.mxu0 0.0
      %512 = vmatprep.subr.mxu0 0.0
      %513 = vmatpush1.msra.mxu0 0.0
      %514 = vmatprep.subr.mxu0 0.0
      %515 = vmatpush1.msra.mxu0 0.0
      %516 = vmatprep.subr.mxu0 0.0
      %517 = vmatpush1.msra.mxu0 0.0
      %518 = vmatprep.subr.mxu0 0.0
      %519 = vmatpush1.msra.mxu0 0.0
      %520 = vmatprep.subr.mxu0 0.0
      %521 = vmatpush1.msra.mxu0 0.0
      %522 = vmatprep.mubr.f32.mxu0 0.0
      %523 = vmatmul.mubr.f32.gmra.mrb[0].mxu0 %v359
      %v524 = vpop.f32.mrb[0].mxu0
      %v525 = vadd.f32 0.0, %v524
      %v526 = vpop.f32.mrb[0].mxu0
      %527 = vmatprep.mubr.f32.mxu0 0.0
      %528 = vmatmul.mubr.f32.gmra.mrb[0].mxu0 %v362
      %v529 = vpop.f32.mrb[0].mxu0
      %v530 = vadd.f32 0.0, %v529
      %v531 = vpop.f32.mrb[0].mxu0
      %532 = vmatprep.mubr.f32.mxu0 0.0
      %533 = vmatmul.mubr.f32.gmra.mrb[0].mxu0 %v365
      %v534 = vpop.f32.mrb[0].mxu0
      %v535 = vadd.f32 0.0, %v534
      %v536 = vpop.f32.mrb[0].mxu0
      %537 = vmatprep.mubr.f32.mxu0 0.0
      %538 = vmatmul.mubr.f32.gmra.mrb[0].mxu0 %v368
      %v539 = vpop.f32.mrb[0].mxu0
      %v540 = vadd.f32 0.0, %v539
      %v541 = vpop.f32.mrb[0].mxu0
      %542 = vmatprep.mubr.f32.mxu0 0.0
      %543 = vmatmul.mubr.f32.gmra.mrb[0].mxu0 %v371
      %v544 = vpop.f32.mrb[0].mxu0
      %v545 = vadd.f32 0.0, %v544
      %v546 = vpop.f32.mrb[0].mxu0
      %547 = vmatprep.mubr.f32.mxu0 0.0
      %548 = vmatmul.mubr.f32.gmra.mrb[0].mxu0 %v374
      %v549 = vpop.f32.mrb[0].mxu0
      %v550 = vadd.f32 0.0, %v549
      %v551 = vpop.f32.mrb[0].mxu0
      %552 = vmatprep.mubr.f32.mxu0 0.0
      %553 = vmatmul.mubr.f32.gmra.mrb[0].mxu0 %v377
      %v554 = vpop.f32.mrb[0].mxu0
      %v555 = vadd.f32 0.0, %v554
      %v556 = vpop.f32.mrb[0].mxu0
      %557 = vmatprep.mubr.f32.mxu0 0.0
      %558 = vmatmul.mubr.f32.gmra.mrb[0].mxu0 %v380
      %v559 = vpop.f32.mrb[0].mxu0
      %v560 = vadd.f32 0.0, %v559
      %v561 = vpop.f32.mrb[0].mxu0
      %562 = vmatprep.mubr.f32.mxu0 0.0
      %563 = vmatmul.mubr.f32.gmra.mrb[0].mxu0 %v383
      %v564 = vpop.f32.mrb[0].mxu0
      %v565 = vadd.f32 0.0, %v564
      %v566 = vpop.f32.mrb[0].mxu0
      %567 = vmatprep.mubr.f32.mxu0 0.0
      %568 = vmatmul.mubr.f32.gmra.mrb[0].mxu0 %v386
      %v569 = vpop.f32.mrb[0].mxu0
      %v570 = vadd.f32 0.0, %v569
      %v571 = vpop.f32.mrb[0].mxu0
      %572 = vmatprep.mubr.f32.mxu0 0.0
      %573 = vmatmul.mubr.f32.gmra.mrb[0].mxu0 %v389
      %v574 = vpop.f32.mrb[0].mxu0
      %v575 = vadd.f32 0.0, %v574
      %v576 = vpop.f32.mrb[0].mxu0
      %577 = vmatprep.mubr.f32.mxu0 0.0
      %578 = vmatmul.mubr.f32.gmra.mrb[0].mxu0 %v392
      %v579 = vpop.f32.mrb[0].mxu0
      %v580 = vadd.f32 0.0, %v579
      %v581 = vpop.f32.mrb[0].mxu0
      %582 = vmatprep.mubr.f32.mxu0 0.0
      %583 = vmatmul.mubr.f32.gmra.mrb[0].mxu0 %v395
      %v584 = vpop.f32.mrb[0].mxu0
      %v585 = vadd.f32 0.0, %v584
      %v586 = vpop.f32.mrb[0].mxu0
      %587 = vmatprep.mubr.f32.mxu0 0.0
      %588 = vmatmul.mubr.f32.gmra.mrb[0].mxu0 %v398
      %v589 = vpop.f32.mrb[0].mxu0
      %v590 = vadd.f32 0.0, %v589
      %v591 = vpop.f32.mrb[0].mxu0
      %592 = vmatprep.mubr.f32.mxu0 0.0
      %593 = vmatmul.mubr.f32.gmra.mrb[0].mxu0 %v401
      %v594 = vpop.f32.mrb[0].mxu0
      %v595 = vadd.f32 0.0, %v594
      %v596 = vpop.f32.mrb[0].mxu0
      %597 = vmatprep.mubr.f32.mxu0 0.0
      %598 = vmatmul.mubr.f32.gmra.mrb[0].mxu0 %v404
      %v599 = vpop.f32.mrb[0].mxu0
      %v600 = vadd.f32 0.0, %v599
      %v601 = vpop.f32.mrb[0].mxu0
      %602 = vmatprep.mubr.f32.mxu0 0.0
      %603 = vmatmul.mubr.f32.gmra.mrb[0].mxu0 %v407
      %v604 = vpop.f32.mrb[0].mxu0
      %v605 = vadd.f32 0.0, %v604
      %v606 = vpop.f32.mrb[0].mxu0
      %607 = vmatprep.mubr.f32.mxu0 0.0
      %608 = vmatmul.mubr.f32.gmra.mrb[0].mxu0 %v410
      %v609 = vpop.f32.mrb[0].mxu0
      %v610 = vadd.f32 0.0, %v609
      %v611 = vpop.f32.mrb[0].mxu0
      %612 = vmatprep.mubr.f32.mxu0 0.0
      %613 = vmatmul.mubr.f32.gmra.mrb[0].mxu0 %v413
      %v614 = vpop.f32.mrb[0].mxu0
      %v615 = vadd.f32 0.0, %v614
      %v616 = vpop.f32.mrb[0].mxu0
      %617 = vmatprep.mubr.f32.mxu0 0.0
      %618 = vmatmul.mubr.f32.gmra.mrb[0].mxu0 %v416
      %v619 = vpop.f32.mrb[0].mxu0
      %v620 = vadd.f32 0.0, %v619
      %v621 = vpop.f32.mrb[0].mxu0
      %622 = vmatprep.mubr.f32.mxu0 0.0
      %623 = vmatmul.mubr.f32.gmra.mrb[0].mxu0 %v419
      %v624 = vpop.f32.mrb[0].mxu0
      %v625 = vadd.f32 0.0, %v624
      %v626 = vpop.f32.mrb[0].mxu0
      %627 = vmatprep.mubr.f32.mxu0 0.0
      %628 = vmatmul.mubr.f32.gmra.mrb[0].mxu0 %v422
      %v629 = vpop.f32.mrb[0].mxu0
      %v630 = vadd.f32 0.0, %v629
      %v631 = vpop.f32.mrb[0].mxu0
      %632 = vmatprep.mubr.f32.mxu0 0.0
      %633 = vmatmul.mubr.f32.gmra.mrb[0].mxu0 %v425
      %v634 = vpop.f32.mrb[0].mxu0
      %v635 = vadd.f32 0.0, %v634
      %v636 = vpop.f32.mrb[0].mxu0
      %637 = vmatprep.mubr.f32.mxu0 0.0
      %638 = vmatmul.mubr.f32.gmra.mrb[0].mxu0 %v428
      %v639 = vpop.f32.mrb[0].mxu0
      %v640 = vadd.f32 0.0, %v639
      %v641 = vpop.f32.mrb[0].mxu0
      %642 = vmatprep.mubr.f32.mxu0 0.0
      %643 = vmatmul.mubr.f32.gmra.mrb[0].mxu0 %v431
      %v644 = vpop.f32.mrb[0].mxu0
      %v645 = vadd.f32 0.0, %v644
      %v646 = vpop.f32.mrb[0].mxu0
      %647 = vmatprep.mubr.f32.mxu0 0.0
      %648 = vmatmul.mubr.f32.gmra.mrb[0].mxu0 %v434
      %v649 = vpop.f32.mrb[0].mxu0
      %v650 = vadd.f32 0.0, %v649
      %v651 = vpop.f32.mrb[0].mxu0
      %652 = vmatprep.mubr.f32.mxu0 0.0
      %653 = vmatmul.mubr.f32.gmra.mrb[0].mxu0 %v437
      %v654 = vpop.f32.mrb[0].mxu0
      %v655 = vadd.f32 0.0, %v654
      %v656 = vpop.f32.mrb[0].mxu0
      %657 = vmatprep.mubr.f32.mxu0 0.0
      %658 = vmatmul.mubr.f32.gmra.mrb[0].mxu0 %v440
      %v659 = vpop.f32.mrb[0].mxu0
      %v660 = vadd.f32 0.0, %v659
      %v661 = vpop.f32.mrb[0].mxu0
      %662 = vmatprep.mubr.f32.mxu0 0.0
      %663 = vmatmul.mubr.f32.gmra.mrb[0].mxu0 %v443
      %v664 = vpop.f32.mrb[0].mxu0
      %v665 = vadd.f32 0.0, %v664
      %v666 = vpop.f32.mrb[0].mxu0
      %667 = vmatprep.mubr.f32.mxu0 0.0
      %668 = vmatmul.mubr.f32.gmra.mrb[0].mxu0 %v446
      %v669 = vpop.f32.mrb[0].mxu0
      %v670 = vadd.f32 0.0, %v669
      %v671 = vpop.f32.mrb[0].mxu0
      %672 = vmatprep.mubr.f32.mxu0 0.0
      %673 = vmatmul.mubr.f32.gmra.mrb[0].mxu0 %v449
      %v674 = vpop.f32.mrb[0].mxu0
      %v675 = vadd.f32 0.0, %v674
      %v676 = vpop.f32.mrb[0].mxu0
      %677 = vmatprep.mubr.f32.mxu0 0.0
      %678 = vmatmul.mubr.f32.gmra.mrb[0].mxu0 %v452
      %v679 = vpop.f32.mrb[0].mxu0
      %v680 = vadd.f32 0.0, %v679
      %v681 = vpop.f32.mrb[0].mxu0
      %682 = vdwg.mxu0
      %v683 = vld [vmem:[%s301] sm:$0xff]
      %v684 = vld [vmem:[%s301 + $0x8] sm:$0xff]
      %v685 = vld [vmem:[%s301 + $0x10] sm:$0xff]
      %v686 = vld [vmem:[%s301 + $0x18] sm:$0xff]
      %v687 = vld [vmem:[%s301 + $0x20] sm:$0xff]
      %v688 = vld [vmem:[%s301 + $0x28] sm:$0xff]
      %v689 = vld [vmem:[%s301 + $0x30] sm:$0xff]
      %v690 = vld [vmem:[%s301 + $0x38] sm:$0xff]
      %v691 = vld [vmem:[%s301 + $0x40] sm:$0xff]
      %v692 = vld [vmem:[%s301 + $0x48] sm:$0xff]
      %v693 = vld [vmem:[%s301 + $0x50] sm:$0xff]
      %v694 = vld [vmem:[%s301 + $0x58] sm:$0xff]
      %v695 = vld [vmem:[%s301 + $0x60] sm:$0xff]
      %v696 = vld [vmem:[%s301 + $0x68] sm:$0xff]
      %v697 = vld [vmem:[%s301 + $0x70] sm:$0xff]
      %v698 = vld [vmem:[%s301 + $0x78] sm:$0xff]
      %v699 = vld [vmem:[%s301 + $0x80] sm:$0xff]
      %v700 = vld [vmem:[%s301 + $0x88] sm:$0xff]
      %v701 = vld [vmem:[%s301 + $0x90] sm:$0xff]
      %v702 = vld [vmem:[%s301 + $0x98] sm:$0xff]
      %v703 = vld [vmem:[%s301 + $0xa0] sm:$0xff]
      %v704 = vld [vmem:[%s301 + $0xa8] sm:$0xff]
      %v705 = vld [vmem:[%s301 + $0xb0] sm:$0xff]
      %v706 = vld [vmem:[%s301 + $0xb8] sm:$0xff]
      %v707 = vld [vmem:[%s301 + $0xc0] sm:$0xff]
      %v708 = vld [vmem:[%s301 + $0xc8] sm:$0xff]
      %v709 = vld [vmem:[%s301 + $0xd0] sm:$0xff]
      %v710 = vld [vmem:[%s301 + $0xd8] sm:$0xff]
      %v711 = vld [vmem:[%s301 + $0xe0] sm:$0xff]
      %v712 = vld [vmem:[%s301 + $0xe8] sm:$0xff]
      %v713 = vld [vmem:[%s301 + $0xf0] sm:$0xff]
      %v714 = vld [vmem:[%s301 + $0xf8] sm:$0xff]
      %v716 = vsel %vm357, %v683, 0
      %v719 = vsel %vm357, %v684, 0
      %v722 = vsel %vm357, %v685, 0
      %v725 = vsel %vm357, %v686, 0
      %v728 = vsel %vm357, %v687, 0
      %v731 = vsel %vm357, %v688, 0
      %v734 = vsel %vm357, %v689, 0
      %v737 = vsel %vm357, %v690, 0
      %v740 = vsel %vm357, %v691, 0
      %v743 = vsel %vm357, %v692, 0
      %v746 = vsel %vm357, %v693, 0
      %v749 = vsel %vm357, %v694, 0
      %v752 = vsel %vm357, %v695, 0
      %v755 = vsel %vm357, %v696, 0
      %v758 = vsel %vm357, %v697, 0
      %v761 = vsel %vm357, %v698, 0
      %v764 = vsel %vm357, %v699, 0
      %v767 = vsel %vm357, %v700, 0
      %v770 = vsel %vm357, %v701, 0
      %v773 = vsel %vm357, %v702, 0
      %v776 = vsel %vm357, %v703, 0
      %v779 = vsel %vm357, %v704, 0
      %v782 = vsel %vm357, %v705, 0
      %v785 = vsel %vm357, %v706, 0
      %v788 = vsel %vm357, %v707, 0
      %v791 = vsel %vm357, %v708, 0
      %v794 = vsel %vm357, %v709, 0
      %v797 = vsel %vm357, %v710, 0
      %v800 = vsel %vm357, %v711, 0
      %v803 = vsel %vm357, %v712, 0
      %v806 = vsel %vm357, %v713, 0
      %v809 = vsel %vm357, %v714, 0
      %811 = vmatprep.subr.mxu0 0.0
      %812 = vmatpush1.msra.mxu0 %v321
      %813 = vmatprep.subr.mxu0 0.0
      %814 = vmatpush1.msra.mxu0 %v322
      %815 = vmatprep.subr.mxu0 0.0
      %816 = vmatpush1.msra.mxu0 %v323
      %817 = vmatprep.subr.mxu0 0.0
      %818 = vmatpush1.msra.mxu0 %v456
      %819 = vmatprep.subr.mxu0 0.0
      %820 = vmatpush1.msra.mxu0 0.0
      %821 = vmatprep.subr.mxu0 0.0
      %822 = vmatpush1.msra.mxu0 0.0
      %823 = vmatprep.subr.mxu0 0.0
      %824 = vmatpush1.msra.mxu0 0.0
      %825 = vmatprep.subr.mxu0 0.0
      %826 = vmatpush1.msra.mxu0 0.0
      %827 = vmatprep.subr.mxu0 0.0
      %828 = vmatpush1.msra.mxu0 0.0
      %829 = vmatprep.subr.mxu0 0.0
      %830 = vmatpush1.msra.mxu0 0.0
      %831 = vmatprep.subr.mxu0 0.0
      %832 = vmatpush1.msra.mxu0 0.0
      %833 = vmatprep.subr.mxu0 0.0
      %834 = vmatpush1.msra.mxu0 0.0
      %835 = vmatprep.subr.mxu0 0.0
      %836 = vmatpush1.msra.mxu0 0.0
      %837 = vmatprep.subr.mxu0 0.0
      %838 = vmatpush1.msra.mxu0 0.0
      %839 = vmatprep.subr.mxu0 0.0
      %840 = vmatpush1.msra.mxu0 0.0
      %841 = vmatprep.subr.mxu0 0.0
      %842 = vmatpush1.msra.mxu0 0.0
      %843 = vmatprep.subr.mxu0 0.0
      %844 = vmatpush1.msra.mxu0 0.0
      %845 = vmatprep.subr.mxu0 0.0
      %846 = vmatpush1.msra.mxu0 0.0
      %847 = vmatprep.subr.mxu0 0.0
      %848 = vmatpush1.msra.mxu0 0.0
      %849 = vmatprep.subr.mxu0 0.0
      %850 = vmatpush1.msra.mxu0 0.0
      %851 = vmatprep.subr.mxu0 0.0
      %852 = vmatpush1.msra.mxu0 0.0
      %853 = vmatprep.subr.mxu0 0.0
      %854 = vmatpush1.msra.mxu0 0.0
      %855 = vmatprep.subr.mxu0 0.0
      %856 = vmatpush1.msra.mxu0 0.0
      %857 = vmatprep.subr.mxu0 0.0
      %858 = vmatpush1.msra.mxu0 0.0
      %859 = vmatprep.subr.mxu0 0.0
      %860 = vmatpush1.msra.mxu0 0.0
      %861 = vmatprep.subr.mxu0 0.0
      %862 = vmatpush1.msra.mxu0 0.0
      %863 = vmatprep.subr.mxu0 0.0
      %864 = vmatpush1.msra.mxu0 0.0
      %865 = vmatprep.subr.mxu0 0.0
      %866 = vmatpush1.msra.mxu0 0.0
      %867 = vmatprep.subr.mxu0 0.0
      %868 = vmatpush1.msra.mxu0 0.0
      %869 = vmatprep.subr.mxu0 0.0
      %870 = vmatpush1.msra.mxu0 0.0
      %871 = vmatprep.subr.mxu0 0.0
      %872 = vmatpush1.msra.mxu0 0.0
      %873 = vmatprep.subr.mxu0 0.0
      %874 = vmatpush1.msra.mxu0 0.0
      %875 = vmatprep.mubr.f32.mxu0 0.0
      %876 = vmatmul.mubr.f32.gmra.mrb[0].mxu0 %v716
      %v877 = vpop.f32.mrb[0].mxu0
      %v878 = vadd.f32 0.0, %v877
      %v879 = vpop.f32.mrb[0].mxu0
      %880 = vmatprep.mubr.f32.mxu0 0.0
      %881 = vmatmul.mubr.f32.gmra.mrb[0].mxu0 %v719
      %v882 = vpop.f32.mrb[0].mxu0
      %v883 = vadd.f32 0.0, %v882
      %v884 = vpop.f32.mrb[0].mxu0
      %885 = vmatprep.mubr.f32.mxu0 0.0
      %886 = vmatmul.mubr.f32.gmra.mrb[0].mxu0 %v722
      %v887 = vpop.f32.mrb[0].mxu0
      %v888 = vadd.f32 0.0, %v887
      %v889 = vpop.f32.mrb[0].mxu0
      %890 = vmatprep.mubr.f32.mxu0 0.0
      %891 = vmatmul.mubr.f32.gmra.mrb[0].mxu0 %v725
      %v892 = vpop.f32.mrb[0].mxu0
      %v893 = vadd.f32 0.0, %v892
      %v894 = vpop.f32.mrb[0].mxu0
      %895 = vmatprep.mubr.f32.mxu0 0.0
      %896 = vmatmul.mubr.f32.gmra.mrb[0].mxu0 %v728
      %v897 = vpop.f32.mrb[0].mxu0
      %v898 = vadd.f32 0.0, %v897
      %v899 = vpop.f32.mrb[0].mxu0
      %900 = vmatprep.mubr.f32.mxu0 0.0
      %901 = vmatmul.mubr.f32.gmra.mrb[0].mxu0 %v731
      %v902 = vpop.f32.mrb[0].mxu0
      %v903 = vadd.f32 0.0, %v902
      %v904 = vpop.f32.mrb[0].mxu0
      %905 = vmatprep.mubr.f32.mxu0 0.0
      %906 = vmatmul.mubr.f32.gmra.mrb[0].mxu0 %v734
      %v907 = vpop.f32.mrb[0].mxu0
      %v908 = vadd.f32 0.0, %v907
      %v909 = vpop.f32.mrb[0].mxu0
      %910 = vmatprep.mubr.f32.mxu0 0.0
      %911 = vmatmul.mubr.f32.gmra.mrb[0].mxu0 %v737
      %v912 = vpop.f32.mrb[0].mxu0
      %v913 = vadd.f32 0.0, %v912
      %v914 = vpop.f32.mrb[0].mxu0
      %915 = vmatprep.mubr.f32.mxu0 0.0
      %916 = vmatmul.mubr.f32.gmra.mrb[0].mxu0 %v740
      %v917 = vpop.f32.mrb[0].mxu0
      %v918 = vadd.f32 0.0, %v917
      %v919 = vpop.f32.mrb[0].mxu0
      %920 = vmatprep.mubr.f32.mxu0 0.0
      %921 = vmatmul.mubr.f32.gmra.mrb[0].mxu0 %v743
      %v922 = vpop.f32.mrb[0].mxu0
      %v923 = vadd.f32 0.0, %v922
      %v924 = vpop.f32.mrb[0].mxu0
      %925 = vmatprep.mubr.f32.mxu0 0.0
      %926 = vmatmul.mubr.f32.gmra.mrb[0].mxu0 %v746
      %v927 = vpop.f32.mrb[0].mxu0
      %v928 = vadd.f32 0.0, %v927
      %v929 = vpop.f32.mrb[0].mxu0
      %930 = vmatprep.mubr.f32.mxu0 0.0
      %931 = vmatmul.mubr.f32.gmra.mrb[0].mxu0 %v749
      %v932 = vpop.f32.mrb[0].mxu0
      %v933 = vadd.f32 0.0, %v932
      %v934 = vpop.f32.mrb[0].mxu0
      %935 = vmatprep.mubr.f32.mxu0 0.0
      %936 = vmatmul.mubr.f32.gmra.mrb[0].mxu0 %v752
      %v937 = vpop.f32.mrb[0].mxu0
      %v938 = vadd.f32 0.0, %v937
      %v939 = vpop.f32.mrb[0].mxu0
      %940 = vmatprep.mubr.f32.mxu0 0.0
      %941 = vmatmul.mubr.f32.gmra.mrb[0].mxu0 %v755
      %v942 = vpop.f32.mrb[0].mxu0
      %v943 = vadd.f32 0.0, %v942
      %v944 = vpop.f32.mrb[0].mxu0
      %945 = vmatprep.mubr.f32.mxu0 0.0
      %946 = vmatmul.mubr.f32.gmra.mrb[0].mxu0 %v758
      %v947 = vpop.f32.mrb[0].mxu0
      %v948 = vadd.f32 0.0, %v947
      %v949 = vpop.f32.mrb[0].mxu0
      %950 = vmatprep.mubr.f32.mxu0 0.0
      %951 = vmatmul.mubr.f32.gmra.mrb[0].mxu0 %v761
      %v952 = vpop.f32.mrb[0].mxu0
      %v953 = vadd.f32 0.0, %v952
      %v954 = vpop.f32.mrb[0].mxu0
      %955 = vmatprep.mubr.f32.mxu0 0.0
      %956 = vmatmul.mubr.f32.gmra.mrb[0].mxu0 %v764
      %v957 = vpop.f32.mrb[0].mxu0
      %v958 = vadd.f32 0.0, %v957
      %v959 = vpop.f32.mrb[0].mxu0
      %960 = vmatprep.mubr.f32.mxu0 0.0
      %961 = vmatmul.mubr.f32.gmra.mrb[0].mxu0 %v767
      %v962 = vpop.f32.mrb[0].mxu0
      %v963 = vadd.f32 0.0, %v962
      %v964 = vpop.f32.mrb[0].mxu0
      %965 = vmatprep.mubr.f32.mxu0 0.0
      %966 = vmatmul.mubr.f32.gmra.mrb[0].mxu0 %v770
      %v967 = vpop.f32.mrb[0].mxu0
      %v968 = vadd.f32 0.0, %v967
      %v969 = vpop.f32.mrb[0].mxu0
      %970 = vmatprep.mubr.f32.mxu0 0.0
      %971 = vmatmul.mubr.f32.gmra.mrb[0].mxu0 %v773
      %v972 = vpop.f32.mrb[0].mxu0
      %v973 = vadd.f32 0.0, %v972
      %v974 = vpop.f32.mrb[0].mxu0
      %975 = vmatprep.mubr.f32.mxu0 0.0
      %976 = vmatmul.mubr.f32.gmra.mrb[0].mxu0 %v776
      %v977 = vpop.f32.mrb[0].mxu0
      %v978 = vadd.f32 0.0, %v977
      %v979 = vpop.f32.mrb[0].mxu0
      %980 = vmatprep.mubr.f32.mxu0 0.0
      %981 = vmatmul.mubr.f32.gmra.mrb[0].mxu0 %v779
      %v982 = vpop.f32.mrb[0].mxu0
      %v983 = vadd.f32 0.0, %v982
      %v984 = vpop.f32.mrb[0].mxu0
      %985 = vmatprep.mubr.f32.mxu0 0.0
      %986 = vmatmul.mubr.f32.gmra.mrb[0].mxu0 %v782
      %v987 = vpop.f32.mrb[0].mxu0
      %v988 = vadd.f32 0.0, %v987
      %v989 = vpop.f32.mrb[0].mxu0
      %990 = vmatprep.mubr.f32.mxu0 0.0
      %991 = vmatmul.mubr.f32.gmra.mrb[0].mxu0 %v785
      %v992 = vpop.f32.mrb[0].mxu0
      %v993 = vadd.f32 0.0, %v992
      %v994 = vpop.f32.mrb[0].mxu0
      %995 = vmatprep.mubr.f32.mxu0 0.0
      %996 = vmatmul.mubr.f32.gmra.mrb[0].mxu0 %v788
      %v997 = vpop.f32.mrb[0].mxu0
      %v998 = vadd.f32 0.0, %v997
      %v999 = vpop.f32.mrb[0].mxu0
      %1000 = vmatprep.mubr.f32.mxu0 0.0
      %1001 = vmatmul.mubr.f32.gmra.mrb[0].mxu0 %v791
      %v1002 = vpop.f32.mrb[0].mxu0
      %v1003 = vadd.f32 0.0, %v1002
      %v1004 = vpop.f32.mrb[0].mxu0
      %1005 = vmatprep.mubr.f32.mxu0 0.0
      %1006 = vmatmul.mubr.f32.gmra.mrb[0].mxu0 %v794
      %v1007 = vpop.f32.mrb[0].mxu0
      %v1008 = vadd.f32 0.0, %v1007
      %v1009 = vpop.f32.mrb[0].mxu0
      %1010 = vmatprep.mubr.f32.mxu0 0.0
      %1011 = vmatmul.mubr.f32.gmra.mrb[0].mxu0 %v797
      %v1012 = vpop.f32.mrb[0].mxu0
      %v1013 = vadd.f32 0.0, %v1012
      %v1014 = vpop.f32.mrb[0].mxu0
      %1015 = vmatprep.mubr.f32.mxu0 0.0
      %1016 = vmatmul.mubr.f32.gmra.mrb[0].mxu0 %v800
      %v1017 = vpop.f32.mrb[0].mxu0
      %v1018 = vadd.f32 0.0, %v1017
      %v1019 = vpop.f32.mrb[0].mxu0
      %1020 = vmatprep.mubr.f32.mxu0 0.0
      %1021 = vmatmul.mubr.f32.gmra.mrb[0].mxu0 %v803
      %v1022 = vpop.f32.mrb[0].mxu0
      %v1023 = vadd.f32 0.0, %v1022
      %v1024 = vpop.f32.mrb[0].mxu0
      %1025 = vmatprep.mubr.f32.mxu0 0.0
      %1026 = vmatmul.mubr.f32.gmra.mrb[0].mxu0 %v806
      %v1027 = vpop.f32.mrb[0].mxu0
      %v1028 = vadd.f32 0.0, %v1027
      %v1029 = vpop.f32.mrb[0].mxu0
      %1030 = vmatprep.mubr.f32.mxu0 0.0
      %1031 = vmatmul.mubr.f32.gmra.mrb[0].mxu0 %v809
      %v1032 = vpop.f32.mrb[0].mxu0
      %v1033 = vadd.f32 0.0, %v1032
      %v1034 = vpop.f32.mrb[0].mxu0
      %1035 = vdwg.mxu0
      %v1036 = vmax.f32 %v525, %v878
      %v1037 = vmax.f32 %v530, %v883
      %v1038 = vmax.f32 %v535, %v888
      %v1039 = vmax.f32 %v540, %v893
      %v1040 = vmax.f32 %v545, %v898
      %v1041 = vmax.f32 %v550, %v903
      %v1042 = vmax.f32 %v555, %v908
      %v1043 = vmax.f32 %v560, %v913
      %v1044 = vmax.f32 %v565, %v918
      %v1045 = vmax.f32 %v570, %v923
      %v1046 = vmax.f32 %v575, %v928
      %v1047 = vmax.f32 %v580, %v933
      %v1048 = vmax.f32 %v585, %v938
      %v1049 = vmax.f32 %v590, %v943
      %v1050 = vmax.f32 %v595, %v948
      %v1051 = vmax.f32 %v600, %v953
      %v1052 = vmax.f32 %v605, %v958
      %v1053 = vmax.f32 %v610, %v963
      %v1054 = vmax.f32 %v615, %v968
      %v1055 = vmax.f32 %v620, %v973
      %v1056 = vmax.f32 %v625, %v978
      %v1057 = vmax.f32 %v630, %v983
      %v1058 = vmax.f32 %v635, %v988
      %v1059 = vmax.f32 %v640, %v993
      %v1060 = vmax.f32 %v645, %v998
      %v1061 = vmax.f32 %v650, %v1003
      %v1062 = vmax.f32 %v655, %v1008
      %v1063 = vmax.f32 %v660, %v1013
      %v1064 = vmax.f32 %v665, %v1018
      %v1065 = vmax.f32 %v670, %v1023
      %v1066 = vmax.f32 %v675, %v1028
      %v1067 = vmax.f32 %v680, %v1033
      %v1068 = vld [vmem:[%s307] sm:$0xff]
      %v1069 = vld [vmem:[%s307 + $0x8] sm:$0xff]
      %v1070 = vld [vmem:[%s307 + $0x10] sm:$0xff]
      %v1071 = vld [vmem:[%s307 + $0x18] sm:$0xff]
      %v1072 = vld [vmem:[%s307 + $0x20] sm:$0xff]
      %v1073 = vld [vmem:[%s307 + $0x28] sm:$0xff]
      %v1074 = vld [vmem:[%s307 + $0x30] sm:$0xff]
      %v1075 = vld [vmem:[%s307 + $0x38] sm:$0xff]
      %v1076 = vld [vmem:[%s307 + $0x40] sm:$0xff]
      %v1077 = vld [vmem:[%s307 + $0x48] sm:$0xff]
      %v1078 = vld [vmem:[%s307 + $0x50] sm:$0xff]
      %v1079 = vld [vmem:[%s307 + $0x58] sm:$0xff]
      %v1080 = vld [vmem:[%s307 + $0x60] sm:$0xff]
      %v1081 = vld [vmem:[%s307 + $0x68] sm:$0xff]
      %v1082 = vld [vmem:[%s307 + $0x70] sm:$0xff]
      %v1083 = vld [vmem:[%s307 + $0x78] sm:$0xff]
      %v1084 = vld [vmem:[%s307 + $0x80] sm:$0xff]
      %v1085 = vld [vmem:[%s307 + $0x88] sm:$0xff]
      %v1086 = vld [vmem:[%s307 + $0x90] sm:$0xff]
      %v1087 = vld [vmem:[%s307 + $0x98] sm:$0xff]
      %v1088 = vld [vmem:[%s307 + $0xa0] sm:$0xff]
      %v1089 = vld [vmem:[%s307 + $0xa8] sm:$0xff]
      %v1090 = vld [vmem:[%s307 + $0xb0] sm:$0xff]
      %v1091 = vld [vmem:[%s307 + $0xb8] sm:$0xff]
      %v1092 = vld [vmem:[%s307 + $0xc0] sm:$0xff]
      %v1093 = vld [vmem:[%s307 + $0xc8] sm:$0xff]
      %v1094 = vld [vmem:[%s307 + $0xd0] sm:$0xff]
      %v1095 = vld [vmem:[%s307 + $0xd8] sm:$0xff]
      %v1096 = vld [vmem:[%s307 + $0xe0] sm:$0xff]
      %v1097 = vld [vmem:[%s307 + $0xe8] sm:$0xff]
      %v1098 = vld [vmem:[%s307 + $0xf0] sm:$0xff]
      %v1099 = vld [vmem:[%s307 + $0xf8] sm:$0xff]
      %v1101 = vsel %vm357, %v1068, 0
      %v1104 = vsel %vm357, %v1069, 0
      %v1107 = vsel %vm357, %v1070, 0
      %v1110 = vsel %vm357, %v1071, 0
      %v1113 = vsel %vm357, %v1072, 0
      %v1116 = vsel %vm357, %v1073, 0
      %v1119 = vsel %vm357, %v1074, 0
      %v1122 = vsel %vm357, %v1075, 0
      %v1125 = vsel %vm357, %v1076, 0
      %v1128 = vsel %vm357, %v1077, 0
      %v1131 = vsel %vm357, %v1078, 0
      %v1134 = vsel %vm357, %v1079, 0
      %v1137 = vsel %vm357, %v1080, 0
      %v1140 = vsel %vm357, %v1081, 0
      %v1143 = vsel %vm357, %v1082, 0
      %v1146 = vsel %vm357, %v1083, 0
      %v1149 = vsel %vm357, %v1084, 0
      %v1152 = vsel %vm357, %v1085, 0
      %v1155 = vsel %vm357, %v1086, 0
      %v1158 = vsel %vm357, %v1087, 0
      %v1161 = vsel %vm357, %v1088, 0
      %v1164 = vsel %vm357, %v1089, 0
      %v1167 = vsel %vm357, %v1090, 0
      %v1170 = vsel %vm357, %v1091, 0
      %v1173 = vsel %vm357, %v1092, 0
      %v1176 = vsel %vm357, %v1093, 0
      %v1179 = vsel %vm357, %v1094, 0
      %v1182 = vsel %vm357, %v1095, 0
      %v1185 = vsel %vm357, %v1096, 0
      %v1188 = vsel %vm357, %v1097, 0
      %v1191 = vsel %vm357, %v1098, 0
      %v1194 = vsel %vm357, %v1099, 0
      %1196 = vmatprep.subr.mxu0 0.0
      %1197 = vmatpush1.msra.mxu0 %v321
      %1198 = vmatprep.subr.mxu0 0.0
      %1199 = vmatpush1.msra.mxu0 %v322
      %1200 = vmatprep.subr.mxu0 0.0
      %1201 = vmatpush1.msra.mxu0 %v323
      %1202 = vmatprep.subr.mxu0 0.0
      %1203 = vmatpush1.msra.mxu0 %v456
      %1204 = vmatprep.subr.mxu0 0.0
      %1205 = vmatpush1.msra.mxu0 0.0
      %1206 = vmatprep.subr.mxu0 0.0
      %1207 = vmatpush1.msra.mxu0 0.0
      %1208 = vmatprep.subr.mxu0 0.0
      %1209 = vmatpush1.msra.mxu0 0.0
      %1210 = vmatprep.subr.mxu0 0.0
      %1211 = vmatpush1.msra.mxu0 0.0
      %1212 = vmatprep.subr.mxu0 0.0
      %1213 = vmatpush1.msra.mxu0 0.0
      %1214 = vmatprep.subr.mxu0 0.0
      %1215 = vmatpush1.msra.mxu0 0.0
      %1216 = vmatprep.subr.mxu0 0.0
      %1217 = vmatpush1.msra.mxu0 0.0
      %1218 = vmatprep.subr.mxu0 0.0
      %1219 = vmatpush1.msra.mxu0 0.0
      %1220 = vmatprep.subr.mxu0 0.0
      %1221 = vmatpush1.msra.mxu0 0.0
      %1222 = vmatprep.subr.mxu0 0.0
      %1223 = vmatpush1.msra.mxu0 0.0
      %1224 = vmatprep.subr.mxu0 0.0
      %1225 = vmatpush1.msra.mxu0 0.0
      %1226 = vmatprep.subr.mxu0 0.0
      %1227 = vmatpush1.msra.mxu0 0.0
      %1228 = vmatprep.subr.mxu0 0.0
      %1229 = vmatpush1.msra.mxu0 0.0
      %1230 = vmatprep.subr.mxu0 0.0
      %1231 = vmatpush1.msra.mxu0 0.0
      %1232 = vmatprep.subr.mxu0 0.0
      %1233 = vmatpush1.msra.mxu0 0.0
      %1234 = vmatprep.subr.mxu0 0.0
      %1235 = vmatpush1.msra.mxu0 0.0
      %1236 = vmatprep.subr.mxu0 0.0
      %1237 = vmatpush1.msra.mxu0 0.0
      %1238 = vmatprep.subr.mxu0 0.0
      %1239 = vmatpush1.msra.mxu0 0.0
      %1240 = vmatprep.subr.mxu0 0.0
      %1241 = vmatpush1.msra.mxu0 0.0
      %1242 = vmatprep.subr.mxu0 0.0
      %1243 = vmatpush1.msra.mxu0 0.0
      %1244 = vmatprep.subr.mxu0 0.0
      %1245 = vmatpush1.msra.mxu0 0.0
      %1246 = vmatprep.subr.mxu0 0.0
      %1247 = vmatpush1.msra.mxu0 0.0
      %1248 = vmatprep.subr.mxu0 0.0
      %1249 = vmatpush1.msra.mxu0 0.0
      %1250 = vmatprep.subr.mxu0 0.0
      %1251 = vmatpush1.msra.mxu0 0.0
      %1252 = vmatprep.subr.mxu0 0.0
      %1253 = vmatpush1.msra.mxu0 0.0
      %1254 = vmatprep.subr.mxu0 0.0
      %1255 = vmatpush1.msra.mxu0 0.0
      %1256 = vmatprep.subr.mxu0 0.0
      %1257 = vmatpush1.msra.mxu0 0.0
      %1258 = vmatprep.subr.mxu0 0.0
      %1259 = vmatpush1.msra.mxu0 0.0
      %1260 = vmatprep.mubr.f32.mxu0 0.0
      %1261 = vmatmul.mubr.f32.gmra.mrb[0].mxu0 %v1101
      %v1262 = vpop.f32.mrb[0].mxu0
      %v1263 = vadd.f32 0.0, %v1262
      %v1264 = vpop.f32.mrb[0].mxu0
      %1265 = vmatprep.mubr.f32.mxu0 0.0
      %1266 = vmatmul.mubr.f32.gmra.mrb[0].mxu0 %v1104
      %v1267 = vpop.f32.mrb[0].mxu0
      %v1268 = vadd.f32 0.0, %v1267
      %v1269 = vpop.f32.mrb[0].mxu0
      %1270 = vmatprep.mubr.f32.mxu0 0.0
      %1271 = vmatmul.mubr.f32.gmra.mrb[0].mxu0 %v1107
      %v1272 = vpop.f32.mrb[0].mxu0
      %v1273 = vadd.f32 0.0, %v1272
      %v1274 = vpop.f32.mrb[0].mxu0
      %1275 = vmatprep.mubr.f32.mxu0 0.0
      %1276 = vmatmul.mubr.f32.gmra.mrb[0].mxu0 %v1110
      %v1277 = vpop.f32.mrb[0].mxu0
      %v1278 = vadd.f32 0.0, %v1277
      %v1279 = vpop.f32.mrb[0].mxu0
      %1280 = vmatprep.mubr.f32.mxu0 0.0
      %1281 = vmatmul.mubr.f32.gmra.mrb[0].mxu0 %v1113
      %v1282 = vpop.f32.mrb[0].mxu0
      %v1283 = vadd.f32 0.0, %v1282
      %v1284 = vpop.f32.mrb[0].mxu0
      %1285 = vmatprep.mubr.f32.mxu0 0.0
      %1286 = vmatmul.mubr.f32.gmra.mrb[0].mxu0 %v1116
      %v1287 = vpop.f32.mrb[0].mxu0
      %v1288 = vadd.f32 0.0, %v1287
      %v1289 = vpop.f32.mrb[0].mxu0
      %1290 = vmatprep.mubr.f32.mxu0 0.0
      %1291 = vmatmul.mubr.f32.gmra.mrb[0].mxu0 %v1119
      %v1292 = vpop.f32.mrb[0].mxu0
      %v1293 = vadd.f32 0.0, %v1292
      %v1294 = vpop.f32.mrb[0].mxu0
      %1295 = vmatprep.mubr.f32.mxu0 0.0
      %1296 = vmatmul.mubr.f32.gmra.mrb[0].mxu0 %v1122
      %v1297 = vpop.f32.mrb[0].mxu0
      %v1298 = vadd.f32 0.0, %v1297
      %v1299 = vpop.f32.mrb[0].mxu0
      %1300 = vmatprep.mubr.f32.mxu0 0.0
      %1301 = vmatmul.mubr.f32.gmra.mrb[0].mxu0 %v1125
      %v1302 = vpop.f32.mrb[0].mxu0
      %v1303 = vadd.f32 0.0, %v1302
      %v1304 = vpop.f32.mrb[0].mxu0
      %1305 = vmatprep.mubr.f32.mxu0 0.0
      %1306 = vmatmul.mubr.f32.gmra.mrb[0].mxu0 %v1128
      %v1307 = vpop.f32.mrb[0].mxu0
      %v1308 = vadd.f32 0.0, %v1307
      %v1309 = vpop.f32.mrb[0].mxu0
      %1310 = vmatprep.mubr.f32.mxu0 0.0
      %1311 = vmatmul.mubr.f32.gmra.mrb[0].mxu0 %v1131
      %v1312 = vpop.f32.mrb[0].mxu0
      %v1313 = vadd.f32 0.0, %v1312
      %v1314 = vpop.f32.mrb[0].mxu0
      %1315 = vmatprep.mubr.f32.mxu0 0.0
      %1316 = vmatmul.mubr.f32.gmra.mrb[0].mxu0 %v1134
      %v1317 = vpop.f32.mrb[0].mxu0
      %v1318 = vadd.f32 0.0, %v1317
      %v1319 = vpop.f32.mrb[0].mxu0
      %1320 = vmatprep.mubr.f32.mxu0 0.0
      %1321 = vmatmul.mubr.f32.gmra.mrb[0].mxu0 %v1137
      %v1322 = vpop.f32.mrb[0].mxu0
      %v1323 = vadd.f32 0.0, %v1322
      %v1324 = vpop.f32.mrb[0].mxu0
      %1325 = vmatprep.mubr.f32.mxu0 0.0
      %1326 = vmatmul.mubr.f32.gmra.mrb[0].mxu0 %v1140
      %v1327 = vpop.f32.mrb[0].mxu0
      %v1328 = vadd.f32 0.0, %v1327
      %v1329 = vpop.f32.mrb[0].mxu0
      %1330 = vmatprep.mubr.f32.mxu0 0.0
      %1331 = vmatmul.mubr.f32.gmra.mrb[0].mxu0 %v1143
      %v1332 = vpop.f32.mrb[0].mxu0
      %v1333 = vadd.f32 0.0, %v1332
      %v1334 = vpop.f32.mrb[0].mxu0
      %1335 = vmatprep.mubr.f32.mxu0 0.0
      %1336 = vmatmul.mubr.f32.gmra.mrb[0].mxu0 %v1146
      %v1337 = vpop.f32.mrb[0].mxu0
      %v1338 = vadd.f32 0.0, %v1337
      %v1339 = vpop.f32.mrb[0].mxu0
      %1340 = vmatprep.mubr.f32.mxu0 0.0
      %1341 = vmatmul.mubr.f32.gmra.mrb[0].mxu0 %v1149
      %v1342 = vpop.f32.mrb[0].mxu0
      %v1343 = vadd.f32 0.0, %v1342
      %v1344 = vpop.f32.mrb[0].mxu0
      %1345 = vmatprep.mubr.f32.mxu0 0.0
      %1346 = vmatmul.mubr.f32.gmra.mrb[0].mxu0 %v1152
      %v1347 = vpop.f32.mrb[0].mxu0
      %v1348 = vadd.f32 0.0, %v1347
      %v1349 = vpop.f32.mrb[0].mxu0
      %1350 = vmatprep.mubr.f32.mxu0 0.0
      %1351 = vmatmul.mubr.f32.gmra.mrb[0].mxu0 %v1155
      %v1352 = vpop.f32.mrb[0].mxu0
      %v1353 = vadd.f32 0.0, %v1352
      %v1354 = vpop.f32.mrb[0].mxu0
      %1355 = vmatprep.mubr.f32.mxu0 0.0
      %1356 = vmatmul.mubr.f32.gmra.mrb[0].mxu0 %v1158
      %v1357 = vpop.f32.mrb[0].mxu0
      %v1358 = vadd.f32 0.0, %v1357
      %v1359 = vpop.f32.mrb[0].mxu0
      %1360 = vmatprep.mubr.f32.mxu0 0.0
      %1361 = vmatmul.mubr.f32.gmra.mrb[0].mxu0 %v1161
      %v1362 = vpop.f32.mrb[0].mxu0
      %v1363 = vadd.f32 0.0, %v1362
      %v1364 = vpop.f32.mrb[0].mxu0
      %1365 = vmatprep.mubr.f32.mxu0 0.0
      %1366 = vmatmul.mubr.f32.gmra.mrb[0].mxu0 %v1164
      %v1367 = vpop.f32.mrb[0].mxu0
      %v1368 = vadd.f32 0.0, %v1367
      %v1369 = vpop.f32.mrb[0].mxu0
      %1370 = vmatprep.mubr.f32.mxu0 0.0
      %1371 = vmatmul.mubr.f32.gmra.mrb[0].mxu0 %v1167
      %v1372 = vpop.f32.mrb[0].mxu0
      %v1373 = vadd.f32 0.0, %v1372
      %v1374 = vpop.f32.mrb[0].mxu0
      %1375 = vmatprep.mubr.f32.mxu0 0.0
      %1376 = vmatmul.mubr.f32.gmra.mrb[0].mxu0 %v1170
      %v1377 = vpop.f32.mrb[0].mxu0
      %v1378 = vadd.f32 0.0, %v1377
      %v1379 = vpop.f32.mrb[0].mxu0
      %1380 = vmatprep.mubr.f32.mxu0 0.0
      %1381 = vmatmul.mubr.f32.gmra.mrb[0].mxu0 %v1173
      %v1382 = vpop.f32.mrb[0].mxu0
      %v1383 = vadd.f32 0.0, %v1382
      %v1384 = vpop.f32.mrb[0].mxu0
      %1385 = vmatprep.mubr.f32.mxu0 0.0
      %1386 = vmatmul.mubr.f32.gmra.mrb[0].mxu0 %v1176
      %v1387 = vpop.f32.mrb[0].mxu0
      %v1388 = vadd.f32 0.0, %v1387
      %v1389 = vpop.f32.mrb[0].mxu0
      %1390 = vmatprep.mubr.f32.mxu0 0.0
      %1391 = vmatmul.mubr.f32.gmra.mrb[0].mxu0 %v1179
      %v1392 = vpop.f32.mrb[0].mxu0
      %v1393 = vadd.f32 0.0, %v1392
      %v1394 = vpop.f32.mrb[0].mxu0
      %1395 = vmatprep.mubr.f32.mxu0 0.0
      %1396 = vmatmul.mubr.f32.gmra.mrb[0].mxu0 %v1182
      %v1397 = vpop.f32.mrb[0].mxu0
      %v1398 = vadd.f32 0.0, %v1397
      %v1399 = vpop.f32.mrb[0].mxu0
      %1400 = vmatprep.mubr.f32.mxu0 0.0
      %1401 = vmatmul.mubr.f32.gmra.mrb[0].mxu0 %v1185
      %v1402 = vpop.f32.mrb[0].mxu0
      %v1403 = vadd.f32 0.0, %v1402
      %v1404 = vpop.f32.mrb[0].mxu0
      %1405 = vmatprep.mubr.f32.mxu0 0.0
      %1406 = vmatmul.mubr.f32.gmra.mrb[0].mxu0 %v1188
      %v1407 = vpop.f32.mrb[0].mxu0
      %v1408 = vadd.f32 0.0, %v1407
      %v1409 = vpop.f32.mrb[0].mxu0
      %1410 = vmatprep.mubr.f32.mxu0 0.0
      %1411 = vmatmul.mubr.f32.gmra.mrb[0].mxu0 %v1191
      %v1412 = vpop.f32.mrb[0].mxu0
      %v1413 = vadd.f32 0.0, %v1412
      %v1414 = vpop.f32.mrb[0].mxu0
      %1415 = vmatprep.mubr.f32.mxu0 0.0
      %1416 = vmatmul.mubr.f32.gmra.mrb[0].mxu0 %v1194
      %v1417 = vpop.f32.mrb[0].mxu0
      %v1418 = vadd.f32 0.0, %v1417
      %v1419 = vpop.f32.mrb[0].mxu0
      %1420 = vdwg.mxu0
      %v1421 = vld [vmem:[%s313] sm:$0xff]
      %v1422 = vld [vmem:[%s313 + $0x8] sm:$0xff]
      %v1423 = vld [vmem:[%s313 + $0x10] sm:$0xff]
      %v1424 = vld [vmem:[%s313 + $0x18] sm:$0xff]
      %v1425 = vld [vmem:[%s313 + $0x20] sm:$0xff]
      %v1426 = vld [vmem:[%s313 + $0x28] sm:$0xff]
      %v1427 = vld [vmem:[%s313 + $0x30] sm:$0xff]
      %v1428 = vld [vmem:[%s313 + $0x38] sm:$0xff]
      %v1429 = vld [vmem:[%s313 + $0x40] sm:$0xff]
      %v1430 = vld [vmem:[%s313 + $0x48] sm:$0xff]
      %v1431 = vld [vmem:[%s313 + $0x50] sm:$0xff]
      %v1432 = vld [vmem:[%s313 + $0x58] sm:$0xff]
      %v1433 = vld [vmem:[%s313 + $0x60] sm:$0xff]
      %v1434 = vld [vmem:[%s313 + $0x68] sm:$0xff]
      %v1435 = vld [vmem:[%s313 + $0x70] sm:$0xff]
      %v1436 = vld [vmem:[%s313 + $0x78] sm:$0xff]
      %v1437 = vld [vmem:[%s313 + $0x80] sm:$0xff]
      %v1438 = vld [vmem:[%s313 + $0x88] sm:$0xff]
      %v1439 = vld [vmem:[%s313 + $0x90] sm:$0xff]
      %v1440 = vld [vmem:[%s313 + $0x98] sm:$0xff]
      %v1441 = vld [vmem:[%s313 + $0xa0] sm:$0xff]
      %v1442 = vld [vmem:[%s313 + $0xa8] sm:$0xff]
      %v1443 = vld [vmem:[%s313 + $0xb0] sm:$0xff]
      %v1444 = vld [vmem:[%s313 + $0xb8] sm:$0xff]
      %v1445 = vld [vmem:[%s313 + $0xc0] sm:$0xff]
      %v1446 = vld [vmem:[%s313 + $0xc8] sm:$0xff]
      %v1447 = vld [vmem:[%s313 + $0xd0] sm:$0xff]
      %v1448 = vld [vmem:[%s313 + $0xd8] sm:$0xff]
      %v1449 = vld [vmem:[%s313 + $0xe0] sm:$0xff]
      %v1450 = vld [vmem:[%s313 + $0xe8] sm:$0xff]
      %v1451 = vld [vmem:[%s313 + $0xf0] sm:$0xff]
      %v1452 = vld [vmem:[%s313 + $0xf8] sm:$0xff]
      %v1454 = vsel %vm357, %v1421, 0
      %v1457 = vsel %vm357, %v1422, 0
      %v1460 = vsel %vm357, %v1423, 0
      %v1463 = vsel %vm357, %v1424, 0
      %v1466 = vsel %vm357, %v1425, 0
      %v1469 = vsel %vm357, %v1426, 0
      %v1472 = vsel %vm357, %v1427, 0
      %v1475 = vsel %vm357, %v1428, 0
      %v1478 = vsel %vm357, %v1429, 0
      %v1481 = vsel %vm357, %v1430, 0
      %v1484 = vsel %vm357, %v1431, 0
      %v1487 = vsel %vm357, %v1432, 0
      %v1490 = vsel %vm357, %v1433, 0
      %v1493 = vsel %vm357, %v1434, 0
      %v1496 = vsel %vm357, %v1435, 0
      %v1499 = vsel %vm357, %v1436, 0
      %v1502 = vsel %vm357, %v1437, 0
      %v1505 = vsel %vm357, %v1438, 0
      %v1508 = vsel %vm357, %v1439, 0
      %v1511 = vsel %vm357, %v1440, 0
      %v1514 = vsel %vm357, %v1441, 0
      %v1517 = vsel %vm357, %v1442, 0
      %v1520 = vsel %vm357, %v1443, 0
      %v1523 = vsel %vm357, %v1444, 0
      %v1526 = vsel %vm357, %v1445, 0
      %v1529 = vsel %vm357, %v1446, 0
      %v1532 = vsel %vm357, %v1447, 0
      %v1535 = vsel %vm357, %v1448, 0
      %v1538 = vsel %vm357, %v1449, 0
      %v1541 = vsel %vm357, %v1450, 0
      %v1544 = vsel %vm357, %v1451, 0
      %v1547 = vsel %vm357, %v1452, 0
      %1549 = vmatprep.subr.mxu0 0.0
      %1550 = vmatpush1.msra.mxu0 %v321
      %1551 = vmatprep.subr.mxu0 0.0
      %1552 = vmatpush1.msra.mxu0 %v322
      %1553 = vmatprep.subr.mxu0 0.0
      %1554 = vmatpush1.msra.mxu0 %v323
      %1555 = vmatprep.subr.mxu0 0.0
      %1556 = vmatpush1.msra.mxu0 %v456
      %1557 = vmatprep.subr.mxu0 0.0
      %1558 = vmatpush1.msra.mxu0 0.0
      %1559 = vmatprep.subr.mxu0 0.0
      %1560 = vmatpush1.msra.mxu0 0.0
      %1561 = vmatprep.subr.mxu0 0.0
      %1562 = vmatpush1.msra.mxu0 0.0
      %1563 = vmatprep.subr.mxu0 0.0
      %1564 = vmatpush1.msra.mxu0 0.0
      %1565 = vmatprep.subr.mxu0 0.0
      %1566 = vmatpush1.msra.mxu0 0.0
      %1567 = vmatprep.subr.mxu0 0.0
      %1568 = vmatpush1.msra.mxu0 0.0
      %1569 = vmatprep.subr.mxu0 0.0
      %1570 = vmatpush1.msra.mxu0 0.0
      %1571 = vmatprep.subr.mxu0 0.0
      %1572 = vmatpush1.msra.mxu0 0.0
      %1573 = vmatprep.subr.mxu0 0.0
      %1574 = vmatpush1.msra.mxu0 0.0
      %1575 = vmatprep.subr.mxu0 0.0
      %1576 = vmatpush1.msra.mxu0 0.0
      %1577 = vmatprep.subr.mxu0 0.0
      %1578 = vmatpush1.msra.mxu0 0.0
      %1579 = vmatprep.subr.mxu0 0.0
      %1580 = vmatpush1.msra.mxu0 0.0
      %1581 = vmatprep.subr.mxu0 0.0
      %1582 = vmatpush1.msra.mxu0 0.0
      %1583 = vmatprep.subr.mxu0 0.0
      %1584 = vmatpush1.msra.mxu0 0.0
      %1585 = vmatprep.subr.mxu0 0.0
      %1586 = vmatpush1.msra.mxu0 0.0
      %1587 = vmatprep.subr.mxu0 0.0
      %1588 = vmatpush1.msra.mxu0 0.0
      %1589 = vmatprep.subr.mxu0 0.0
      %1590 = vmatpush1.msra.mxu0 0.0
      %1591 = vmatprep.subr.mxu0 0.0
      %1592 = vmatpush1.msra.mxu0 0.0
      %1593 = vmatprep.subr.mxu0 0.0
      %1594 = vmatpush1.msra.mxu0 0.0
      %1595 = vmatprep.subr.mxu0 0.0
      %1596 = vmatpush1.msra.mxu0 0.0
      %1597 = vmatprep.subr.mxu0 0.0
      %1598 = vmatpush1.msra.mxu0 0.0
      %1599 = vmatprep.subr.mxu0 0.0
      %1600 = vmatpush1.msra.mxu0 0.0
      %1601 = vmatprep.subr.mxu0 0.0
      %1602 = vmatpush1.msra.mxu0 0.0
      %1603 = vmatprep.subr.mxu0 0.0
      %1604 = vmatpush1.msra.mxu0 0.0
      %1605 = vmatprep.subr.mxu0 0.0
      %1606 = vmatpush1.msra.mxu0 0.0
      %1607 = vmatprep.subr.mxu0 0.0
      %1608 = vmatpush1.msra.mxu0 0.0
      %1609 = vmatprep.subr.mxu0 0.0
      %1610 = vmatpush1.msra.mxu0 0.0
      %1611 = vmatprep.subr.mxu0 0.0
      %1612 = vmatpush1.msra.mxu0 0.0
      %1613 = vmatprep.mubr.f32.mxu0 0.0
      %1614 = vmatmul.mubr.f32.gmra.mrb[0].mxu0 %v1454
      %v1615 = vpop.f32.mrb[0].mxu0
      %v1616 = vadd.f32 0.0, %v1615
      %v1617 = vpop.f32.mrb[0].mxu0
      %1618 = vmatprep.mubr.f32.mxu0 0.0
      %1619 = vmatmul.mubr.f32.gmra.mrb[0].mxu0 %v1457
      %v1620 = vpop.f32.mrb[0].mxu0
      %v1621 = vadd.f32 0.0, %v1620
      %v1622 = vpop.f32.mrb[0].mxu0
      %1623 = vmatprep.mubr.f32.mxu0 0.0
      %1624 = vmatmul.mubr.f32.gmra.mrb[0].mxu0 %v1460
      %v1625 = vpop.f32.mrb[0].mxu0
      %v1626 = vadd.f32 0.0, %v1625
      %v1627 = vpop.f32.mrb[0].mxu0
      %1628 = vmatprep.mubr.f32.mxu0 0.0
      %1629 = vmatmul.mubr.f32.gmra.mrb[0].mxu0 %v1463
      %v1630 = vpop.f32.mrb[0].mxu0
      %v1631 = vadd.f32 0.0, %v1630
      %v1632 = vpop.f32.mrb[0].mxu0
      %1633 = vmatprep.mubr.f32.mxu0 0.0
      %1634 = vmatmul.mubr.f32.gmra.mrb[0].mxu0 %v1466
      %v1635 = vpop.f32.mrb[0].mxu0
      %v1636 = vadd.f32 0.0, %v1635
      %v1637 = vpop.f32.mrb[0].mxu0
      %1638 = vmatprep.mubr.f32.mxu0 0.0
      %1639 = vmatmul.mubr.f32.gmra.mrb[0].mxu0 %v1469
      %v1640 = vpop.f32.mrb[0].mxu0
      %v1641 = vadd.f32 0.0, %v1640
      %v1642 = vpop.f32.mrb[0].mxu0
      %1643 = vmatprep.mubr.f32.mxu0 0.0
      %1644 = vmatmul.mubr.f32.gmra.mrb[0].mxu0 %v1472
      %v1645 = vpop.f32.mrb[0].mxu0
      %v1646 = vadd.f32 0.0, %v1645
      %v1647 = vpop.f32.mrb[0].mxu0
      %1648 = vmatprep.mubr.f32.mxu0 0.0
      %1649 = vmatmul.mubr.f32.gmra.mrb[0].mxu0 %v1475
      %v1650 = vpop.f32.mrb[0].mxu0
      %v1651 = vadd.f32 0.0, %v1650
      %v1652 = vpop.f32.mrb[0].mxu0
      %1653 = vmatprep.mubr.f32.mxu0 0.0
      %1654 = vmatmul.mubr.f32.gmra.mrb[0].mxu0 %v1478
      %v1655 = vpop.f32.mrb[0].mxu0
      %v1656 = vadd.f32 0.0, %v1655
      %v1657 = vpop.f32.mrb[0].mxu0
      %1658 = vmatprep.mubr.f32.mxu0 0.0
      %1659 = vmatmul.mubr.f32.gmra.mrb[0].mxu0 %v1481
      %v1660 = vpop.f32.mrb[0].mxu0
      %v1661 = vadd.f32 0.0, %v1660
      %v1662 = vpop.f32.mrb[0].mxu0
      %1663 = vmatprep.mubr.f32.mxu0 0.0
      %1664 = vmatmul.mubr.f32.gmra.mrb[0].mxu0 %v1484
      %v1665 = vpop.f32.mrb[0].mxu0
      %v1666 = vadd.f32 0.0, %v1665
      %v1667 = vpop.f32.mrb[0].mxu0
      %1668 = vmatprep.mubr.f32.mxu0 0.0
      %1669 = vmatmul.mubr.f32.gmra.mrb[0].mxu0 %v1487
      %v1670 = vpop.f32.mrb[0].mxu0
      %v1671 = vadd.f32 0.0, %v1670
      %v1672 = vpop.f32.mrb[0].mxu0
      %1673 = vmatprep.mubr.f32.mxu0 0.0
      %1674 = vmatmul.mubr.f32.gmra.mrb[0].mxu0 %v1490
      %v1675 = vpop.f32.mrb[0].mxu0
      %v1676 = vadd.f32 0.0, %v1675
      %v1677 = vpop.f32.mrb[0].mxu0
      %1678 = vmatprep.mubr.f32.mxu0 0.0
      %1679 = vmatmul.mubr.f32.gmra.mrb[0].mxu0 %v1493
      %v1680 = vpop.f32.mrb[0].mxu0
      %v1681 = vadd.f32 0.0, %v1680
      %v1682 = vpop.f32.mrb[0].mxu0
      %1683 = vmatprep.mubr.f32.mxu0 0.0
      %1684 = vmatmul.mubr.f32.gmra.mrb[0].mxu0 %v1496
      %v1685 = vpop.f32.mrb[0].mxu0
      %v1686 = vadd.f32 0.0, %v1685
      %v1687 = vpop.f32.mrb[0].mxu0
      %1688 = vmatprep.mubr.f32.mxu0 0.0
      %1689 = vmatmul.mubr.f32.gmra.mrb[0].mxu0 %v1499
      %v1690 = vpop.f32.mrb[0].mxu0
      %v1691 = vadd.f32 0.0, %v1690
      %v1692 = vpop.f32.mrb[0].mxu0
      %1693 = vmatprep.mubr.f32.mxu0 0.0
      %1694 = vmatmul.mubr.f32.gmra.mrb[0].mxu0 %v1502
      %v1695 = vpop.f32.mrb[0].mxu0
      %v1696 = vadd.f32 0.0, %v1695
      %v1697 = vpop.f32.mrb[0].mxu0
      %1698 = vmatprep.mubr.f32.mxu0 0.0
      %1699 = vmatmul.mubr.f32.gmra.mrb[0].mxu0 %v1505
      %v1700 = vpop.f32.mrb[0].mxu0
      %v1701 = vadd.f32 0.0, %v1700
      %v1702 = vpop.f32.mrb[0].mxu0
      %1703 = vmatprep.mubr.f32.mxu0 0.0
      %1704 = vmatmul.mubr.f32.gmra.mrb[0].mxu0 %v1508
      %v1705 = vpop.f32.mrb[0].mxu0
      %v1706 = vadd.f32 0.0, %v1705
      %v1707 = vpop.f32.mrb[0].mxu0
      %1708 = vmatprep.mubr.f32.mxu0 0.0
      %1709 = vmatmul.mubr.f32.gmra.mrb[0].mxu0 %v1511
      %v1710 = vpop.f32.mrb[0].mxu0
      %v1711 = vadd.f32 0.0, %v1710
      %v1712 = vpop.f32.mrb[0].mxu0
      %1713 = vmatprep.mubr.f32.mxu0 0.0
      %1714 = vmatmul.mubr.f32.gmra.mrb[0].mxu0 %v1514
      %v1715 = vpop.f32.mrb[0].mxu0
      %v1716 = vadd.f32 0.0, %v1715
      %v1717 = vpop.f32.mrb[0].mxu0
      %1718 = vmatprep.mubr.f32.mxu0 0.0
      %1719 = vmatmul.mubr.f32.gmra.mrb[0].mxu0 %v1517
      %v1720 = vpop.f32.mrb[0].mxu0
      %v1721 = vadd.f32 0.0, %v1720
      %v1722 = vpop.f32.mrb[0].mxu0
      %1723 = vmatprep.mubr.f32.mxu0 0.0
      %1724 = vmatmul.mubr.f32.gmra.mrb[0].mxu0 %v1520
      %v1725 = vpop.f32.mrb[0].mxu0
      %v1726 = vadd.f32 0.0, %v1725
      %v1727 = vpop.f32.mrb[0].mxu0
      %1728 = vmatprep.mubr.f32.mxu0 0.0
      %1729 = vmatmul.mubr.f32.gmra.mrb[0].mxu0 %v1523
      %v1730 = vpop.f32.mrb[0].mxu0
      %v1731 = vadd.f32 0.0, %v1730
      %v1732 = vpop.f32.mrb[0].mxu0
      %1733 = vmatprep.mubr.f32.mxu0 0.0
      %1734 = vmatmul.mubr.f32.gmra.mrb[0].mxu0 %v1526
      %v1735 = vpop.f32.mrb[0].mxu0
      %v1736 = vadd.f32 0.0, %v1735
      %v1737 = vpop.f32.mrb[0].mxu0
      %1738 = vmatprep.mubr.f32.mxu0 0.0
      %1739 = vmatmul.mubr.f32.gmra.mrb[0].mxu0 %v1529
      %v1740 = vpop.f32.mrb[0].mxu0
      %v1741 = vadd.f32 0.0, %v1740
      %v1742 = vpop.f32.mrb[0].mxu0
      %1743 = vmatprep.mubr.f32.mxu0 0.0
      %1744 = vmatmul.mubr.f32.gmra.mrb[0].mxu0 %v1532
      %v1745 = vpop.f32.mrb[0].mxu0
      %v1746 = vadd.f32 0.0, %v1745
      %v1747 = vpop.f32.mrb[0].mxu0
      %1748 = vmatprep.mubr.f32.mxu0 0.0
      %1749 = vmatmul.mubr.f32.gmra.mrb[0].mxu0 %v1535
      %v1750 = vpop.f32.mrb[0].mxu0
      %v1751 = vadd.f32 0.0, %v1750
      %v1752 = vpop.f32.mrb[0].mxu0
      %1753 = vmatprep.mubr.f32.mxu0 0.0
      %1754 = vmatmul.mubr.f32.gmra.mrb[0].mxu0 %v1538
      %v1755 = vpop.f32.mrb[0].mxu0
      %v1756 = vadd.f32 0.0, %v1755
      %v1757 = vpop.f32.mrb[0].mxu0
      %1758 = vmatprep.mubr.f32.mxu0 0.0
      %1759 = vmatmul.mubr.f32.gmra.mrb[0].mxu0 %v1541
      %v1760 = vpop.f32.mrb[0].mxu0
      %v1761 = vadd.f32 0.0, %v1760
      %v1762 = vpop.f32.mrb[0].mxu0
      %1763 = vmatprep.mubr.f32.mxu0 0.0
      %1764 = vmatmul.mubr.f32.gmra.mrb[0].mxu0 %v1544
      %v1765 = vpop.f32.mrb[0].mxu0
      %v1766 = vadd.f32 0.0, %v1765
      %v1767 = vpop.f32.mrb[0].mxu0
      %1768 = vmatprep.mubr.f32.mxu0 0.0
      %1769 = vmatmul.mubr.f32.gmra.mrb[0].mxu0 %v1547
      %v1770 = vpop.f32.mrb[0].mxu0
      %v1771 = vadd.f32 0.0, %v1770
      %v1772 = vpop.f32.mrb[0].mxu0
      %1773 = vdwg.mxu0
      %v1774 = vmax.f32 %v1263, %v1616
      %v1775 = vmax.f32 %v1268, %v1621
      %v1776 = vmax.f32 %v1273, %v1626
      %v1777 = vmax.f32 %v1278, %v1631
      %v1778 = vmax.f32 %v1283, %v1636
      %v1779 = vmax.f32 %v1288, %v1641
      %v1780 = vmax.f32 %v1293, %v1646
      %v1781 = vmax.f32 %v1298, %v1651
      %v1782 = vmax.f32 %v1303, %v1656
      %v1783 = vmax.f32 %v1308, %v1661
      %v1784 = vmax.f32 %v1313, %v1666
      %v1785 = vmax.f32 %v1318, %v1671
      %v1786 = vmax.f32 %v1323, %v1676
      %v1787 = vmax.f32 %v1328, %v1681
      %v1788 = vmax.f32 %v1333, %v1686
      %v1789 = vmax.f32 %v1338, %v1691
      %v1790 = vmax.f32 %v1343, %v1696
      %v1791 = vmax.f32 %v1348, %v1701
      %v1792 = vmax.f32 %v1353, %v1706
      %v1793 = vmax.f32 %v1358, %v1711
      %v1794 = vmax.f32 %v1363, %v1716
      %v1795 = vmax.f32 %v1368, %v1721
      %v1796 = vmax.f32 %v1373, %v1726
      %v1797 = vmax.f32 %v1378, %v1731
      %v1798 = vmax.f32 %v1383, %v1736
      %v1799 = vmax.f32 %v1388, %v1741
      %v1800 = vmax.f32 %v1393, %v1746
      %v1801 = vmax.f32 %v1398, %v1751
      %v1802 = vmax.f32 %v1403, %v1756
      %v1803 = vmax.f32 %v1408, %v1761
      %v1804 = vmax.f32 %v1413, %v1766
      %v1805 = vmax.f32 %v1418, %v1771
      %v1806 = vmax.f32 %v1036, %v1774
      %v1807 = vmax.f32 %v1037, %v1775
      %v1808 = vmax.f32 %v1038, %v1776
      %v1809 = vmax.f32 %v1039, %v1777
      %v1810 = vmax.f32 %v1040, %v1778
      %v1811 = vmax.f32 %v1041, %v1779
      %v1812 = vmax.f32 %v1042, %v1780
      %v1813 = vmax.f32 %v1043, %v1781
      %v1814 = vmax.f32 %v1044, %v1782
      %v1815 = vmax.f32 %v1045, %v1783
      %v1816 = vmax.f32 %v1046, %v1784
      %v1817 = vmax.f32 %v1047, %v1785
      %v1818 = vmax.f32 %v1048, %v1786
      %v1819 = vmax.f32 %v1049, %v1787
      %v1820 = vmax.f32 %v1050, %v1788
      %v1821 = vmax.f32 %v1051, %v1789
      %v1822 = vmax.f32 %v1052, %v1790
      %v1823 = vmax.f32 %v1053, %v1791
      %v1824 = vmax.f32 %v1054, %v1792
      %v1825 = vmax.f32 %v1055, %v1793
      %v1826 = vmax.f32 %v1056, %v1794
      %v1827 = vmax.f32 %v1057, %v1795
      %v1828 = vmax.f32 %v1058, %v1796
      %v1829 = vmax.f32 %v1059, %v1797
      %v1830 = vmax.f32 %v1060, %v1798
      %v1831 = vmax.f32 %v1061, %v1799
      %v1832 = vmax.f32 %v1062, %v1800
      %v1833 = vmax.f32 %v1063, %v1801
      %v1834 = vmax.f32 %v1064, %v1802
      %v1835 = vmax.f32 %v1065, %v1803
      %v1836 = vmax.f32 %v1066, %v1804
      %v1837 = vmax.f32 %v1067, %v1805
      %v1838 = vld [vmem:[%s5] sm:$0x1]
      %v1840 = vlaneseq
      %v1841 = vshrl.u32 %v1840, 7
      %v1842 = vsub.s32 0, %v1841
      %v1843 = vrot.slane %v1838, %v1842
      %v1845 = vadd.f32 %v1806, %v1843
      %v1846 = vadd.f32 %v1807, %v1843
      %v1847 = vadd.f32 %v1808, %v1843
      %v1848 = vadd.f32 %v1809, %v1843
      %v1849 = vadd.f32 %v1810, %v1843
      %v1850 = vadd.f32 %v1811, %v1843
      %v1851 = vadd.f32 %v1812, %v1843
      %v1852 = vadd.f32 %v1813, %v1843
      %v1853 = vadd.f32 %v1814, %v1843
      %v1854 = vadd.f32 %v1815, %v1843
      %v1855 = vadd.f32 %v1816, %v1843
      %v1856 = vadd.f32 %v1817, %v1843
      %v1857 = vadd.f32 %v1818, %v1843
      %v1858 = vadd.f32 %v1819, %v1843
      %v1859 = vadd.f32 %v1820, %v1843
      %v1860 = vadd.f32 %v1821, %v1843
      %v1861 = vadd.f32 %v1822, %v1843
      %v1862 = vadd.f32 %v1823, %v1843
      %v1863 = vadd.f32 %v1824, %v1843
      %v1864 = vadd.f32 %v1825, %v1843
      %v1865 = vadd.f32 %v1826, %v1843
      %v1866 = vadd.f32 %v1827, %v1843
      %v1867 = vadd.f32 %v1828, %v1843
      %v1868 = vadd.f32 %v1829, %v1843
      %v1869 = vadd.f32 %v1830, %v1843
      %v1870 = vadd.f32 %v1831, %v1843
      %v1871 = vadd.f32 %v1832, %v1843
      %v1872 = vadd.f32 %v1833, %v1843
      %v1873 = vadd.f32 %v1834, %v1843
      %v1874 = vadd.f32 %v1835, %v1843
      %v1875 = vadd.f32 %v1836, %v1843
      %v1876 = vadd.f32 %v1837, %v1843
      %v1877 = vmax.f32 %v1845, 0.0
      %v1878 = vmax.f32 %v1846, 0.0
      %v1879 = vmax.f32 %v1847, 0.0
      %v1880 = vmax.f32 %v1848, 0.0
      %v1881 = vmax.f32 %v1849, 0.0
      %v1882 = vmax.f32 %v1850, 0.0
      %v1883 = vmax.f32 %v1851, 0.0
      %v1884 = vmax.f32 %v1852, 0.0
      %v1885 = vmax.f32 %v1853, 0.0
      %v1886 = vmax.f32 %v1854, 0.0
      %v1887 = vmax.f32 %v1855, 0.0
      %v1888 = vmax.f32 %v1856, 0.0
      %v1889 = vmax.f32 %v1857, 0.0
      %v1890 = vmax.f32 %v1858, 0.0
      %v1891 = vmax.f32 %v1859, 0.0
      %v1892 = vmax.f32 %v1860, 0.0
      %v1893 = vmax.f32 %v1861, 0.0
      %v1894 = vmax.f32 %v1862, 0.0
      %v1895 = vmax.f32 %v1863, 0.0
      %v1896 = vmax.f32 %v1864, 0.0
      %v1897 = vmax.f32 %v1865, 0.0
      %v1898 = vmax.f32 %v1866, 0.0
      %v1899 = vmax.f32 %v1867, 0.0
      %v1900 = vmax.f32 %v1868, 0.0
      %v1901 = vmax.f32 %v1869, 0.0
      %v1902 = vmax.f32 %v1870, 0.0
      %v1903 = vmax.f32 %v1871, 0.0
      %v1904 = vmax.f32 %v1872, 0.0
      %v1905 = vmax.f32 %v1873, 0.0
      %v1906 = vmax.f32 %v1874, 0.0
      %v1907 = vmax.f32 %v1875, 0.0
      %v1908 = vmax.f32 %v1876, 0.0
      %vm1909 = vcmask 261120
      %1910 = vst.msk [vmem:[%s319] sm:$0xff] %vm1909, %v1877
      %1911 = vst.msk [vmem:[%s319 + $0x8] sm:$0xff] %vm1909, %v1878
      %1912 = vst.msk [vmem:[%s319 + $0x10] sm:$0xff] %vm1909, %v1879
      %1913 = vst.msk [vmem:[%s319 + $0x18] sm:$0xff] %vm1909, %v1880
      %1914 = vst.msk [vmem:[%s319 + $0x20] sm:$0xff] %vm1909, %v1881
      %1915 = vst.msk [vmem:[%s319 + $0x28] sm:$0xff] %vm1909, %v1882
      %1916 = vst.msk [vmem:[%s319 + $0x30] sm:$0xff] %vm1909, %v1883
      %1917 = vst.msk [vmem:[%s319 + $0x38] sm:$0xff] %vm1909, %v1884
      %1918 = vst.msk [vmem:[%s319 + $0x40] sm:$0xff] %vm1909, %v1885
      %1919 = vst.msk [vmem:[%s319 + $0x48] sm:$0xff] %vm1909, %v1886
      %1920 = vst.msk [vmem:[%s319 + $0x50] sm:$0xff] %vm1909, %v1887
      %1921 = vst.msk [vmem:[%s319 + $0x58] sm:$0xff] %vm1909, %v1888
      %1922 = vst.msk [vmem:[%s319 + $0x60] sm:$0xff] %vm1909, %v1889
      %1923 = vst.msk [vmem:[%s319 + $0x68] sm:$0xff] %vm1909, %v1890
      %1924 = vst.msk [vmem:[%s319 + $0x70] sm:$0xff] %vm1909, %v1891
      %1925 = vst.msk [vmem:[%s319 + $0x78] sm:$0xff] %vm1909, %v1892
      %1926 = vst.msk [vmem:[%s319 + $0x80] sm:$0xff] %vm1909, %v1893
      %1927 = vst.msk [vmem:[%s319 + $0x88] sm:$0xff] %vm1909, %v1894
      %1928 = vst.msk [vmem:[%s319 + $0x90] sm:$0xff] %vm1909, %v1895
      %1929 = vst.msk [vmem:[%s319 + $0x98] sm:$0xff] %vm1909, %v1896
      %1930 = vst.msk [vmem:[%s319 + $0xa0] sm:$0xff] %vm1909, %v1897
      %1931 = vst.msk [vmem:[%s319 + $0xa8] sm:$0xff] %vm1909, %v1898
      %1932 = vst.msk [vmem:[%s319 + $0xb0] sm:$0xff] %vm1909, %v1899
      %1933 = vst.msk [vmem:[%s319 + $0xb8] sm:$0xff] %vm1909, %v1900
      %1934 = vst.msk [vmem:[%s319 + $0xc0] sm:$0xff] %vm1909, %v1901
      %1935 = vst.msk [vmem:[%s319 + $0xc8] sm:$0xff] %vm1909, %v1902
      %1936 = vst.msk [vmem:[%s319 + $0xd0] sm:$0xff] %vm1909, %v1903
      %1937 = vst.msk [vmem:[%s319 + $0xd8] sm:$0xff] %vm1909, %v1904
      %1938 = vst.msk [vmem:[%s319 + $0xe0] sm:$0xff] %vm1909, %v1905
      %1939 = vst.msk [vmem:[%s319 + $0xe8] sm:$0xff] %vm1909, %v1906
      %1940 = vst.msk [vmem:[%s319 + $0xf0] sm:$0xff] %vm1909, %v1907
      %1941 = vst.msk [vmem:[%s319 + $0xf8] sm:$0xff] %vm1909, %v1908
      %s1942 = smul.u32 32, %s17
      %p1943 = scmp.lt.s32.totalorder %s1942, 63
      %s1944 = scalar_select %p1943, %s1942, 63
      %s1945 = smul.addr %s1944, 8
      %s1946 = scalar_lea.vmem %s6, %s1945
      // Predicated region
      $region45: #{net_forward.3} parent=43 // pred_check
        %p1947 = pneg %p181
      $region46: #{net_forward.3} parent=43 // pred_check_branch
        %1949 = sbr.rel (%p1947) target = $region48
      $region47: #{net_forward.3} parent=43 // pred_region
        %s1950 = smul.u32 32, %s17
      $region48: #{net_forward.3} parent=43 // pred_fallthru
        _
    $region44: #{net_forward.3} parent=5 // pred_fallthru
      _
    %p1951 = scmp.le.s32.totalorder 2, %s12
    // Predicated region
    $region49: #{net_forward.3} parent=5 // pred_check
      %p1952 = pneg %p1951
    $region50: #{net_forward.3} parent=5 // pred_check_branch
      %1954 = sbr.rel (%p1952) target = $region52
    $region51: #{net_forward.3} parent=5 // pred_region
      %s1955 = ssub.s32 %s12, 2
      // Predicated region
      $region53: #{net_forward.3} parent=51 // pred_check
        %p1956 = pneg %p187
      $region54: #{net_forward.3} parent=51 // pred_check_branch
        %1958 = sbr.rel (%p1956) target = $region56
      $region55: #{net_forward.3} parent=51 // pred_region
        %s1959 = smul.u32 32, %s18
        %p1960 = scmp.lt.s32.totalorder %s1959, 63
        %s1961 = scalar_select %p1960, %s1959, 63
        %s1962 = smul.addr %s1961, 8
        %s1963 = scalar_lea.vmem %s6, %s1962
      $region56: #{net_forward.3} parent=51 // pred_fallthru
        _
    $region52: #{net_forward.3} parent=5 // pred_fallthru
      _
  $region6: #{net_forward.3} parent=0 // loop_footer
    %s16 = sadd.s32 1, %s12
  $region7: #{net_forward.3} parent=0 // loop_footer_branch
    %11 = sbr.rel target = $region3
  $region8: #{net_forward.3} parent=0 // loop_exit
    _

// kernel: net_forward.5
$region0: #{net_forward.5}
  #allocation0 [shape = 'u32[]', space=smem, size = 0x4, offset = 0x4, fixed_abs, tag = 'smem constant byte address 0x4 - core index']
  #allocation1 [shape = 'u32[144,128]{1,0:T(1,128)}', space=vmem, size = 0x12000, scoped, tag = 'internal scratch']
  %s0 = inlined_call_operand.vmem [shape: f32[2,1024], index: 0, kind: input, shape index: {}]
  %s1 = inlined_call_operand.vmem [shape: f32[1024,128], index: 1, kind: input, shape index: {}]
  %s2 = inlined_call_operand.vmem [shape: f32[1,128], index: 2, kind: input, shape index: {}]
  %s3 = inlined_call_operand.vmem [shape: f32[128,2], index: 3, kind: input, shape index: {}]
  %s4 = inlined_call_operand.vmem [shape: f32[1,2], index: 4, kind: input, shape index: {}]
  %s5 = inlined_call_operand.hbm [shape: f32[2,2], index: 5, kind: output, shape index: {}]
  %s6 = sld [smem:[#allocation0]]
  $region30: #{net_forward.5} parent=0
    _
  %s8 = ssub.s32 1, %s6
  %s9 = scalar_select 0, %s8, %s6
  $region1: #{net_forward.5} parent=0
    #allocation2 [shape = 'u8[1024]{0}', space=vmem, size = 0x400, scoped, tag = 'output window, operand 0, single buffered']
    #allocation3 [shape = 's32[1]{0}', space=sflag, size = 0x4, scoped, tag = 'scoped memory for net_forward.5']
    %10 = vsyncpa [#allocation3], 0
    // Predicated region
    $region2: #{net_forward.5} parent=1 // pred_check
      _
    $region3: #{net_forward.5} parent=1 // pred_check_branch
      %12 = sbr.rel (0) target = $region5
    $region4: #{net_forward.5} parent=1 // pred_region
      _
    $region5: #{net_forward.5} parent=1 // pred_fallthru
      _
    // Predicated region
    $region6: #{net_forward.5} parent=1 // pred_check
      _
    $region7: #{net_forward.5} parent=1 // pred_check_branch
      %14 = sbr.rel (0) target = $region9
    $region8: #{net_forward.5} parent=1 // pred_region
      _
    $region9: #{net_forward.5} parent=1 // pred_fallthru
      _
    // Predicated region
    $region10: #{net_forward.5} parent=1 // pred_check
      _
    $region11: #{net_forward.5} parent=1 // pred_check_branch
      %16 = sbr.rel (0) target = $region13
    $region12: #{net_forward.5} parent=1 // pred_region
      _
    $region13: #{net_forward.5} parent=1 // pred_fallthru
      _
    // Predicated region
    $region14: #{net_forward.5} parent=1 // pred_check
      _
    $region15: #{net_forward.5} parent=1 // pred_check_branch
      %18 = sbr.rel (0) target = $region17
    $region16: #{net_forward.5} parent=1 // pred_region
      _
    $region17: #{net_forward.5} parent=1 // pred_fallthru
      _
    // Predicated region
    $region18: #{net_forward.5} parent=1 // pred_check
      _
    $region19: #{net_forward.5} parent=1 // pred_check_branch
      %20 = sbr.rel (0) target = $region21
    $region20: #{net_forward.5} parent=1 // pred_region
      _
    $region21: #{net_forward.5} parent=1 // pred_fallthru
      _
    %v21 = vld [vmem:[%s0] sm:$0xff]
    %v22 = vld [vmem:[%s0 + $0x8] sm:$0xff]
    %v23 = vld [vmem:[%s1] sm:$0xff]
    %v24 = vld [vmem:[%s1 + $0x8] sm:$0xff]
    %v25 = vld [vmem:[%s1 + $0x10] sm:$0xff]
    %v26 = vld [vmem:[%s1 + $0x18] sm:$0xff]
    %v27 = vld [vmem:[%s1 + $0x20] sm:$0xff]
    %v28 = vld [vmem:[%s1 + $0x28] sm:$0xff]
    %v29 = vld [vmem:[%s1 + $0x30] sm:$0xff]
    %v30 = vld [vmem:[%s1 + $0x38] sm:$0xff]
    %v31 = vld [vmem:[%s1 + $0x40] sm:$0xff]
    %v32 = vld [vmem:[%s1 + $0x48] sm:$0xff]
    %v33 = vld [vmem:[%s1 + $0x50] sm:$0xff]
    %v34 = vld [vmem:[%s1 + $0x58] sm:$0xff]
    %v35 = vld [vmem:[%s1 + $0x60] sm:$0xff]
    %v36 = vld [vmem:[%s1 + $0x68] sm:$0xff]
    %v37 = vld [vmem:[%s1 + $0x70] sm:$0xff]
    %v38 = vld [vmem:[%s1 + $0x78] sm:$0xff]
    %v39 = vld [vmem:[%s1 + $0x80] sm:$0xff]
    %v40 = vld [vmem:[%s1 + $0x88] sm:$0xff]
    %v41 = vld [vmem:[%s1 + $0x90] sm:$0xff]
    %v42 = vld [vmem:[%s1 + $0x98] sm:$0xff]
    %v43 = vld [vmem:[%s1 + $0xa0] sm:$0xff]
    %v44 = vld [vmem:[%s1 + $0xa8] sm:$0xff]
    %v45 = vld [vmem:[%s1 + $0xb0] sm:$0xff]
    %v46 = vld [vmem:[%s1 + $0xb8] sm:$0xff]
    %v47 = vld [vmem:[%s1 + $0xc0] sm:$0xff]
    %v48 = vld [vmem:[%s1 + $0xc8] sm:$0xff]
    %v49 = vld [vmem:[%s1 + $0xd0] sm:$0xff]
    %v50 = vld [vmem:[%s1 + $0xd8] sm:$0xff]
    %v51 = vld [vmem:[%s1 + $0xe0] sm:$0xff]
    %v52 = vld [vmem:[%s1 + $0xe8] sm:$0xff]
    %v53 = vld [vmem:[%s1 + $0xf0] sm:$0xff]
    %v54 = vld [vmem:[%s1 + $0xf8] sm:$0xff]
    %v55 = vld [vmem:[%s1 + $0x100] sm:$0xff]
    %v56 = vld [vmem:[%s1 + $0x108] sm:$0xff]
    %v57 = vld [vmem:[%s1 + $0x110] sm:$0xff]
    %v58 = vld [vmem:[%s1 + $0x118] sm:$0xff]
    %v59 = vld [vmem:[%s1 + $0x120] sm:$0xff]
    %v60 = vld [vmem:[%s1 + $0x128] sm:$0xff]
    %v61 = vld [vmem:[%s1 + $0x130] sm:$0xff]
    %v62 = vld [vmem:[%s1 + $0x138] sm:$0xff]
    %v63 = vld [vmem:[%s1 + $0x140] sm:$0xff]
    %v64 = vld [vmem:[%s1 + $0x148] sm:$0xff]
    %v65 = vld [vmem:[%s1 + $0x150] sm:$0xff]
    %v66 = vld [vmem:[%s1 + $0x158] sm:$0xff]
    %v67 = vld [vmem:[%s1 + $0x160] sm:$0xff]
    %v68 = vld [vmem:[%s1 + $0x168] sm:$0xff]
    %v69 = vld [vmem:[%s1 + $0x170] sm:$0xff]
    %v70 = vld [vmem:[%s1 + $0x178] sm:$0xff]
    %v71 = vld [vmem:[%s1 + $0x180] sm:$0xff]
    %v72 = vld [vmem:[%s1 + $0x188] sm:$0xff]
    %v73 = vld [vmem:[%s1 + $0x190] sm:$0xff]
    %v74 = vld [vmem:[%s1 + $0x198] sm:$0xff]
    %v75 = vld [vmem:[%s1 + $0x1a0] sm:$0xff]
    %v76 = vld [vmem:[%s1 + $0x1a8] sm:$0xff]
    %v77 = vld [vmem:[%s1 + $0x1b0] sm:$0xff]
    %v78 = vld [vmem:[%s1 + $0x1b8] sm:$0xff]
    %v79 = vld [vmem:[%s1 + $0x1c0] sm:$0xff]
    %v80 = vld [vmem:[%s1 + $0x1c8] sm:$0xff]
    %v81 = vld [vmem:[%s1 + $0x1d0] sm:$0xff]
    %v82 = vld [vmem:[%s1 + $0x1d8] sm:$0xff]
    %v83 = vld [vmem:[%s1 + $0x1e0] sm:$0xff]
    %v84 = vld [vmem:[%s1 + $0x1e8] sm:$0xff]
    %v85 = vld [vmem:[%s1 + $0x1f0] sm:$0xff]
    %v86 = vld [vmem:[%s1 + $0x1f8] sm:$0xff]
    %v87 = vld [vmem:[%s1 + $0x200] sm:$0xff]
    %v88 = vld [vmem:[%s1 + $0x208] sm:$0xff]
    %v89 = vld [vmem:[%s1 + $0x210] sm:$0xff]
    %v90 = vld [vmem:[%s1 + $0x218] sm:$0xff]
    %v91 = vld [vmem:[%s1 + $0x220] sm:$0xff]
    %v92 = vld [vmem:[%s1 + $0x228] sm:$0xff]
    %v93 = vld [vmem:[%s1 + $0x230] sm:$0xff]
    %v94 = vld [vmem:[%s1 + $0x238] sm:$0xff]
    %v95 = vld [vmem:[%s1 + $0x240] sm:$0xff]
    %v96 = vld [vmem:[%s1 + $0x248] sm:$0xff]
    %v97 = vld [vmem:[%s1 + $0x250] sm:$0xff]
    %v98 = vld [vmem:[%s1 + $0x258] sm:$0xff]
    %v99 = vld [vmem:[%s1 + $0x260] sm:$0xff]
    %v100 = vld [vmem:[%s1 + $0x268] sm:$0xff]
    %v101 = vld [vmem:[%s1 + $0x270] sm:$0xff]
    %v102 = vld [vmem:[%s1 + $0x278] sm:$0xff]
    %v103 = vld [vmem:[%s1 + $0x280] sm:$0xff]
    %v104 = vld [vmem:[%s1 + $0x288] sm:$0xff]
    %v105 = vld [vmem:[%s1 + $0x290] sm:$0xff]
    %v106 = vld [vmem:[%s1 + $0x298] sm:$0xff]
    %v107 = vld [vmem:[%s1 + $0x2a0] sm:$0xff]
    %v108 = vld [vmem:[%s1 + $0x2a8] sm:$0xff]
    %v109 = vld [vmem:[%s1 + $0x2b0] sm:$0xff]
    %v110 = vld [vmem:[%s1 + $0x2b8] sm:$0xff]
    %v111 = vld [vmem:[%s1 + $0x2c0] sm:$0xff]
    %v112 = vld [vmem:[%s1 + $0x2c8] sm:$0xff]
    %v113 = vld [vmem:[%s1 + $0x2d0] sm:$0xff]
    %v114 = vld [vmem:[%s1 + $0x2d8] sm:$0xff]
    %v115 = vld [vmem:[%s1 + $0x2e0] sm:$0xff]
    %v116 = vld [vmem:[%s1 + $0x2e8] sm:$0xff]
    %v117 = vld [vmem:[%s1 + $0x2f0] sm:$0xff]
    %v118 = vld [vmem:[%s1 + $0x2f8] sm:$0xff]
    %v119 = vld [vmem:[%s1 + $0x300] sm:$0xff]
    %v120 = vld [vmem:[%s1 + $0x308] sm:$0xff]
    %v121 = vld [vmem:[%s1 + $0x310] sm:$0xff]
    %v122 = vld [vmem:[%s1 + $0x318] sm:$0xff]
    %v123 = vld [vmem:[%s1 + $0x320] sm:$0xff]
    %v124 = vld [vmem:[%s1 + $0x328] sm:$0xff]
    %v125 = vld [vmem:[%s1 + $0x330] sm:$0xff]
    %v126 = vld [vmem:[%s1 + $0x338] sm:$0xff]
    %v127 = vld [vmem:[%s1 + $0x340] sm:$0xff]
    %v128 = vld [vmem:[%s1 + $0x348] sm:$0xff]
    %v129 = vld [vmem:[%s1 + $0x350] sm:$0xff]
    %v130 = vld [vmem:[%s1 + $0x358] sm:$0xff]
    %v131 = vld [vmem:[%s1 + $0x360] sm:$0xff]
    %v132 = vld [vmem:[%s1 + $0x368] sm:$0xff]
    %v133 = vld [vmem:[%s1 + $0x370] sm:$0xff]
    %v134 = vld [vmem:[%s1 + $0x378] sm:$0xff]
    %v135 = vld [vmem:[%s1 + $0x380] sm:$0xff]
    %v136 = vld [vmem:[%s1 + $0x388] sm:$0xff]
    %v137 = vld [vmem:[%s1 + $0x390] sm:$0xff]
    %v138 = vld [vmem:[%s1 + $0x398] sm:$0xff]
    %v139 = vld [vmem:[%s1 + $0x3a0] sm:$0xff]
    %v140 = vld [vmem:[%s1 + $0x3a8] sm:$0xff]
    %v141 = vld [vmem:[%s1 + $0x3b0] sm:$0xff]
    %v142 = vld [vmem:[%s1 + $0x3b8] sm:$0xff]
    %v143 = vld [vmem:[%s1 + $0x3c0] sm:$0xff]
    %v144 = vld [vmem:[%s1 + $0x3c8] sm:$0xff]
    %v145 = vld [vmem:[%s1 + $0x3d0] sm:$0xff]
    %v146 = vld [vmem:[%s1 + $0x3d8] sm:$0xff]
    %v147 = vld [vmem:[%s1 + $0x3e0] sm:$0xff]
    %v148 = vld [vmem:[%s1 + $0x3e8] sm:$0xff]
    %v149 = vld [vmem:[%s1 + $0x3f0] sm:$0xff]
    %v150 = vld [vmem:[%s1 + $0x3f8] sm:$0xff]
    %v151 = vld [vmem:[%s2] sm:$0x1]
    %v153 = vlaneseq
    %v154 = vshrl.u32 %v153, 7
    %v155 = vsub.s32 0, %v154
    %v156 = vrot.slane %v151, %v155
    %v160 = vcombine.high %v21, %v21
    %v162 = vunpack.c.l.s4 1983009808
    %v163 = vunpack.c.0.s8 %v162
    %v164 = vlaneseq
    %v165 = vshrl.u32 %v164, 7
    %v166 = vsub.s32 %v163, %v165
    %v167 = vrot.slane %v21, %v166
    %v169 = vunpack.c.l.s4 1983009808
    %v170 = vunpack.c.0.s8 %v169
    %v171 = vlaneseq
    %v172 = vshrl.u32 %v171, 7
    %v173 = vsub.s32 %v170, %v172
    %v174 = vrot.slane %v160, %v173
    %v175 = vcombine.high %v167, %v167
    %v176 = vcombine.high %v174, %v174
    %v177 = vcombine.high %v22, %v22
    %v179 = vunpack.c.l.s4 1983009808
    %v180 = vunpack.c.0.s8 %v179
    %v181 = vlaneseq
    %v182 = vshrl.u32 %v181, 7
    %v183 = vsub.s32 %v180, %v182
    %v184 = vrot.slane %v22, %v183
    %v186 = vunpack.c.l.s4 1983009808
    %v187 = vunpack.c.0.s8 %v186
    %v188 = vlaneseq
    %v189 = vshrl.u32 %v188, 7
    %v190 = vsub.s32 %v187, %v189
    %v191 = vrot.slane %v177, %v190
    %v192 = vcombine.high %v184, %v184
    %v193 = vcombine.high %v191, %v191
    %202 = vmatprep.subr.mxu0 0.0
    %203 = vmatpush1.msra.mxu0 %v23
    %204 = vmatprep.subr.mxu0 0.0
    %205 = vmatpush1.msra.mxu0 %v24
    %206 = vmatprep.subr.mxu0 0.0
    %207 = vmatpush1.msra.mxu0 %v25
    %208 = vmatprep.subr.mxu0 0.0
    %209 = vmatpush1.msra.mxu0 %v26
    %210 = vmatprep.subr.mxu0 0.0
    %211 = vmatpush1.msra.mxu0 %v27
    %212 = vmatprep.subr.mxu0 0.0
    %213 = vmatpush1.msra.mxu0 %v28
    %214 = vmatprep.subr.mxu0 0.0
    %215 = vmatpush1.msra.mxu0 %v29
    %216 = vmatprep.subr.mxu0 0.0
    %217 = vmatpush1.msra.mxu0 %v30
    %218 = vmatprep.subr.mxu0 0.0
    %219 = vmatpush1.msra.mxu0 %v31
    %220 = vmatprep.subr.mxu0 0.0
    %221 = vmatpush1.msra.mxu0 %v32
    %222 = vmatprep.subr.mxu0 0.0
    %223 = vmatpush1.msra.mxu0 %v33
    %224 = vmatprep.subr.mxu0 0.0
    %225 = vmatpush1.msra.mxu0 %v34
    %226 = vmatprep.subr.mxu0 0.0
    %227 = vmatpush1.msra.mxu0 %v35
    %228 = vmatprep.subr.mxu0 0.0
    %229 = vmatpush1.msra.mxu0 %v36
    %230 = vmatprep.subr.mxu0 0.0
    %231 = vmatpush1.msra.mxu0 %v37
    %232 = vmatprep.subr.mxu0 0.0
    %233 = vmatpush1.msra.mxu0 %v38
    %234 = vmatprep.subr.mxu0 0.0
    %235 = vmatpush1.msra.mxu0 %v39
    %236 = vmatprep.subr.mxu0 0.0
    %237 = vmatpush1.msra.mxu0 %v40
    %238 = vmatprep.subr.mxu0 0.0
    %239 = vmatpush1.msra.mxu0 %v41
    %240 = vmatprep.subr.mxu0 0.0
    %241 = vmatpush1.msra.mxu0 %v42
    %242 = vmatprep.subr.mxu0 0.0
    %243 = vmatpush1.msra.mxu0 %v43
    %244 = vmatprep.subr.mxu0 0.0
    %245 = vmatpush1.msra.mxu0 %v44
    %246 = vmatprep.subr.mxu0 0.0
    %247 = vmatpush1.msra.mxu0 %v45
    %248 = vmatprep.subr.mxu0 0.0
    %249 = vmatpush1.msra.mxu0 %v46
    %250 = vmatprep.subr.mxu0 0.0
    %251 = vmatpush1.msra.mxu0 %v47
    %252 = vmatprep.subr.mxu0 0.0
    %253 = vmatpush1.msra.mxu0 %v48
    %254 = vmatprep.subr.mxu0 0.0
    %255 = vmatpush1.msra.mxu0 %v49
    %256 = vmatprep.subr.mxu0 0.0
    %257 = vmatpush1.msra.mxu0 %v50
    %258 = vmatprep.subr.mxu0 0.0
    %259 = vmatpush1.msra.mxu0 %v51
    %260 = vmatprep.subr.mxu0 0.0
    %261 = vmatpush1.msra.mxu0 %v52
    %262 = vmatprep.subr.mxu0 0.0
    %263 = vmatpush1.msra.mxu0 %v53
    %264 = vmatprep.subr.mxu0 0.0
    %265 = vmatpush1.msra.mxu0 %v54
    %266 = vmatprep.mubr.f32.mxu0 %v175
    %267 = vmatmul.mubr.f32.gmra.mrb[0].mxu0 %v167
    %v268 = vpop.f32.mrb[0].mxu0
    %v269 = vadd.f32 %v156, %v268
    %v270 = vpop.f32.mrb[0].mxu0
    %271 = vdwg.mxu0
    %272 = vmatprep.subr.mxu0 0.0
    %273 = vmatpush1.msra.mxu0 %v55
    %274 = vmatprep.subr.mxu0 0.0
    %275 = vmatpush1.msra.mxu0 %v56
    %276 = vmatprep.subr.mxu0 0.0
    %277 = vmatpush1.msra.mxu0 %v57
    %278 = vmatprep.subr.mxu0 0.0
    %279 = vmatpush1.msra.mxu0 %v58
    %280 = vmatprep.subr.mxu0 0.0
    %281 = vmatpush1.msra.mxu0 %v59
    %282 = vmatprep.subr.mxu0 0.0
    %283 = vmatpush1.msra.mxu0 %v60
    %284 = vmatprep.subr.mxu0 0.0
    %285 = vmatpush1.msra.mxu0 %v61
    %286 = vmatprep.subr.mxu0 0.0
    %287 = vmatpush1.msra.mxu0 %v62
    %288 = vmatprep.subr.mxu0 0.0
    %289 = vmatpush1.msra.mxu0 %v63
    %290 = vmatprep.subr.mxu0 0.0
    %291 = vmatpush1.msra.mxu0 %v64
    %292 = vmatprep.subr.mxu0 0.0
    %293 = vmatpush1.msra.mxu0 %v65
    %294 = vmatprep.subr.mxu0 0.0
    %295 = vmatpush1.msra.mxu0 %v66
    %296 = vmatprep.subr.mxu0 0.0
    %297 = vmatpush1.msra.mxu0 %v67
    %298 = vmatprep.subr.mxu0 0.0
    %299 = vmatpush1.msra.mxu0 %v68
    %300 = vmatprep.subr.mxu0 0.0
    %301 = vmatpush1.msra.mxu0 %v69
    %302 = vmatprep.subr.mxu0 0.0
    %303 = vmatpush1.msra.mxu0 %v70
    %304 = vmatprep.subr.mxu0 0.0
    %305 = vmatpush1.msra.mxu0 %v71
    %306 = vmatprep.subr.mxu0 0.0
    %307 = vmatpush1.msra.mxu0 %v72
    %308 = vmatprep.subr.mxu0 0.0
    %309 = vmatpush1.msra.mxu0 %v73
    %310 = vmatprep.subr.mxu0 0.0
    %311 = vmatpush1.msra.mxu0 %v74
    %312 = vmatprep.subr.mxu0 0.0
    %313 = vmatpush1.msra.mxu0 %v75
    %314 = vmatprep.subr.mxu0 0.0
    %315 = vmatpush1.msra.mxu0 %v76
    %316 = vmatprep.subr.mxu0 0.0
    %317 = vmatpush1.msra.mxu0 %v77
    %318 = vmatprep.subr.mxu0 0.0
    %319 = vmatpush1.msra.mxu0 %v78
    %320 = vmatprep.subr.mxu0 0.0
    %321 = vmatpush1.msra.mxu0 %v79
    %322 = vmatprep.subr.mxu0 0.0
    %323 = vmatpush1.msra.mxu0 %v80
    %324 = vmatprep.subr.mxu0 0.0
    %325 = vmatpush1.msra.mxu0 %v81
    %326 = vmatprep.subr.mxu0 0.0
    %327 = vmatpush1.msra.mxu0 %v82
    %328 = vmatprep.subr.mxu0 0.0
    %329 = vmatpush1.msra.mxu0 %v83
    %330 = vmatprep.subr.mxu0 0.0
    %331 = vmatpush1.msra.mxu0 %v84
    %332 = vmatprep.subr.mxu0 0.0
    %333 = vmatpush1.msra.mxu0 %v85
    %334 = vmatprep.subr.mxu0 0.0
    %335 = vmatpush1.msra.mxu0 %v86
    %336 = vmatprep.mubr.f32.mxu0 %v176
    %337 = vmatmul.mubr.f32.gmra.mrb[0].mxu0 %v174
    %v338 = vpop.f32.mrb[0].mxu0
    %v339 = vadd.f32 %v269, %v338
    %v340 = vpop.f32.mrb[0].mxu0
    %341 = vdwg.mxu0
    %342 = vmatprep.subr.mxu0 0.0
    %343 = vmatpush1.msra.mxu0 %v87
    %344 = vmatprep.subr.mxu0 0.0
    %345 = vmatpush1.msra.mxu0 %v88
    %346 = vmatprep.subr.mxu0 0.0
    %347 = vmatpush1.msra.mxu0 %v89
    %348 = vmatprep.subr.mxu0 0.0
    %349 = vmatpush1.msra.mxu0 %v90
    %350 = vmatprep.subr.mxu0 0.0
    %351 = vmatpush1.msra.mxu0 %v91
    %352 = vmatprep.subr.mxu0 0.0
    %353 = vmatpush1.msra.mxu0 %v92
    %354 = vmatprep.subr.mxu0 0.0
    %355 = vmatpush1.msra.mxu0 %v93
    %356 = vmatprep.subr.mxu0 0.0
    %357 = vmatpush1.msra.mxu0 %v94
    %358 = vmatprep.subr.mxu0 0.0
    %359 = vmatpush1.msra.mxu0 %v95
    %360 = vmatprep.subr.mxu0 0.0
    %361 = vmatpush1.msra.mxu0 %v96
    %362 = vmatprep.subr.mxu0 0.0
    %363 = vmatpush1.msra.mxu0 %v97
    %364 = vmatprep.subr.mxu0 0.0
    %365 = vmatpush1.msra.mxu0 %v98
    %366 = vmatprep.subr.mxu0 0.0
    %367 = vmatpush1.msra.mxu0 %v99
    %368 = vmatprep.subr.mxu0 0.0
    %369 = vmatpush1.msra.mxu0 %v100
    %370 = vmatprep.subr.mxu0 0.0
    %371 = vmatpush1.msra.mxu0 %v101
    %372 = vmatprep.subr.mxu0 0.0
    %373 = vmatpush1.msra.mxu0 %v102
    %374 = vmatprep.subr.mxu0 0.0
    %375 = vmatpush1.msra.mxu0 %v103
    %376 = vmatprep.subr.mxu0 0.0
    %377 = vmatpush1.msra.mxu0 %v104
    %378 = vmatprep.subr.mxu0 0.0
    %379 = vmatpush1.msra.mxu0 %v105
    %380 = vmatprep.subr.mxu0 0.0
    %381 = vmatpush1.msra.mxu0 %v106
    %382 = vmatprep.subr.mxu0 0.0
    %383 = vmatpush1.msra.mxu0 %v107
    %384 = vmatprep.subr.mxu0 0.0
    %385 = vmatpush1.msra.mxu0 %v108
    %386 = vmatprep.subr.mxu0 0.0
    %387 = vmatpush1.msra.mxu0 %v109
    %388 = vmatprep.subr.mxu0 0.0
    %389 = vmatpush1.msra.mxu0 %v110
    %390 = vmatprep.subr.mxu0 0.0
    %391 = vmatpush1.msra.mxu0 %v111
    %392 = vmatprep.subr.mxu0 0.0
    %393 = vmatpush1.msra.mxu0 %v112
    %394 = vmatprep.subr.mxu0 0.0
    %395 = vmatpush1.msra.mxu0 %v113
    %396 = vmatprep.subr.mxu0 0.0
    %397 = vmatpush1.msra.mxu0 %v114
    %398 = vmatprep.subr.mxu0 0.0
    %399 = vmatpush1.msra.mxu0 %v115
    %400 = vmatprep.subr.mxu0 0.0
    %401 = vmatpush1.msra.mxu0 %v116
    %402 = vmatprep.subr.mxu0 0.0
    %403 = vmatpush1.msra.mxu0 %v117
    %404 = vmatprep.subr.mxu0 0.0
    %405 = vmatpush1.msra.mxu0 %v118
    %406 = vmatprep.mubr.f32.mxu0 %v192
    %407 = vmatmul.mubr.f32.gmra.mrb[0].mxu0 %v184
    %v408 = vpop.f32.mrb[0].mxu0
    %v409 = vadd.f32 %v339, %v408
    %v410 = vpop.f32.mrb[0].mxu0
    %411 = vdwg.mxu0
    %412 = vmatprep.subr.mxu0 0.0
    %413 = vmatpush1.msra.mxu0 %v119
    %414 = vmatprep.subr.mxu0 0.0
    %415 = vmatpush1.msra.mxu0 %v120
    %416 = vmatprep.subr.mxu0 0.0
    %417 = vmatpush1.msra.mxu0 %v121
    %418 = vmatprep.subr.mxu0 0.0
    %419 = vmatpush1.msra.mxu0 %v122
    %420 = vmatprep.subr.mxu0 0.0
    %421 = vmatpush1.msra.mxu0 %v123
    %422 = vmatprep.subr.mxu0 0.0
    %423 = vmatpush1.msra.mxu0 %v124
    %424 = vmatprep.subr.mxu0 0.0
    %425 = vmatpush1.msra.mxu0 %v125
    %426 = vmatprep.subr.mxu0 0.0
    %427 = vmatpush1.msra.mxu0 %v126
    %428 = vmatprep.subr.mxu0 0.0
    %429 = vmatpush1.msra.mxu0 %v127
    %430 = vmatprep.subr.mxu0 0.0
    %431 = vmatpush1.msra.mxu0 %v128
    %432 = vmatprep.subr.mxu0 0.0
    %433 = vmatpush1.msra.mxu0 %v129
    %434 = vmatprep.subr.mxu0 0.0
    %435 = vmatpush1.msra.mxu0 %v130
    %436 = vmatprep.subr.mxu0 0.0
    %437 = vmatpush1.msra.mxu0 %v131
    %438 = vmatprep.subr.mxu0 0.0
    %439 = vmatpush1.msra.mxu0 %v132
    %440 = vmatprep.subr.mxu0 0.0
    %441 = vmatpush1.msra.mxu0 %v133
    %442 = vmatprep.subr.mxu0 0.0
    %443 = vmatpush1.msra.mxu0 %v134
    %444 = vmatprep.subr.mxu0 0.0
    %445 = vmatpush1.msra.mxu0 %v135
    %446 = vmatprep.subr.mxu0 0.0
    %447 = vmatpush1.msra.mxu0 %v136
    %448 = vmatprep.subr.mxu0 0.0
    %449 = vmatpush1.msra.mxu0 %v137
    %450 = vmatprep.subr.mxu0 0.0
    %451 = vmatpush1.msra.mxu0 %v138
    %452 = vmatprep.subr.mxu0 0.0
    %453 = vmatpush1.msra.mxu0 %v139
    %454 = vmatprep.subr.mxu0 0.0
    %455 = vmatpush1.msra.mxu0 %v140
    %456 = vmatprep.subr.mxu0 0.0
    %457 = vmatpush1.msra.mxu0 %v141
    %458 = vmatprep.subr.mxu0 0.0
    %459 = vmatpush1.msra.mxu0 %v142
    %460 = vmatprep.subr.mxu0 0.0
    %461 = vmatpush1.msra.mxu0 %v143
    %462 = vmatprep.subr.mxu0 0.0
    %463 = vmatpush1.msra.mxu0 %v144
    %464 = vmatprep.subr.mxu0 0.0
    %465 = vmatpush1.msra.mxu0 %v145
    %466 = vmatprep.subr.mxu0 0.0
    %467 = vmatpush1.msra.mxu0 %v146
    %468 = vmatprep.subr.mxu0 0.0
    %469 = vmatpush1.msra.mxu0 %v147
    %470 = vmatprep.subr.mxu0 0.0
    %471 = vmatpush1.msra.mxu0 %v148
    %472 = vmatprep.subr.mxu0 0.0
    %473 = vmatpush1.msra.mxu0 %v149
    %474 = vmatprep.subr.mxu0 0.0
    %475 = vmatpush1.msra.mxu0 %v150
    %476 = vmatprep.mubr.f32.mxu0 %v193
    %477 = vmatmul.mubr.f32.gmra.mrb[0].mxu0 %v191
    %v478 = vpop.f32.mrb[0].mxu0
    %v479 = vadd.f32 %v409, %v478
    %v480 = vpop.f32.mrb[0].mxu0
    %481 = vdwg.mxu0
    %v482 = vmax.f32 %v479, 0.0
    %v483 = vld [vmem:[%s3] sm:$0xff]
    %v484 = vld [vmem:[%s3 + $0x8] sm:$0xff]
    %v485 = vld [vmem:[%s3 + $0x10] sm:$0xff]
    %v486 = vld [vmem:[%s3 + $0x18] sm:$0xff]
    %v487 = vld [vmem:[%s3 + $0x20] sm:$0xff]
    %v488 = vld [vmem:[%s3 + $0x28] sm:$0xff]
    %v489 = vld [vmem:[%s3 + $0x30] sm:$0xff]
    %v490 = vld [vmem:[%s3 + $0x38] sm:$0xff]
    %v491 = vld [vmem:[%s3 + $0x40] sm:$0xff]
    %v492 = vld [vmem:[%s3 + $0x48] sm:$0xff]
    %v493 = vld [vmem:[%s3 + $0x50] sm:$0xff]
    %v494 = vld [vmem:[%s3 + $0x58] sm:$0xff]
    %v495 = vld [vmem:[%s3 + $0x60] sm:$0xff]
    %v496 = vld [vmem:[%s3 + $0x68] sm:$0xff]
    %v497 = vld [vmem:[%s3 + $0x70] sm:$0xff]
    %v498 = vld [vmem:[%s3 + $0x78] sm:$0xff]
    %v499 = vld [vmem:[%s4] sm:$0x1]
    %v501 = vlaneseq
    %v502 = vshrl.u32 %v501, 7
    %v503 = vsub.s32 0, %v502
    %v504 = vrot.slane %v499, %v503
    %506 = vmatprep.subr.mxu0 0.0
    %507 = vmatpush1.msra.mxu0 %v483
    %508 = vmatprep.subr.mxu0 0.0
    %509 = vmatpush1.msra.mxu0 %v484
    %510 = vmatprep.subr.mxu0 0.0
    %511 = vmatpush1.msra.mxu0 %v485
    %512 = vmatprep.subr.mxu0 0.0
    %513 = vmatpush1.msra.mxu0 %v486
    %514 = vmatprep.subr.mxu0 0.0
    %515 = vmatpush1.msra.mxu0 %v487
    %516 = vmatprep.subr.mxu0 0.0
    %517 = vmatpush1.msra.mxu0 %v488
    %518 = vmatprep.subr.mxu0 0.0
    %519 = vmatpush1.msra.mxu0 %v489
    %520 = vmatprep.subr.mxu0 0.0
    %521 = vmatpush1.msra.mxu0 %v490
    %522 = vmatprep.subr.mxu0 0.0
    %523 = vmatpush1.msra.mxu0 %v491
    %524 = vmatprep.subr.mxu0 0.0
    %525 = vmatpush1.msra.mxu0 %v492
    %526 = vmatprep.subr.mxu0 0.0
    %527 = vmatpush1.msra.mxu0 %v493
    %528 = vmatprep.subr.mxu0 0.0
    %529 = vmatpush1.msra.mxu0 %v494
    %530 = vmatprep.subr.mxu0 0.0
    %531 = vmatpush1.msra.mxu0 %v495
    %532 = vmatprep.subr.mxu0 0.0
    %533 = vmatpush1.msra.mxu0 %v496
    %534 = vmatprep.subr.mxu0 0.0
    %535 = vmatpush1.msra.mxu0 %v497
    %536 = vmatprep.subr.mxu0 0.0
    %537 = vmatpush1.msra.mxu0 %v498
    %538 = vmatprep.subr.mxu0 0.0
    %539 = vmatpush1.msra.mxu0 0.0
    %540 = vmatprep.subr.mxu0 0.0
    %541 = vmatpush1.msra.mxu0 0.0
    %542 = vmatprep.subr.mxu0 0.0
    %543 = vmatpush1.msra.mxu0 0.0
    %544 = vmatprep.subr.mxu0 0.0
    %545 = vmatpush1.msra.mxu0 0.0
    %546 = vmatprep.subr.mxu0 0.0
    %547 = vmatpush1.msra.mxu0 0.0
    %548 = vmatprep.subr.mxu0 0.0
    %549 = vmatpush1.msra.mxu0 0.0
    %550 = vmatprep.subr.mxu0 0.0
    %551 = vmatpush1.msra.mxu0 0.0
    %552 = vmatprep.subr.mxu0 0.0
    %553 = vmatpush1.msra.mxu0 0.0
    %554 = vmatprep.subr.mxu0 0.0
    %555 = vmatpush1.msra.mxu0 0.0
    %556 = vmatprep.subr.mxu0 0.0
    %557 = vmatpush1.msra.mxu0 0.0
    %558 = vmatprep.subr.mxu0 0.0
    %559 = vmatpush1.msra.mxu0 0.0
    %560 = vmatprep.subr.mxu0 0.0
    %561 = vmatpush1.msra.mxu0 0.0
    %562 = vmatprep.subr.mxu0 0.0
    %563 = vmatpush1.msra.mxu0 0.0
    %564 = vmatprep.subr.mxu0 0.0
    %565 = vmatpush1.msra.mxu0 0.0
    %566 = vmatprep.subr.mxu0 0.0
    %567 = vmatpush1.msra.mxu0 0.0
    %568 = vmatprep.subr.mxu0 0.0
    %569 = vmatpush1.msra.mxu0 0.0
    %570 = vmatprep.mubr.f32.mxu0 0.0
    %571 = vmatmul.mubr.f32.gmra.mrb[0].mxu0 %v482
    %v572 = vpop.f32.mrb[0].mxu0
    %v573 = vadd.f32 %v504, %v572
    %v574 = vpop.f32.mrb[0].mxu0
    %575 = vdwg.mxu0
    %vm576 = vcmask 9216
    %v577 = vsel %vm576, %v573, -inf
    %578 = vmax.xlane.f32.xlu0 %v577
    %v579 = vpop.xlane.xlu0 %578
    %v580 = vsub.f32 %v573, %v579
    %v581 = vmul.f32 %v580, 1.442695
    %v582 = vpow.pop %v581
    %v583 = vsel %vm576, %v582, 0.0
    %584 = vadd.xlane.f32.xlu0 %v583
    %v585 = vpop.xlane.xlu0 %584
    %v586 = vrcp.pop %v585
    %v587 = vmul.f32 %v582, %v586
    %588 = vst.msk [vmem:[#allocation2] sm:$0x3] %vm576, %v587
    // Predicated region
    $region22: #{net_forward.5} parent=1 // pred_check
      _
    $region23: #{net_forward.5} parent=1 // pred_check_branch
      %590 = sbr.rel (0) target = $region25
    $region24: #{net_forward.5} parent=1 // pred_region
      %s592 = ssub.s32 32, 32
      %593 = vsyncadd [#allocation3], %s592
      %s595 = sshll.u32 [#allocation2], 4
      %s596 = int_to_ptr.vmem [resolvable:$true] %s595
      %598 = dma.vmem_to_hbm [thread:$0]  %s596, 32, %s5, [#allocation3]
    $region25: #{net_forward.5} parent=1 // pred_fallthru
      _
    // Predicated region
    $region26: #{net_forward.5} parent=1 // pred_check
      _
    $region27: #{net_forward.5} parent=1 // pred_check_branch
      %600 = sbr.rel (0) target = $region29
    $region28: #{net_forward.5} parent=1 // pred_region
      %601 = dma.done [#allocation3], 32
    $region29: #{net_forward.5} parent=1 // pred_fallthru
      _
    %602 = vsyncpa [#allocation3], 1

// kernel: net_forward.4
$region0: #{net_forward.4}
  #allocation0 [shape = 'u32[]', space=smem, size = 0x4, offset = 0x4, fixed_abs, tag = 'smem constant byte address 0x4 - core index']
  #allocation1 [shape = 'u32[144,128]{1,0:T(1,128)}', space=vmem, size = 0x12000, scoped, tag = 'internal scratch']
  %s0 = inlined_call_operand.vmem [shape: f32[32,800], index: 0, kind: input, shape index: {}]
  %s1 = inlined_call_operand.vmem [shape: f32[32,800], index: 1, kind: input, shape index: {}]
  %s2 = inlined_call_operand.vmem [shape: f32[32,800], index: 2, kind: input, shape index: {}]
  %s3 = inlined_call_operand.vmem [shape: f32[32,800], index: 3, kind: input, shape index: {}]
  %s4 = inlined_call_operand.vmem [shape: f32[800,64], index: 4, kind: input, shape index: {}]
  %s5 = inlined_call_operand.vmem [shape: f32[1,64], index: 5, kind: input, shape index: {}]
  %s6 = inlined_call_operand.vmem [shape: f32[32,64], index: 6, kind: output, shape index: {}]
  %s7 = sld [smem:[#allocation0]]
  $region34: #{net_forward.4} parent=0
    _
  %s9 = ssub.s32 1, %s7
  %s10 = scalar_select 0, %s9, %s7
  // Predicated region
  $region2: #{net_forward.4} parent=0 // pred_check
    _
  $region3: #{net_forward.4} parent=0 // pred_check_branch
    %12 = sbr.rel (0) target = $region5
  $region4: #{net_forward.4} parent=0 // pred_region
    _
  $region5: #{net_forward.4} parent=0 // pred_fallthru
    _
  // Predicated region
  $region6: #{net_forward.4} parent=0 // pred_check
    _
  $region7: #{net_forward.4} parent=0 // pred_check_branch
    %14 = sbr.rel (0) target = $region9
  $region8: #{net_forward.4} parent=0 // pred_region
    _
  $region9: #{net_forward.4} parent=0 // pred_fallthru
    _
  // Predicated region
  $region10: #{net_forward.4} parent=0 // pred_check
    _
  $region11: #{net_forward.4} parent=0 // pred_check_branch
    %16 = sbr.rel (0) target = $region13
  $region12: #{net_forward.4} parent=0 // pred_region
    _
  $region13: #{net_forward.4} parent=0 // pred_fallthru
    _
  // Predicated region
  $region14: #{net_forward.4} parent=0 // pred_check
    _
  $region15: #{net_forward.4} parent=0 // pred_check_branch
    %18 = sbr.rel (0) target = $region17
  $region16: #{net_forward.4} parent=0 // pred_region
    _
  $region17: #{net_forward.4} parent=0 // pred_fallthru
    _
  // Predicated region
  $region18: #{net_forward.4} parent=0 // pred_check
    _
  $region19: #{net_forward.4} parent=0 // pred_check_branch
    %20 = sbr.rel (0) target = $region21
  $region20: #{net_forward.4} parent=0 // pred_region
    _
  $region21: #{net_forward.4} parent=0 // pred_fallthru
    _
  // Predicated region
  $region22: #{net_forward.4} parent=0 // pred_check
    _
  $region23: #{net_forward.4} parent=0 // pred_check_branch
    %22 = sbr.rel (0) target = $region25
  $region24: #{net_forward.4} parent=0 // pred_region
    _
  $region25: #{net_forward.4} parent=0 // pred_fallthru
    _
  %v23 = vld [vmem:[%s4] sm:$0xff]
  %v24 = vld [vmem:[%s4 + $0x8] sm:$0xff]
  %v25 = vld [vmem:[%s4 + $0x10] sm:$0xff]
  %v26 = vld [vmem:[%s4 + $0x18] sm:$0xff]
  %v27 = vld [vmem:[%s4 + $0x20] sm:$0xff]
  %v28 = vld [vmem:[%s4 + $0x28] sm:$0xff]
  %v29 = vld [vmem:[%s4 + $0x30] sm:$0xff]
  %v30 = vld [vmem:[%s4 + $0x38] sm:$0xff]
  %v31 = vld [vmem:[%s4 + $0x40] sm:$0xff]
  %v32 = vld [vmem:[%s4 + $0x48] sm:$0xff]
  %v33 = vld [vmem:[%s4 + $0x50] sm:$0xff]
  %v34 = vld [vmem:[%s4 + $0x58] sm:$0xff]
  %v35 = vld [vmem:[%s4 + $0x60] sm:$0xff]
  %v36 = vld [vmem:[%s4 + $0x68] sm:$0xff]
  %v37 = vld [vmem:[%s4 + $0x70] sm:$0xff]
  %v38 = vld [vmem:[%s4 + $0x78] sm:$0xff]
  %v39 = vld [vmem:[%s4 + $0x80] sm:$0xff]
  %v40 = vld [vmem:[%s4 + $0x88] sm:$0xff]
  %v41 = vld [vmem:[%s4 + $0x90] sm:$0xff]
  %v42 = vld [vmem:[%s4 + $0x98] sm:$0xff]
  %v43 = vld [vmem:[%s4 + $0xa0] sm:$0xff]
  %v44 = vld [vmem:[%s4 + $0xa8] sm:$0xff]
  %v45 = vld [vmem:[%s4 + $0xb0] sm:$0xff]
  %v46 = vld [vmem:[%s4 + $0xb8] sm:$0xff]
  %v47 = vld [vmem:[%s4 + $0xc0] sm:$0xff]
  %v48 = vld [vmem:[%s4 + $0xc8] sm:$0xff]
  %v49 = vld [vmem:[%s4 + $0xd0] sm:$0xff]
  %v50 = vld [vmem:[%s4 + $0xd8] sm:$0xff]
  %v51 = vld [vmem:[%s4 + $0xe0] sm:$0xff]
  %v52 = vld [vmem:[%s4 + $0xe8] sm:$0xff]
  %v53 = vld [vmem:[%s4 + $0xf0] sm:$0xff]
  %v54 = vld [vmem:[%s4 + $0xf8] sm:$0xff]
  %v55 = vld [vmem:[%s4 + $0x100] sm:$0xff]
  %v56 = vld [vmem:[%s4 + $0x108] sm:$0xff]
  %v57 = vld [vmem:[%s4 + $0x110] sm:$0xff]
  %v58 = vld [vmem:[%s4 + $0x118] sm:$0xff]
  %v59 = vld [vmem:[%s4 + $0x120] sm:$0xff]
  %v60 = vld [vmem:[%s4 + $0x128] sm:$0xff]
  %v61 = vld [vmem:[%s4 + $0x130] sm:$0xff]
  %v62 = vld [vmem:[%s4 + $0x138] sm:$0xff]
  %v63 = vld [vmem:[%s4 + $0x140] sm:$0xff]
  %v64 = vld [vmem:[%s4 + $0x148] sm:$0xff]
  %v65 = vld [vmem:[%s4 + $0x150] sm:$0xff]
  %v66 = vld [vmem:[%s4 + $0x158] sm:$0xff]
  %v67 = vld [vmem:[%s4 + $0x160] sm:$0xff]
  %v68 = vld [vmem:[%s4 + $0x168] sm:$0xff]
  %v69 = vld [vmem:[%s4 + $0x170] sm:$0xff]
  %v70 = vld [vmem:[%s4 + $0x178] sm:$0xff]
  %v71 = vld [vmem:[%s4 + $0x180] sm:$0xff]
  %v72 = vld [vmem:[%s4 + $0x188] sm:$0xff]
  %v73 = vld [vmem:[%s4 + $0x190] sm:$0xff]
  %v74 = vld [vmem:[%s4 + $0x198] sm:$0xff]
  %v75 = vld [vmem:[%s4 + $0x1a0] sm:$0xff]
  %v76 = vld [vmem:[%s4 + $0x1a8] sm:$0xff]
  %v77 = vld [vmem:[%s4 + $0x1b0] sm:$0xff]
  %v78 = vld [vmem:[%s4 + $0x1b8] sm:$0xff]
  %v79 = vld [vmem:[%s4 + $0x1c0] sm:$0xff]
  %v80 = vld [vmem:[%s4 + $0x1c8] sm:$0xff]
  %v81 = vld [vmem:[%s4 + $0x1d0] sm:$0xff]
  %v82 = vld [vmem:[%s4 + $0x1d8] sm:$0xff]
  %v83 = vld [vmem:[%s4 + $0x1e0] sm:$0xff]
  %v84 = vld [vmem:[%s4 + $0x1e8] sm:$0xff]
  %v85 = vld [vmem:[%s4 + $0x1f0] sm:$0xff]
  %v86 = vld [vmem:[%s4 + $0x1f8] sm:$0xff]
  %v87 = vld [vmem:[%s4 + $0x200] sm:$0xff]
  %v88 = vld [vmem:[%s4 + $0x208] sm:$0xff]
  %v89 = vld [vmem:[%s4 + $0x210] sm:$0xff]
  %v90 = vld [vmem:[%s4 + $0x218] sm:$0xff]
  %v91 = vld [vmem:[%s4 + $0x220] sm:$0xff]
  %v92 = vld [vmem:[%s4 + $0x228] sm:$0xff]
  %v93 = vld [vmem:[%s4 + $0x230] sm:$0xff]
  %v94 = vld [vmem:[%s4 + $0x238] sm:$0xff]
  %v95 = vld [vmem:[%s4 + $0x240] sm:$0xff]
  %v96 = vld [vmem:[%s4 + $0x248] sm:$0xff]
  %v97 = vld [vmem:[%s4 + $0x250] sm:$0xff]
  %v98 = vld [vmem:[%s4 + $0x258] sm:$0xff]
  %v99 = vld [vmem:[%s4 + $0x260] sm:$0xff]
  %v100 = vld [vmem:[%s4 + $0x268] sm:$0xff]
  %v101 = vld [vmem:[%s4 + $0x270] sm:$0xff]
  %v102 = vld [vmem:[%s4 + $0x278] sm:$0xff]
  %v103 = vld [vmem:[%s4 + $0x280] sm:$0xff]
  %v104 = vld [vmem:[%s4 + $0x288] sm:$0xff]
  %v105 = vld [vmem:[%s4 + $0x290] sm:$0xff]
  %v106 = vld [vmem:[%s4 + $0x298] sm:$0xff]
  %v107 = vld [vmem:[%s4 + $0x2a0] sm:$0xff]
  %v108 = vld [vmem:[%s4 + $0x2a8] sm:$0xff]
  %v109 = vld [vmem:[%s4 + $0x2b0] sm:$0xff]
  %v110 = vld [vmem:[%s4 + $0x2b8] sm:$0xff]
  %v111 = vld [vmem:[%s4 + $0x2c0] sm:$0xff]
  %v112 = vld [vmem:[%s4 + $0x2c8] sm:$0xff]
  %v113 = vld [vmem:[%s4 + $0x2d0] sm:$0xff]
  %v114 = vld [vmem:[%s4 + $0x2d8] sm:$0xff]
  %v115 = vld [vmem:[%s4 + $0x2e0] sm:$0xff]
  %v116 = vld [vmem:[%s4 + $0x2e8] sm:$0xff]
  %v117 = vld [vmem:[%s4 + $0x2f0] sm:$0xff]
  %v118 = vld [vmem:[%s4 + $0x2f8] sm:$0xff]
  %v119 = vld [vmem:[%s4 + $0x300] sm:$0xff]
  %v120 = vld [vmem:[%s4 + $0x308] sm:$0xff]
  %v121 = vld [vmem:[%s4 + $0x310] sm:$0xff]
  %v122 = vld [vmem:[%s4 + $0x318] sm:$0xff]
  %v123 = vld [vmem:[%s0] sm:$0xff]
  %v124 = vld [vmem:[%s0 + $0x8] sm:$0xff]
  %v125 = vld [vmem:[%s0 + $0x10] sm:$0xff]
  %v126 = vld [vmem:[%s0 + $0x18] sm:$0xff]
  %v127 = vld [vmem:[%s0 + $0x20] sm:$0xff]
  %v128 = vld [vmem:[%s0 + $0x28] sm:$0xff]
  %v129 = vld [vmem:[%s0 + $0x30] sm:$0xff]
  %v130 = vld [vmem:[%s0 + $0x38] sm:$0xff]
  %v131 = vld [vmem:[%s0 + $0x40] sm:$0xff]
  %v132 = vld [vmem:[%s0 + $0x48] sm:$0xff]
  %v133 = vld [vmem:[%s0 + $0x50] sm:$0xff]
  %v134 = vld [vmem:[%s0 + $0x58] sm:$0xff]
  %v135 = vld [vmem:[%s0 + $0x60] sm:$0xff]
  %v136 = vld [vmem:[%s0 + $0x68] sm:$0xff]
  %v137 = vld [vmem:[%s0 + $0x70] sm:$0xff]
  %v138 = vld [vmem:[%s0 + $0x78] sm:$0xff]
  %v139 = vld [vmem:[%s0 + $0x80] sm:$0xff]
  %v140 = vld [vmem:[%s0 + $0x88] sm:$0xff]
  %v141 = vld [vmem:[%s0 + $0x90] sm:$0xff]
  %v142 = vld [vmem:[%s0 + $0x98] sm:$0xff]
  %v143 = vld [vmem:[%s0 + $0xa0] sm:$0xff]
  %v144 = vld [vmem:[%s0 + $0xa8] sm:$0xff]
  %v145 = vld [vmem:[%s0 + $0xb0] sm:$0xff]
  %v146 = vld [vmem:[%s0 + $0xb8] sm:$0xff]
  %v147 = vld [vmem:[%s0 + $0xc0] sm:$0xff]
  %v148 = vld [vmem:[%s0 + $0xc8] sm:$0xff]
  %v149 = vld [vmem:[%s0 + $0xd0] sm:$0xff]
  %v150 = vld [vmem:[%s0 + $0xd8] sm:$0xff]
  %vm151 = vcmask 261120
  %v153 = vsel %vm151, %v129, 0
  %v156 = vsel %vm151, %v136, 0
  %v159 = vsel %vm151, %v143, 0
  %v162 = vsel %vm151, %v150, 0
  %164 = vmatprep.subr.mxu0 0.0
  %165 = vmatpush1.msra.mxu0 %v23
  %166 = vmatprep.subr.mxu0 0.0
  %167 = vmatpush1.msra.mxu0 %v24
  %168 = vmatprep.subr.mxu0 0.0
  %169 = vmatpush1.msra.mxu0 %v25
  %170 = vmatprep.subr.mxu0 0.0
  %171 = vmatpush1.msra.mxu0 %v26
  %172 = vmatprep.subr.mxu0 0.0
  %173 = vmatpush1.msra.mxu0 %v27
  %174 = vmatprep.subr.mxu0 0.0
  %175 = vmatpush1.msra.mxu0 %v28
  %176 = vmatprep.subr.mxu0 0.0
  %177 = vmatpush1.msra.mxu0 %v29
  %178 = vmatprep.subr.mxu0 0.0
  %179 = vmatpush1.msra.mxu0 %v30
  %180 = vmatprep.subr.mxu0 0.0
  %181 = vmatpush1.msra.mxu0 %v31
  %182 = vmatprep.subr.mxu0 0.0
  %183 = vmatpush1.msra.mxu0 %v32
  %184 = vmatprep.subr.mxu0 0.0
  %185 = vmatpush1.msra.mxu0 %v33
  %186 = vmatprep.subr.mxu0 0.0
  %187 = vmatpush1.msra.mxu0 %v34
  %188 = vmatprep.subr.mxu0 0.0
  %189 = vmatpush1.msra.mxu0 %v35
  %190 = vmatprep.subr.mxu0 0.0
  %191 = vmatpush1.msra.mxu0 %v36
  %192 = vmatprep.subr.mxu0 0.0
  %193 = vmatpush1.msra.mxu0 %v37
  %194 = vmatprep.subr.mxu0 0.0
  %195 = vmatpush1.msra.mxu0 %v38
  %196 = vmatprep.subr.mxu0 0.0
  %197 = vmatpush1.msra.mxu0 %v39
  %198 = vmatprep.subr.mxu0 0.0
  %199 = vmatpush1.msra.mxu0 %v40
  %200 = vmatprep.subr.mxu0 0.0
  %201 = vmatpush1.msra.mxu0 %v41
  %202 = vmatprep.subr.mxu0 0.0
  %203 = vmatpush1.msra.mxu0 %v42
  %204 = vmatprep.subr.mxu0 0.0
  %205 = vmatpush1.msra.mxu0 %v43
  %206 = vmatprep.subr.mxu0 0.0
  %207 = vmatpush1.msra.mxu0 %v44
  %208 = vmatprep.subr.mxu0 0.0
  %209 = vmatpush1.msra.mxu0 %v45
  %210 = vmatprep.subr.mxu0 0.0
  %211 = vmatpush1.msra.mxu0 %v46
  %212 = vmatprep.subr.mxu0 0.0
  %213 = vmatpush1.msra.mxu0 %v47
  %214 = vmatprep.subr.mxu0 0.0
  %215 = vmatpush1.msra.mxu0 %v48
  %216 = vmatprep.subr.mxu0 0.0
  %217 = vmatpush1.msra.mxu0 %v49
  %218 = vmatprep.subr.mxu0 0.0
  %219 = vmatpush1.msra.mxu0 %v50
  %220 = vmatprep.subr.mxu0 0.0
  %221 = vmatpush1.msra.mxu0 %v51
  %222 = vmatprep.subr.mxu0 0.0
  %223 = vmatpush1.msra.mxu0 %v52
  %224 = vmatprep.subr.mxu0 0.0
  %225 = vmatpush1.msra.mxu0 %v53
  %226 = vmatprep.subr.mxu0 0.0
  %227 = vmatpush1.msra.mxu0 %v54
  %228 = vmatprep.mubr.f32.mxu0 %v124
  %229 = vmatmul.mubr.f32.gmra.mrb[0].mxu0 %v123
  %v230 = vpop.f32.mrb[0].mxu0
  %v231 = vadd.f32 0.0, %v230
  %v232 = vpop.f32.mrb[0].mxu0
  %233 = vmatprep.mubr.f32.mxu0 %v131
  %234 = vmatmul.mubr.f32.gmra.mrb[0].mxu0 %v130
  %v235 = vpop.f32.mrb[0].mxu0
  %v236 = vadd.f32 0.0, %v235
  %v237 = vpop.f32.mrb[0].mxu0
  %238 = vmatprep.mubr.f32.mxu0 %v138
  %239 = vmatmul.mubr.f32.gmra.mrb[0].mxu0 %v137
  %v240 = vpop.f32.mrb[0].mxu0
  %v241 = vadd.f32 0.0, %v240
  %v242 = vpop.f32.mrb[0].mxu0
  %243 = vmatprep.mubr.f32.mxu0 %v145
  %244 = vmatmul.mubr.f32.gmra.mrb[0].mxu0 %v144
  %v245 = vpop.f32.mrb[0].mxu0
  %v246 = vadd.f32 0.0, %v245
  %v247 = vpop.f32.mrb[0].mxu0
  %248 = vdwg.mxu0
  %249 = vmatprep.subr.mxu0 0.0
  %250 = vmatpush1.msra.mxu0 %v55
  %251 = vmatprep.subr.mxu0 0.0
  %252 = vmatpush1.msra.mxu0 %v56
  %253 = vmatprep.subr.mxu0 0.0
  %254 = vmatpush1.msra.mxu0 %v57
  %255 = vmatprep.subr.mxu0 0.0
  %256 = vmatpush1.msra.mxu0 %v58
  %257 = vmatprep.subr.mxu0 0.0
  %258 = vmatpush1.msra.mxu0 %v59
  %259 = vmatprep.subr.mxu0 0.0
  %260 = vmatpush1.msra.mxu0 %v60
  %261 = vmatprep.subr.mxu0 0.0
  %262 = vmatpush1.msra.mxu0 %v61
  %263 = vmatprep.subr.mxu0 0.0
  %264 = vmatpush1.msra.mxu0 %v62
  %265 = vmatprep.subr.mxu0 0.0
  %266 = vmatpush1.msra.mxu0 %v63
  %267 = vmatprep.subr.mxu0 0.0
  %268 = vmatpush1.msra.mxu0 %v64
  %269 = vmatprep.subr.mxu0 0.0
  %270 = vmatpush1.msra.mxu0 %v65
  %271 = vmatprep.subr.mxu0 0.0
  %272 = vmatpush1.msra.mxu0 %v66
  %273 = vmatprep.subr.mxu0 0.0
  %274 = vmatpush1.msra.mxu0 %v67
  %275 = vmatprep.subr.mxu0 0.0
  %276 = vmatpush1.msra.mxu0 %v68
  %277 = vmatprep.subr.mxu0 0.0
  %278 = vmatpush1.msra.mxu0 %v69
  %279 = vmatprep.subr.mxu0 0.0
  %280 = vmatpush1.msra.mxu0 %v70
  %281 = vmatprep.subr.mxu0 0.0
  %282 = vmatpush1.msra.mxu0 %v71
  %283 = vmatprep.subr.mxu0 0.0
  %284 = vmatpush1.msra.mxu0 %v72
  %285 = vmatprep.subr.mxu0 0.0
  %286 = vmatpush1.msra.mxu0 %v73
  %287 = vmatprep.subr.mxu0 0.0
  %288 = vmatpush1.msra.mxu0 %v74
  %289 = vmatprep.subr.mxu0 0.0
  %290 = vmatpush1.msra.mxu0 %v75
  %291 = vmatprep.subr.mxu0 0.0
  %292 = vmatpush1.msra.mxu0 %v76
  %293 = vmatprep.subr.mxu0 0.0
  %294 = vmatpush1.msra.mxu0 %v77
  %295 = vmatprep.subr.mxu0 0.0
  %296 = vmatpush1.msra.mxu0 %v78
  %297 = vmatprep.subr.mxu0 0.0
  %298 = vmatpush1.msra.mxu0 %v79
  %299 = vmatprep.subr.mxu0 0.0
  %300 = vmatpush1.msra.mxu0 %v80
  %301 = vmatprep.subr.mxu0 0.0
  %302 = vmatpush1.msra.mxu0 %v81
  %303 = vmatprep.subr.mxu0 0.0
  %304 = vmatpush1.msra.mxu0 %v82
  %305 = vmatprep.subr.mxu0 0.0
  %306 = vmatpush1.msra.mxu0 %v83
  %307 = vmatprep.subr.mxu0 0.0
  %308 = vmatpush1.msra.mxu0 %v84
  %309 = vmatprep.subr.mxu0 0.0
  %310 = vmatpush1.msra.mxu0 %v85
  %311 = vmatprep.subr.mxu0 0.0
  %312 = vmatpush1.msra.mxu0 %v86
  %313 = vmatprep.mubr.f32.mxu0 %v126
  %314 = vmatmul.mubr.f32.gmra.mrb[0].mxu0 %v125
  %v315 = vpop.f32.mrb[0].mxu0
  %v316 = vadd.f32 %v231, %v315
  %v317 = vpop.f32.mrb[0].mxu0
  %318 = vmatprep.mubr.f32.mxu0 %v133
  %319 = vmatmul.mubr.f32.gmra.mrb[0].mxu0 %v132
  %v320 = vpop.f32.mrb[0].mxu0
  %v321 = vadd.f32 %v236, %v320
  %v322 = vpop.f32.mrb[0].mxu0
  %323 = vmatprep.mubr.f32.mxu0 %v140
  %324 = vmatmul.mubr.f32.gmra.mrb[0].mxu0 %v139
  %v325 = vpop.f32.mrb[0].mxu0
  %v326 = vadd.f32 %v241, %v325
  %v327 = vpop.f32.mrb[0].mxu0
  %328 = vmatprep.mubr.f32.mxu0 %v147
  %329 = vmatmul.mubr.f32.gmra.mrb[0].mxu0 %v146
  %v330 = vpop.f32.mrb[0].mxu0
  %v331 = vadd.f32 %v246, %v330
  %v332 = vpop.f32.mrb[0].mxu0
  %333 = vdwg.mxu0
  %334 = vmatprep.subr.mxu0 0.0
  %335 = vmatpush1.msra.mxu0 %v87
  %336 = vmatprep.subr.mxu0 0.0
  %337 = vmatpush1.msra.mxu0 %v88
  %338 = vmatprep.subr.mxu0 0.0
  %339 = vmatpush1.msra.mxu0 %v89
  %340 = vmatprep.subr.mxu0 0.0
  %341 = vmatpush1.msra.mxu0 %v90
  %342 = vmatprep.subr.mxu0 0.0
  %343 = vmatpush1.msra.mxu0 %v91
  %344 = vmatprep.subr.mxu0 0.0
  %345 = vmatpush1.msra.mxu0 %v92
  %346 = vmatprep.subr.mxu0 0.0
  %347 = vmatpush1.msra.mxu0 %v93
  %348 = vmatprep.subr.mxu0 0.0
  %349 = vmatpush1.msra.mxu0 %v94
  %350 = vmatprep.subr.mxu0 0.0
  %351 = vmatpush1.msra.mxu0 %v95
  %352 = vmatprep.subr.mxu0 0.0
  %353 = vmatpush1.msra.mxu0 %v96
  %354 = vmatprep.subr.mxu0 0.0
  %355 = vmatpush1.msra.mxu0 %v97
  %356 = vmatprep.subr.mxu0 0.0
  %357 = vmatpush1.msra.mxu0 %v98
  %358 = vmatprep.subr.mxu0 0.0
  %359 = vmatpush1.msra.mxu0 %v99
  %360 = vmatprep.subr.mxu0 0.0
  %361 = vmatpush1.msra.mxu0 %v100
  %362 = vmatprep.subr.mxu0 0.0
  %363 = vmatpush1.msra.mxu0 %v101
  %364 = vmatprep.subr.mxu0 0.0
  %365 = vmatpush1.msra.mxu0 %v102
  %366 = vmatprep.subr.mxu0 0.0
  %367 = vmatpush1.msra.mxu0 %v103
  %368 = vmatprep.subr.mxu0 0.0
  %369 = vmatpush1.msra.mxu0 %v104
  %370 = vmatprep.subr.mxu0 0.0
  %371 = vmatpush1.msra.mxu0 %v105
  %372 = vmatprep.subr.mxu0 0.0
  %373 = vmatpush1.msra.mxu0 %v106
  %374 = vmatprep.subr.mxu0 0.0
  %375 = vmatpush1.msra.mxu0 %v107
  %376 = vmatprep.subr.mxu0 0.0
  %377 = vmatpush1.msra.mxu0 %v108
  %378 = vmatprep.subr.mxu0 0.0
  %379 = vmatpush1.msra.mxu0 %v109
  %380 = vmatprep.subr.mxu0 0.0
  %381 = vmatpush1.msra.mxu0 %v110
  %382 = vmatprep.subr.mxu0 0.0
  %383 = vmatpush1.msra.mxu0 %v111
  %384 = vmatprep.subr.mxu0 0.0
  %385 = vmatpush1.msra.mxu0 %v112
  %386 = vmatprep.subr.mxu0 0.0
  %387 = vmatpush1.msra.mxu0 %v113
  %388 = vmatprep.subr.mxu0 0.0
  %389 = vmatpush1.msra.mxu0 %v114
  %390 = vmatprep.subr.mxu0 0.0
  %391 = vmatpush1.msra.mxu0 %v115
  %392 = vmatprep.subr.mxu0 0.0
  %393 = vmatpush1.msra.mxu0 %v116
  %394 = vmatprep.subr.mxu0 0.0
  %395 = vmatpush1.msra.mxu0 %v117
  %396 = vmatprep.subr.mxu0 0.0
  %397 = vmatpush1.msra.mxu0 %v118
  %398 = vmatprep.mubr.f32.mxu0 %v128
  %399 = vmatmul.mubr.f32.gmra.mrb[0].mxu0 %v127
  %v400 = vpop.f32.mrb[0].mxu0
  %v401 = vadd.f32 %v316, %v400
  %v402 = vpop.f32.mrb[0].mxu0
  %403 = vmatprep.mubr.f32.mxu0 %v135
  %404 = vmatmul.mubr.f32.gmra.mrb[0].mxu0 %v134
  %v405 = vpop.f32.mrb[0].mxu0
  %v406 = vadd.f32 %v321, %v405
  %v407 = vpop.f32.mrb[0].mxu0
  %408 = vmatprep.mubr.f32.mxu0 %v142
  %409 = vmatmul.mubr.f32.gmra.mrb[0].mxu0 %v141
  %v410 = vpop.f32.mrb[0].mxu0
  %v411 = vadd.f32 %v326, %v410
  %v412 = vpop.f32.mrb[0].mxu0
  %413 = vmatprep.mubr.f32.mxu0 %v149
  %414 = vmatmul.mubr.f32.gmra.mrb[0].mxu0 %v148
  %v415 = vpop.f32.mrb[0].mxu0
  %v416 = vadd.f32 %v331, %v415
  %v417 = vpop.f32.mrb[0].mxu0
  %418 = vdwg.mxu0
  %419 = vmatprep.subr.mxu0 0.0
  %420 = vmatpush1.msra.mxu0 %v119
  %421 = vmatprep.subr.mxu0 0.0
  %422 = vmatpush1.msra.mxu0 %v120
  %423 = vmatprep.subr.mxu0 0.0
  %424 = vmatpush1.msra.mxu0 %v121
  %425 = vmatprep.subr.mxu0 0.0
  %426 = vmatpush1.msra.mxu0 %v122
  %427 = vmatprep.subr.mxu0 0.0
  %428 = vmatpush1.msra.mxu0 0.0
  %429 = vmatprep.subr.mxu0 0.0
  %430 = vmatpush1.msra.mxu0 0.0
  %431 = vmatprep.subr.mxu0 0.0
  %432 = vmatpush1.msra.mxu0 0.0
  %433 = vmatprep.subr.mxu0 0.0
  %434 = vmatpush1.msra.mxu0 0.0
  %435 = vmatprep.subr.mxu0 0.0
  %436 = vmatpush1.msra.mxu0 0.0
  %437 = vmatprep.subr.mxu0 0.0
  %438 = vmatpush1.msra.mxu0 0.0
  %439 = vmatprep.subr.mxu0 0.0
  %440 = vmatpush1.msra.mxu0 0.0
  %441 = vmatprep.subr.mxu0 0.0
  %442 = vmatpush1.msra.mxu0 0.0
  %443 = vmatprep.subr.mxu0 0.0
  %444 = vmatpush1.msra.mxu0 0.0
  %445 = vmatprep.subr.mxu0 0.0
  %446 = vmatpush1.msra.mxu0 0.0
  %447 = vmatprep.subr.mxu0 0.0
  %448 = vmatpush1.msra.mxu0 0.0
  %449 = vmatprep.subr.mxu0 0.0
  %450 = vmatpush1.msra.mxu0 0.0
  %451 = vmatprep.subr.mxu0 0.0
  %452 = vmatpush1.msra.mxu0 0.0
  %453 = vmatprep.subr.mxu0 0.0
  %454 = vmatpush1.msra.mxu0 0.0
  %455 = vmatprep.subr.mxu0 0.0
  %456 = vmatpush1.msra.mxu0 0.0
  %457 = vmatprep.subr.mxu0 0.0
  %458 = vmatpush1.msra.mxu0 0.0
  %459 = vmatprep.subr.mxu0 0.0
  %460 = vmatpush1.msra.mxu0 0.0
  %461 = vmatprep.subr.mxu0 0.0
  %462 = vmatpush1.msra.mxu0 0.0
  %463 = vmatprep.subr.mxu0 0.0
  %464 = vmatpush1.msra.mxu0 0.0
  %465 = vmatprep.subr.mxu0 0.0
  %466 = vmatpush1.msra.mxu0 0.0
  %467 = vmatprep.subr.mxu0 0.0
  %468 = vmatpush1.msra.mxu0 0.0
  %469 = vmatprep.subr.mxu0 0.0
  %470 = vmatpush1.msra.mxu0 0.0
  %471 = vmatprep.subr.mxu0 0.0
  %472 = vmatpush1.msra.mxu0 0.0
  %473 = vmatprep.subr.mxu0 0.0
  %474 = vmatpush1.msra.mxu0 0.0
  %475 = vmatprep.subr.mxu0 0.0
  %476 = vmatpush1.msra.mxu0 0.0
  %477 = vmatprep.subr.mxu0 0.0
  %478 = vmatpush1.msra.mxu0 0.0
  %479 = vmatprep.subr.mxu0 0.0
  %480 = vmatpush1.msra.mxu0 0.0
  %481 = vmatprep.subr.mxu0 0.0
  %482 = vmatpush1.msra.mxu0 0.0
  %483 = vmatprep.mubr.f32.mxu0 0.0
  %484 = vmatmul.mubr.f32.gmra.mrb[0].mxu0 %v153
  %v485 = vpop.f32.mrb[0].mxu0
  %v486 = vadd.f32 %v401, %v485
  %v487 = vpop.f32.mrb[0].mxu0
  %488 = vmatprep.mubr.f32.mxu0 0.0
  %489 = vmatmul.mubr.f32.gmra.mrb[0].mxu0 %v156
  %v490 = vpop.f32.mrb[0].mxu0
  %v491 = vadd.f32 %v406, %v490
  %v492 = vpop.f32.mrb[0].mxu0
  %493 = vmatprep.mubr.f32.mxu0 0.0
  %494 = vmatmul.mubr.f32.gmra.mrb[0].mxu0 %v159
  %v495 = vpop.f32.mrb[0].mxu0
  %v496 = vadd.f32 %v411, %v495
  %v497 = vpop.f32.mrb[0].mxu0
  %498 = vmatprep.mubr.f32.mxu0 0.0
  %499 = vmatmul.mubr.f32.gmra.mrb[0].mxu0 %v162
  %v500 = vpop.f32.mrb[0].mxu0
  %v501 = vadd.f32 %v416, %v500
  %v502 = vpop.f32.mrb[0].mxu0
  %503 = vdwg.mxu0
  %v504 = vld [vmem:[%s1] sm:$0xff]
  %v505 = vld [vmem:[%s1 + $0x8] sm:$0xff]
  %v506 = vld [vmem:[%s1 + $0x10] sm:$0xff]
  %v507 = vld [vmem:[%s1 + $0x18] sm:$0xff]
  %v508 = vld [vmem:[%s1 + $0x20] sm:$0xff]
  %v509 = vld [vmem:[%s1 + $0x28] sm:$0xff]
  %v510 = vld [vmem:[%s1 + $0x30] sm:$0xff]
  %v511 = vld [vmem:[%s1 + $0x38] sm:$0xff]
  %v512 = vld [vmem:[%s1 + $0x40] sm:$0xff]
  %v513 = vld [vmem:[%s1 + $0x48] sm:$0xff]
  %v514 = vld [vmem:[%s1 + $0x50] sm:$0xff]
  %v515 = vld [vmem:[%s1 + $0x58] sm:$0xff]
  %v516 = vld [vmem:[%s1 + $0x60] sm:$0xff]
  %v517 = vld [vmem:[%s1 + $0x68] sm:$0xff]
  %v518 = vld [vmem:[%s1 + $0x70] sm:$0xff]
  %v519 = vld [vmem:[%s1 + $0x78] sm:$0xff]
  %v520 = vld [vmem:[%s1 + $0x80] sm:$0xff]
  %v521 = vld [vmem:[%s1 + $0x88] sm:$0xff]
  %v522 = vld [vmem:[%s1 + $0x90] sm:$0xff]
  %v523 = vld [vmem:[%s1 + $0x98] sm:$0xff]
  %v524 = vld [vmem:[%s1 + $0xa0] sm:$0xff]
  %v525 = vld [vmem:[%s1 + $0xa8] sm:$0xff]
  %v526 = vld [vmem:[%s1 + $0xb0] sm:$0xff]
  %v527 = vld [vmem:[%s1 + $0xb8] sm:$0xff]
  %v528 = vld [vmem:[%s1 + $0xc0] sm:$0xff]
  %v529 = vld [vmem:[%s1 + $0xc8] sm:$0xff]
  %v530 = vld [vmem:[%s1 + $0xd0] sm:$0xff]
  %v531 = vld [vmem:[%s1 + $0xd8] sm:$0xff]
  %v533 = vsel %vm151, %v510, 0
  %v536 = vsel %vm151, %v517, 0
  %v539 = vsel %vm151, %v524, 0
  %v542 = vsel %vm151, %v531, 0
  %544 = vmatprep.subr.mxu0 0.0
  %545 = vmatpush1.msra.mxu0 %v23
  %546 = vmatprep.subr.mxu0 0.0
  %547 = vmatpush1.msra.mxu0 %v24
  %548 = vmatprep.subr.mxu0 0.0
  %549 = vmatpush1.msra.mxu0 %v25
  %550 = vmatprep.subr.mxu0 0.0
  %551 = vmatpush1.msra.mxu0 %v26
  %552 = vmatprep.subr.mxu0 0.0
  %553 = vmatpush1.msra.mxu0 %v27
  %554 = vmatprep.subr.mxu0 0.0
  %555 = vmatpush1.msra.mxu0 %v28
  %556 = vmatprep.subr.mxu0 0.0
  %557 = vmatpush1.msra.mxu0 %v29
  %558 = vmatprep.subr.mxu0 0.0
  %559 = vmatpush1.msra.mxu0 %v30
  %560 = vmatprep.subr.mxu0 0.0
  %561 = vmatpush1.msra.mxu0 %v31
  %562 = vmatprep.subr.mxu0 0.0
  %563 = vmatpush1.msra.mxu0 %v32
  %564 = vmatprep.subr.mxu0 0.0
  %565 = vmatpush1.msra.mxu0 %v33
  %566 = vmatprep.subr.mxu0 0.0
  %567 = vmatpush1.msra.mxu0 %v34
  %568 = vmatprep.subr.mxu0 0.0
  %569 = vmatpush1.msra.mxu0 %v35
  %570 = vmatprep.subr.mxu0 0.0
  %571 = vmatpush1.msra.mxu0 %v36
  %572 = vmatprep.subr.mxu0 0.0
  %573 = vmatpush1.msra.mxu0 %v37
  %574 = vmatprep.subr.mxu0 0.0
  %575 = vmatpush1.msra.mxu0 %v38
  %576 = vmatprep.subr.mxu0 0.0
  %577 = vmatpush1.msra.mxu0 %v39
  %578 = vmatprep.subr.mxu0 0.0
  %579 = vmatpush1.msra.mxu0 %v40
  %580 = vmatprep.subr.mxu0 0.0
  %581 = vmatpush1.msra.mxu0 %v41
  %582 = vmatprep.subr.mxu0 0.0
  %583 = vmatpush1.msra.mxu0 %v42
  %584 = vmatprep.subr.mxu0 0.0
  %585 = vmatpush1.msra.mxu0 %v43
  %586 = vmatprep.subr.mxu0 0.0
  %587 = vmatpush1.msra.mxu0 %v44
  %588 = vmatprep.subr.mxu0 0.0
  %589 = vmatpush1.msra.mxu0 %v45
  %590 = vmatprep.subr.mxu0 0.0
  %591 = vmatpush1.msra.mxu0 %v46
  %592 = vmatprep.subr.mxu0 0.0
  %593 = vmatpush1.msra.mxu0 %v47
  %594 = vmatprep.subr.mxu0 0.0
  %595 = vmatpush1.msra.mxu0 %v48
  %596 = vmatprep.subr.mxu0 0.0
  %597 = vmatpush1.msra.mxu0 %v49
  %598 = vmatprep.subr.mxu0 0.0
  %599 = vmatpush1.msra.mxu0 %v50
  %600 = vmatprep.subr.mxu0 0.0
  %601 = vmatpush1.msra.mxu0 %v51
  %602 = vmatprep.subr.mxu0 0.0
  %603 = vmatpush1.msra.mxu0 %v52
  %604 = vmatprep.subr.mxu0 0.0
  %605 = vmatpush1.msra.mxu0 %v53
  %606 = vmatprep.subr.mxu0 0.0
  %607 = vmatpush1.msra.mxu0 %v54
  %608 = vmatprep.mubr.f32.mxu0 %v505
  %609 = vmatmul.mubr.f32.gmra.mrb[0].mxu0 %v504
  %v610 = vpop.f32.mrb[0].mxu0
  %v611 = vadd.f32 0.0, %v610
  %v612 = vpop.f32.mrb[0].mxu0
  %613 = vmatprep.mubr.f32.mxu0 %v512
  %614 = vmatmul.mubr.f32.gmra.mrb[0].mxu0 %v511
  %v615 = vpop.f32.mrb[0].mxu0
  %v616 = vadd.f32 0.0, %v615
  %v617 = vpop.f32.mrb[0].mxu0
  %618 = vmatprep.mubr.f32.mxu0 %v519
  %619 = vmatmul.mubr.f32.gmra.mrb[0].mxu0 %v518
  %v620 = vpop.f32.mrb[0].mxu0
  %v621 = vadd.f32 0.0, %v620
  %v622 = vpop.f32.mrb[0].mxu0
  %623 = vmatprep.mubr.f32.mxu0 %v526
  %624 = vmatmul.mubr.f32.gmra.mrb[0].mxu0 %v525
  %v625 = vpop.f32.mrb[0].mxu0
  %v626 = vadd.f32 0.0, %v625
  %v627 = vpop.f32.mrb[0].mxu0
  %628 = vdwg.mxu0
  %629 = vmatprep.subr.mxu0 0.0
  %630 = vmatpush1.msra.mxu0 %v55
  %631 = vmatprep.subr.mxu0 0.0
  %632 = vmatpush1.msra.mxu0 %v56
  %633 = vmatprep.subr.mxu0 0.0
  %634 = vmatpush1.msra.mxu0 %v57
  %635 = vmatprep.subr.mxu0 0.0
  %636 = vmatpush1.msra.mxu0 %v58
  %637 = vmatprep.subr.mxu0 0.0
  %638 = vmatpush1.msra.mxu0 %v59
  %639 = vmatprep.subr.mxu0 0.0
  %640 = vmatpush1.msra.mxu0 %v60
  %641 = vmatprep.subr.mxu0 0.0
  %642 = vmatpush1.msra.mxu0 %v61
  %643 = vmatprep.subr.mxu0 0.0
  %644 = vmatpush1.msra.mxu0 %v62
  %645 = vmatprep.subr.mxu0 0.0
  %646 = vmatpush1.msra.mxu0 %v63
  %647 = vmatprep.subr.mxu0 0.0
  %648 = vmatpush1.msra.mxu0 %v64
  %649 = vmatprep.subr.mxu0 0.0
  %650 = vmatpush1.msra.mxu0 %v65
  %651 = vmatprep.subr.mxu0 0.0
  %652 = vmatpush1.msra.mxu0 %v66
  %653 = vmatprep.subr.mxu0 0.0
  %654 = vmatpush1.msra.mxu0 %v67
  %655 = vmatprep.subr.mxu0 0.0
  %656 = vmatpush1.msra.mxu0 %v68
  %657 = vmatprep.subr.mxu0 0.0
  %658 = vmatpush1.msra.mxu0 %v69
  %659 = vmatprep.subr.mxu0 0.0
  %660 = vmatpush1.msra.mxu0 %v70
  %661 = vmatprep.subr.mxu0 0.0
  %662 = vmatpush1.msra.mxu0 %v71
  %663 = vmatprep.subr.mxu0 0.0
  %664 = vmatpush1.msra.mxu0 %v72
  %665 = vmatprep.subr.mxu0 0.0
  %666 = vmatpush1.msra.mxu0 %v73
  %667 = vmatprep.subr.mxu0 0.0
  %668 = vmatpush1.msra.mxu0 %v74
  %669 = vmatprep.subr.mxu0 0.0
  %670 = vmatpush1.msra.mxu0 %v75
  %671 = vmatprep.subr.mxu0 0.0
  %672 = vmatpush1.msra.mxu0 %v76
  %673 = vmatprep.subr.mxu0 0.0
  %674 = vmatpush1.msra.mxu0 %v77
  %675 = vmatprep.subr.mxu0 0.0
  %676 = vmatpush1.msra.mxu0 %v78
  %677 = vmatprep.subr.mxu0 0.0
  %678 = vmatpush1.msra.mxu0 %v79
  %679 = vmatprep.subr.mxu0 0.0
  %680 = vmatpush1.msra.mxu0 %v80
  %681 = vmatprep.subr.mxu0 0.0
  %682 = vmatpush1.msra.mxu0 %v81
  %683 = vmatprep.subr.mxu0 0.0
  %684 = vmatpush1.msra.mxu0 %v82
  %685 = vmatprep.subr.mxu0 0.0
  %686 = vmatpush1.msra.mxu0 %v83
  %687 = vmatprep.subr.mxu0 0.0
  %688 = vmatpush1.msra.mxu0 %v84
  %689 = vmatprep.subr.mxu0 0.0
  %690 = vmatpush1.msra.mxu0 %v85
  %691 = vmatprep.subr.mxu0 0.0
  %692 = vmatpush1.msra.mxu0 %v86
  %693 = vmatprep.mubr.f32.mxu0 %v507
  %694 = vmatmul.mubr.f32.gmra.mrb[0].mxu0 %v506
  %v695 = vpop.f32.mrb[0].mxu0
  %v696 = vadd.f32 %v611, %v695
  %v697 = vpop.f32.mrb[0].mxu0
  %698 = vmatprep.mubr.f32.mxu0 %v514
  %699 = vmatmul.mubr.f32.gmra.mrb[0].mxu0 %v513
  %v700 = vpop.f32.mrb[0].mxu0
  %v701 = vadd.f32 %v616, %v700
  %v702 = vpop.f32.mrb[0].mxu0
  %703 = vmatprep.mubr.f32.mxu0 %v521
  %704 = vmatmul.mubr.f32.gmra.mrb[0].mxu0 %v520
  %v705 = vpop.f32.mrb[0].mxu0
  %v706 = vadd.f32 %v621, %v705
  %v707 = vpop.f32.mrb[0].mxu0
  %708 = vmatprep.mubr.f32.mxu0 %v528
  %709 = vmatmul.mubr.f32.gmra.mrb[0].mxu0 %v527
  %v710 = vpop.f32.mrb[0].mxu0
  %v711 = vadd.f32 %v626, %v710
  %v712 = vpop.f32.mrb[0].mxu0
  %713 = vdwg.mxu0
  %714 = vmatprep.subr.mxu0 0.0
  %715 = vmatpush1.msra.mxu0 %v87
  %716 = vmatprep.subr.mxu0 0.0
  %717 = vmatpush1.msra.mxu0 %v88
  %718 = vmatprep.subr.mxu0 0.0
  %719 = vmatpush1.msra.mxu0 %v89
  %720 = vmatprep.subr.mxu0 0.0
  %721 = vmatpush1.msra.mxu0 %v90
  %722 = vmatprep.subr.mxu0 0.0
  %723 = vmatpush1.msra.mxu0 %v91
  %724 = vmatprep.subr.mxu0 0.0
  %725 = vmatpush1.msra.mxu0 %v92
  %726 = vmatprep.subr.mxu0 0.0
  %727 = vmatpush1.msra.mxu0 %v93
  %728 = vmatprep.subr.mxu0 0.0
  %729 = vmatpush1.msra.mxu0 %v94
  %730 = vmatprep.subr.mxu0 0.0
  %731 = vmatpush1.msra.mxu0 %v95
  %732 = vmatprep.subr.mxu0 0.0
  %733 = vmatpush1.msra.mxu0 %v96
  %734 = vmatprep.subr.mxu0 0.0
  %735 = vmatpush1.msra.mxu0 %v97
  %736 = vmatprep.subr.mxu0 0.0
  %737 = vmatpush1.msra.mxu0 %v98
  %738 = vmatprep.subr.mxu0 0.0
  %739 = vmatpush1.msra.mxu0 %v99
  %740 = vmatprep.subr.mxu0 0.0
  %741 = vmatpush1.msra.mxu0 %v100
  %742 = vmatprep.subr.mxu0 0.0
  %743 = vmatpush1.msra.mxu0 %v101
  %744 = vmatprep.subr.mxu0 0.0
  %745 = vmatpush1.msra.mxu0 %v102
  %746 = vmatprep.subr.mxu0 0.0
  %747 = vmatpush1.msra.mxu0 %v103
  %748 = vmatprep.subr.mxu0 0.0
  %749 = vmatpush1.msra.mxu0 %v104
  %750 = vmatprep.subr.mxu0 0.0
  %751 = vmatpush1.msra.mxu0 %v105
  %752 = vmatprep.subr.mxu0 0.0
  %753 = vmatpush1.msra.mxu0 %v106
  %754 = vmatprep.subr.mxu0 0.0
  %755 = vmatpush1.msra.mxu0 %v107
  %756 = vmatprep.subr.mxu0 0.0
  %757 = vmatpush1.msra.mxu0 %v108
  %758 = vmatprep.subr.mxu0 0.0
  %759 = vmatpush1.msra.mxu0 %v109
  %760 = vmatprep.subr.mxu0 0.0
  %761 = vmatpush1.msra.mxu0 %v110
  %762 = vmatprep.subr.mxu0 0.0
  %763 = vmatpush1.msra.mxu0 %v111
  %764 = vmatprep.subr.mxu0 0.0
  %765 = vmatpush1.msra.mxu0 %v112
  %766 = vmatprep.subr.mxu0 0.0
  %767 = vmatpush1.msra.mxu0 %v113
  %768 = vmatprep.subr.mxu0 0.0
  %769 = vmatpush1.msra.mxu0 %v114
  %770 = vmatprep.subr.mxu0 0.0
  %771 = vmatpush1.msra.mxu0 %v115
  %772 = vmatprep.subr.mxu0 0.0
  %773 = vmatpush1.msra.mxu0 %v116
  %774 = vmatprep.subr.mxu0 0.0
  %775 = vmatpush1.msra.mxu0 %v117
  %776 = vmatprep.subr.mxu0 0.0
  %777 = vmatpush1.msra.mxu0 %v118
  %778 = vmatprep.mubr.f32.mxu0 %v509
  %779 = vmatmul.mubr.f32.gmra.mrb[0].mxu0 %v508
  %v780 = vpop.f32.mrb[0].mxu0
  %v781 = vadd.f32 %v696, %v780
  %v782 = vpop.f32.mrb[0].mxu0
  %783 = vmatprep.mubr.f32.mxu0 %v516
  %784 = vmatmul.mubr.f32.gmra.mrb[0].mxu0 %v515
  %v785 = vpop.f32.mrb[0].mxu0
  %v786 = vadd.f32 %v701, %v785
  %v787 = vpop.f32.mrb[0].mxu0
  %788 = vmatprep.mubr.f32.mxu0 %v523
  %789 = vmatmul.mubr.f32.gmra.mrb[0].mxu0 %v522
  %v790 = vpop.f32.mrb[0].mxu0
  %v791 = vadd.f32 %v706, %v790
  %v792 = vpop.f32.mrb[0].mxu0
  %793 = vmatprep.mubr.f32.mxu0 %v530
  %794 = vmatmul.mubr.f32.gmra.mrb[0].mxu0 %v529
  %v795 = vpop.f32.mrb[0].mxu0
  %v796 = vadd.f32 %v711, %v795
  %v797 = vpop.f32.mrb[0].mxu0
  %798 = vdwg.mxu0
  %799 = vmatprep.subr.mxu0 0.0
  %800 = vmatpush1.msra.mxu0 %v119
  %801 = vmatprep.subr.mxu0 0.0
  %802 = vmatpush1.msra.mxu0 %v120
  %803 = vmatprep.subr.mxu0 0.0
  %804 = vmatpush1.msra.mxu0 %v121
  %805 = vmatprep.subr.mxu0 0.0
  %806 = vmatpush1.msra.mxu0 %v122
  %807 = vmatprep.subr.mxu0 0.0
  %808 = vmatpush1.msra.mxu0 0.0
  %809 = vmatprep.subr.mxu0 0.0
  %810 = vmatpush1.msra.mxu0 0.0
  %811 = vmatprep.subr.mxu0 0.0
  %812 = vmatpush1.msra.mxu0 0.0
  %813 = vmatprep.subr.mxu0 0.0
  %814 = vmatpush1.msra.mxu0 0.0
  %815 = vmatprep.subr.mxu0 0.0
  %816 = vmatpush1.msra.mxu0 0.0
  %817 = vmatprep.subr.mxu0 0.0
  %818 = vmatpush1.msra.mxu0 0.0
  %819 = vmatprep.subr.mxu0 0.0
  %820 = vmatpush1.msra.mxu0 0.0
  %821 = vmatprep.subr.mxu0 0.0
  %822 = vmatpush1.msra.mxu0 0.0
  %823 = vmatprep.subr.mxu0 0.0
  %824 = vmatpush1.msra.mxu0 0.0
  %825 = vmatprep.subr.mxu0 0.0
  %826 = vmatpush1.msra.mxu0 0.0
  %827 = vmatprep.subr.mxu0 0.0
  %828 = vmatpush1.msra.mxu0 0.0
  %829 = vmatprep.subr.mxu0 0.0
  %830 = vmatpush1.msra.mxu0 0.0
  %831 = vmatprep.subr.mxu0 0.0
  %832 = vmatpush1.msra.mxu0 0.0
  %833 = vmatprep.subr.mxu0 0.0
  %834 = vmatpush1.msra.mxu0 0.0
  %835 = vmatprep.subr.mxu0 0.0
  %836 = vmatpush1.msra.mxu0 0.0
  %837 = vmatprep.subr.mxu0 0.0
  %838 = vmatpush1.msra.mxu0 0.0
  %839 = vmatprep.subr.mxu0 0.0
  %840 = vmatpush1.msra.mxu0 0.0
  %841 = vmatprep.subr.mxu0 0.0
  %842 = vmatpush1.msra.mxu0 0.0
  %843 = vmatprep.subr.mxu0 0.0
  %844 = vmatpush1.msra.mxu0 0.0
  %845 = vmatprep.subr.mxu0 0.0
  %846 = vmatpush1.msra.mxu0 0.0
  %847 = vmatprep.subr.mxu0 0.0
  %848 = vmatpush1.msra.mxu0 0.0
  %849 = vmatprep.subr.mxu0 0.0
  %850 = vmatpush1.msra.mxu0 0.0
  %851 = vmatprep.subr.mxu0 0.0
  %852 = vmatpush1.msra.mxu0 0.0
  %853 = vmatprep.subr.mxu0 0.0
  %854 = vmatpush1.msra.mxu0 0.0
  %855 = vmatprep.subr.mxu0 0.0
  %856 = vmatpush1.msra.mxu0 0.0
  %857 = vmatprep.subr.mxu0 0.0
  %858 = vmatpush1.msra.mxu0 0.0
  %859 = vmatprep.subr.mxu0 0.0
  %860 = vmatpush1.msra.mxu0 0.0
  %861 = vmatprep.subr.mxu0 0.0
  %862 = vmatpush1.msra.mxu0 0.0
  %863 = vmatprep.mubr.f32.mxu0 0.0
  %864 = vmatmul.mubr.f32.gmra.mrb[0].mxu0 %v533
  %v865 = vpop.f32.mrb[0].mxu0
  %v866 = vadd.f32 %v781, %v865
  %v867 = vpop.f32.mrb[0].mxu0
  %868 = vmatprep.mubr.f32.mxu0 0.0
  %869 = vmatmul.mubr.f32.gmra.mrb[0].mxu0 %v536
  %v870 = vpop.f32.mrb[0].mxu0
  %v871 = vadd.f32 %v786, %v870
  %v872 = vpop.f32.mrb[0].mxu0
  %873 = vmatprep.mubr.f32.mxu0 0.0
  %874 = vmatmul.mubr.f32.gmra.mrb[0].mxu0 %v539
  %v875 = vpop.f32.mrb[0].mxu0
  %v876 = vadd.f32 %v791, %v875
  %v877 = vpop.f32.mrb[0].mxu0
  %878 = vmatprep.mubr.f32.mxu0 0.0
  %879 = vmatmul.mubr.f32.gmra.mrb[0].mxu0 %v542
  %v880 = vpop.f32.mrb[0].mxu0
  %v881 = vadd.f32 %v796, %v880
  %v882 = vpop.f32.mrb[0].mxu0
  %883 = vdwg.mxu0
  %v884 = vmax.f32 %v486, %v866
  %v885 = vmax.f32 %v491, %v871
  %v886 = vmax.f32 %v496, %v876
  %v887 = vmax.f32 %v501, %v881
  %v888 = vld [vmem:[%s2] sm:$0xff]
  %v889 = vld [vmem:[%s2 + $0x8] sm:$0xff]
  %v890 = vld [vmem:[%s2 + $0x10] sm:$0xff]
  %v891 = vld [vmem:[%s2 + $0x18] sm:$0xff]
  %v892 = vld [vmem:[%s2 + $0x20] sm:$0xff]
  %v893 = vld [vmem:[%s2 + $0x28] sm:$0xff]
  %v894 = vld [vmem:[%s2 + $0x30] sm:$0xff]
  %v895 = vld [vmem:[%s2 + $0x38] sm:$0xff]
  %v896 = vld [vmem:[%s2 + $0x40] sm:$0xff]
  %v897 = vld [vmem:[%s2 + $0x48] sm:$0xff]
  %v898 = vld [vmem:[%s2 + $0x50] sm:$0xff]
  %v899 = vld [vmem:[%s2 + $0x58] sm:$0xff]
  %v900 = vld [vmem:[%s2 + $0x60] sm:$0xff]
  %v901 = vld [vmem:[%s2 + $0x68] sm:$0xff]
  %v902 = vld [vmem:[%s2 + $0x70] sm:$0xff]
  %v903 = vld [vmem:[%s2 + $0x78] sm:$0xff]
  %v904 = vld [vmem:[%s2 + $0x80] sm:$0xff]
  %v905 = vld [vmem:[%s2 + $0x88] sm:$0xff]
  %v906 = vld [vmem:[%s2 + $0x90] sm:$0xff]
  %v907 = vld [vmem:[%s2 + $0x98] sm:$0xff]
  %v908 = vld [vmem:[%s2 + $0xa0] sm:$0xff]
  %v909 = vld [vmem:[%s2 + $0xa8] sm:$0xff]
  %v910 = vld [vmem:[%s2 + $0xb0] sm:$0xff]
  %v911 = vld [vmem:[%s2 + $0xb8] sm:$0xff]
  %v912 = vld [vmem:[%s2 + $0xc0] sm:$0xff]
  %v913 = vld [vmem:[%s2 + $0xc8] sm:$0xff]
  %v914 = vld [vmem:[%s2 + $0xd0] sm:$0xff]
  %v915 = vld [vmem:[%s2 + $0xd8] sm:$0xff]
  %v917 = vsel %vm151, %v894, 0
  %v920 = vsel %vm151, %v901, 0
  %v923 = vsel %vm151, %v908, 0
  %v926 = vsel %vm151, %v915, 0
  %928 = vmatprep.subr.mxu0 0.0
  %929 = vmatpush1.msra.mxu0 %v23
  %930 = vmatprep.subr.mxu0 0.0
  %931 = vmatpush1.msra.mxu0 %v24
  %932 = vmatprep.subr.mxu0 0.0
  %933 = vmatpush1.msra.mxu0 %v25
  %934 = vmatprep.subr.mxu0 0.0
  %935 = vmatpush1.msra.mxu0 %v26
  %936 = vmatprep.subr.mxu0 0.0
  %937 = vmatpush1.msra.mxu0 %v27
  %938 = vmatprep.subr.mxu0 0.0
  %939 = vmatpush1.msra.mxu0 %v28
  %940 = vmatprep.subr.mxu0 0.0
  %941 = vmatpush1.msra.mxu0 %v29
  %942 = vmatprep.subr.mxu0 0.0
  %943 = vmatpush1.msra.mxu0 %v30
  %944 = vmatprep.subr.mxu0 0.0
  %945 = vmatpush1.msra.mxu0 %v31
  %946 = vmatprep.subr.mxu0 0.0
  %947 = vmatpush1.msra.mxu0 %v32
  %948 = vmatprep.subr.mxu0 0.0
  %949 = vmatpush1.msra.mxu0 %v33
  %950 = vmatprep.subr.mxu0 0.0
  %951 = vmatpush1.msra.mxu0 %v34
  %952 = vmatprep.subr.mxu0 0.0
  %953 = vmatpush1.msra.mxu0 %v35
  %954 = vmatprep.subr.mxu0 0.0
  %955 = vmatpush1.msra.mxu0 %v36
  %956 = vmatprep.subr.mxu0 0.0
  %957 = vmatpush1.msra.mxu0 %v37
  %958 = vmatprep.subr.mxu0 0.0
  %959 = vmatpush1.msra.mxu0 %v38
  %960 = vmatprep.subr.mxu0 0.0
  %961 = vmatpush1.msra.mxu0 %v39
  %962 = vmatprep.subr.mxu0 0.0
  %963 = vmatpush1.msra.mxu0 %v40
  %964 = vmatprep.subr.mxu0 0.0
  %965 = vmatpush1.msra.mxu0 %v41
  %966 = vmatprep.subr.mxu0 0.0
  %967 = vmatpush1.msra.mxu0 %v42
  %968 = vmatprep.subr.mxu0 0.0
  %969 = vmatpush1.msra.mxu0 %v43
  %970 = vmatprep.subr.mxu0 0.0
  %971 = vmatpush1.msra.mxu0 %v44
  %972 = vmatprep.subr.mxu0 0.0
  %973 = vmatpush1.msra.mxu0 %v45
  %974 = vmatprep.subr.mxu0 0.0
  %975 = vmatpush1.msra.mxu0 %v46
  %976 = vmatprep.subr.mxu0 0.0
  %977 = vmatpush1.msra.mxu0 %v47
  %978 = vmatprep.subr.mxu0 0.0
  %979 = vmatpush1.msra.mxu0 %v48
  %980 = vmatprep.subr.mxu0 0.0
  %981 = vmatpush1.msra.mxu0 %v49
  %982 = vmatprep.subr.mxu0 0.0
  %983 = vmatpush1.msra.mxu0 %v50
  %984 = vmatprep.subr.mxu0 0.0
  %985 = vmatpush1.msra.mxu0 %v51
  %986 = vmatprep.subr.mxu0 0.0
  %987 = vmatpush1.msra.mxu0 %v52
  %988 = vmatprep.subr.mxu0 0.0
  %989 = vmatpush1.msra.mxu0 %v53
  %990 = vmatprep.subr.mxu0 0.0
  %991 = vmatpush1.msra.mxu0 %v54
  %992 = vmatprep.mubr.f32.mxu0 %v889
  %993 = vmatmul.mubr.f32.gmra.mrb[0].mxu0 %v888
  %v994 = vpop.f32.mrb[0].mxu0
  %v995 = vadd.f32 0.0, %v994
  %v996 = vpop.f32.mrb[0].mxu0
  %997 = vmatprep.mubr.f32.mxu0 %v896
  %998 = vmatmul.mubr.f32.gmra.mrb[0].mxu0 %v895
  %v999 = vpop.f32.mrb[0].mxu0
  %v1000 = vadd.f32 0.0, %v999
  %v1001 = vpop.f32.mrb[0].mxu0
  %1002 = vmatprep.mubr.f32.mxu0 %v903
  %1003 = vmatmul.mubr.f32.gmra.mrb[0].mxu0 %v902
  %v1004 = vpop.f32.mrb[0].mxu0
  %v1005 = vadd.f32 0.0, %v1004
  %v1006 = vpop.f32.mrb[0].mxu0
  %1007 = vmatprep.mubr.f32.mxu0 %v910
  %1008 = vmatmul.mubr.f32.gmra.mrb[0].mxu0 %v909
  %v1009 = vpop.f32.mrb[0].mxu0
  %v1010 = vadd.f32 0.0, %v1009
  %v1011 = vpop.f32.mrb[0].mxu0
  %1012 = vdwg.mxu0
  %1013 = vmatprep.subr.mxu0 0.0
  %1014 = vmatpush1.msra.mxu0 %v55
  %1015 = vmatprep.subr.mxu0 0.0
  %1016 = vmatpush1.msra.mxu0 %v56
  %1017 = vmatprep.subr.mxu0 0.0
  %1018 = vmatpush1.msra.mxu0 %v57
  %1019 = vmatprep.subr.mxu0 0.0
  %1020 = vmatpush1.msra.mxu0 %v58
  %1021 = vmatprep.subr.mxu0 0.0
  %1022 = vmatpush1.msra.mxu0 %v59
  %1023 = vmatprep.subr.mxu0 0.0
  %1024 = vmatpush1.msra.mxu0 %v60
  %1025 = vmatprep.subr.mxu0 0.0
  %1026 = vmatpush1.msra.mxu0 %v61
  %1027 = vmatprep.subr.mxu0 0.0
  %1028 = vmatpush1.msra.mxu0 %v62
  %1029 = vmatprep.subr.mxu0 0.0
  %1030 = vmatpush1.msra.mxu0 %v63
  %1031 = vmatprep.subr.mxu0 0.0
  %1032 = vmatpush1.msra.mxu0 %v64
  %1033 = vmatprep.subr.mxu0 0.0
  %1034 = vmatpush1.msra.mxu0 %v65
  %1035 = vmatprep.subr.mxu0 0.0
  %1036 = vmatpush1.msra.mxu0 %v66
  %1037 = vmatprep.subr.mxu0 0.0
  %1038 = vmatpush1.msra.mxu0 %v67
  %1039 = vmatprep.subr.mxu0 0.0
  %1040 = vmatpush1.msra.mxu0 %v68
  %1041 = vmatprep.subr.mxu0 0.0
  %1042 = vmatpush1.msra.mxu0 %v69
  %1043 = vmatprep.subr.mxu0 0.0
  %1044 = vmatpush1.msra.mxu0 %v70
  %1045 = vmatprep.subr.mxu0 0.0
  %1046 = vmatpush1.msra.mxu0 %v71
  %1047 = vmatprep.subr.mxu0 0.0
  %1048 = vmatpush1.msra.mxu0 %v72
  %1049 = vmatprep.subr.mxu0 0.0
  %1050 = vmatpush1.msra.mxu0 %v73
  %1051 = vmatprep.subr.mxu0 0.0
  %1052 = vmatpush1.msra.mxu0 %v74
  %1053 = vmatprep.subr.mxu0 0.0
  %1054 = vmatpush1.msra.mxu0 %v75
  %1055 = vmatprep.subr.mxu0 0.0
  %1056 = vmatpush1.msra.mxu0 %v76
  %1057 = vmatprep.subr.mxu0 0.0
  %1058 = vmatpush1.msra.mxu0 %v77
  %1059 = vmatprep.subr.mxu0 0.0
  %1060 = vmatpush1.msra.mxu0 %v78
  %1061 = vmatprep.subr.mxu0 0.0
  %1062 = vmatpush1.msra.mxu0 %v79
  %1063 = vmatprep.subr.mxu0 0.0
  %1064 = vmatpush1.msra.mxu0 %v80
  %1065 = vmatprep.subr.mxu0 0.0
  %1066 = vmatpush1.msra.mxu0 %v81
  %1067 = vmatprep.subr.mxu0 0.0
  %1068 = vmatpush1.msra.mxu0 %v82
  %1069 = vmatprep.subr.mxu0 0.0
  %1070 = vmatpush1.msra.mxu0 %v83
  %1071 = vmatprep.subr.mxu0 0.0
  %1072 = vmatpush1.msra.mxu0 %v84
  %1073 = vmatprep.subr.mxu0 0.0
  %1074 = vmatpush1.msra.mxu0 %v85
  %1075 = vmatprep.subr.mxu0 0.0
  %1076 = vmatpush1.msra.mxu0 %v86
  %1077 = vmatprep.mubr.f32.mxu0 %v891
  %1078 = vmatmul.mubr.f32.gmra.mrb[0].mxu0 %v890
  %v1079 = vpop.f32.mrb[0].mxu0
  %v1080 = vadd.f32 %v995, %v1079
  %v1081 = vpop.f32.mrb[0].mxu0
  %1082 = vmatprep.mubr.f32.mxu0 %v898
  %1083 = vmatmul.mubr.f32.gmra.mrb[0].mxu0 %v897
  %v1084 = vpop.f32.mrb[0].mxu0
  %v1085 = vadd.f32 %v1000, %v1084
  %v1086 = vpop.f32.mrb[0].mxu0
  %1087 = vmatprep.mubr.f32.mxu0 %v905
  %1088 = vmatmul.mubr.f32.gmra.mrb[0].mxu0 %v904
  %v1089 = vpop.f32.mrb[0].mxu0
  %v1090 = vadd.f32 %v1005, %v1089
  %v1091 = vpop.f32.mrb[0].mxu0
  %1092 = vmatprep.mubr.f32.mxu0 %v912
  %1093 = vmatmul.mubr.f32.gmra.mrb[0].mxu0 %v911
  %v1094 = vpop.f32.mrb[0].mxu0
  %v1095 = vadd.f32 %v1010, %v1094
  %v1096 = vpop.f32.mrb[0].mxu0
  %1097 = vdwg.mxu0
  %1098 = vmatprep.subr.mxu0 0.0
  %1099 = vmatpush1.msra.mxu0 %v87
  %1100 = vmatprep.subr.mxu0 0.0
  %1101 = vmatpush1.msra.mxu0 %v88
  %1102 = vmatprep.subr.mxu0 0.0
  %1103 = vmatpush1.msra.mxu0 %v89
  %1104 = vmatprep.subr.mxu0 0.0
  %1105 = vmatpush1.msra.mxu0 %v90
  %1106 = vmatprep.subr.mxu0 0.0
  %1107 = vmatpush1.msra.mxu0 %v91
  %1108 = vmatprep.subr.mxu0 0.0
  %1109 = vmatpush1.msra.mxu0 %v92
  %1110 = vmatprep.subr.mxu0 0.0
  %1111 = vmatpush1.msra.mxu0 %v93
  %1112 = vmatprep.subr.mxu0 0.0
  %1113 = vmatpush1.msra.mxu0 %v94
  %1114 = vmatprep.subr.mxu0 0.0
  %1115 = vmatpush1.msra.mxu0 %v95
  %1116 = vmatprep.subr.mxu0 0.0
  %1117 = vmatpush1.msra.mxu0 %v96
  %1118 = vmatprep.subr.mxu0 0.0
  %1119 = vmatpush1.msra.mxu0 %v97
  %1120 = vmatprep.subr.mxu0 0.0
  %1121 = vmatpush1.msra.mxu0 %v98
  %1122 = vmatprep.subr.mxu0 0.0
  %1123 = vmatpush1.msra.mxu0 %v99
  %1124 = vmatprep.subr.mxu0 0.0
  %1125 = vmatpush1.msra.mxu0 %v100
  %1126 = vmatprep.subr.mxu0 0.0
  %1127 = vmatpush1.msra.mxu0 %v101
  %1128 = vmatprep.subr.mxu0 0.0
  %1129 = vmatpush1.msra.mxu0 %v102
  %1130 = vmatprep.subr.mxu0 0.0
  %1131 = vmatpush1.msra.mxu0 %v103
  %1132 = vmatprep.subr.mxu0 0.0
  %1133 = vmatpush1.msra.mxu0 %v104
  %1134 = vmatprep.subr.mxu0 0.0
  %1135 = vmatpush1.msra.mxu0 %v105
  %1136 = vmatprep.subr.mxu0 0.0
  %1137 = vmatpush1.msra.mxu0 %v106
  %1138 = vmatprep.subr.mxu0 0.0
  %1139 = vmatpush1.msra.mxu0 %v107
  %1140 = vmatprep.subr.mxu0 0.0
  %1141 = vmatpush1.msra.mxu0 %v108
  %1142 = vmatprep.subr.mxu0 0.0
  %1143 = vmatpush1.msra.mxu0 %v109
  %1144 = vmatprep.subr.mxu0 0.0
  %1145 = vmatpush1.msra.mxu0 %v110
  %1146 = vmatprep.subr.mxu0 0.0
  %1147 = vmatpush1.msra.mxu0 %v111
  %1148 = vmatprep.subr.mxu0 0.0
  %1149 = vmatpush1.msra.mxu0 %v112
  %1150 = vmatprep.subr.mxu0 0.0
  %1151 = vmatpush1.msra.mxu0 %v113
  %1152 = vmatprep.subr.mxu0 0.0
  %1153 = vmatpush1.msra.mxu0 %v114
  %1154 = vmatprep.subr.mxu0 0.0
  %1155 = vmatpush1.msra.mxu0 %v115
  %1156 = vmatprep.subr.mxu0 0.0
  %1157 = vmatpush1.msra.mxu0 %v116
  %1158 = vmatprep.subr.mxu0 0.0
  %1159 = vmatpush1.msra.mxu0 %v117
  %1160 = vmatprep.subr.mxu0 0.0
  %1161 = vmatpush1.msra.mxu0 %v118
  %1162 = vmatprep.mubr.f32.mxu0 %v893
  %1163 = vmatmul.mubr.f32.gmra.mrb[0].mxu0 %v892
  %v1164 = vpop.f32.mrb[0].mxu0
  %v1165 = vadd.f32 %v1080, %v1164
  %v1166 = vpop.f32.mrb[0].mxu0
  %1167 = vmatprep.mubr.f32.mxu0 %v900
  %1168 = vmatmul.mubr.f32.gmra.mrb[0].mxu0 %v899
  %v1169 = vpop.f32.mrb[0].mxu0
  %v1170 = vadd.f32 %v1085, %v1169
  %v1171 = vpop.f32.mrb[0].mxu0
  %1172 = vmatprep.mubr.f32.mxu0 %v907
  %1173 = vmatmul.mubr.f32.gmra.mrb[0].mxu0 %v906
  %v1174 = vpop.f32.mrb[0].mxu0
  %v1175 = vadd.f32 %v1090, %v1174
  %v1176 = vpop.f32.mrb[0].mxu0
  %1177 = vmatprep.mubr.f32.mxu0 %v914
  %1178 = vmatmul.mubr.f32.gmra.mrb[0].mxu0 %v913
  %v1179 = vpop.f32.mrb[0].mxu0
  %v1180 = vadd.f32 %v1095, %v1179
  %v1181 = vpop.f32.mrb[0].mxu0
  %1182 = vdwg.mxu0
  %1183 = vmatprep.subr.mxu0 0.0
  %1184 = vmatpush1.msra.mxu0 %v119
  %1185 = vmatprep.subr.mxu0 0.0
  %1186 = vmatpush1.msra.mxu0 %v120
  %1187 = vmatprep.subr.mxu0 0.0
  %1188 = vmatpush1.msra.mxu0 %v121
  %1189 = vmatprep.subr.mxu0 0.0
  %1190 = vmatpush1.msra.mxu0 %v122
  %1191 = vmatprep.subr.mxu0 0.0
  %1192 = vmatpush1.msra.mxu0 0.0
  %1193 = vmatprep.subr.mxu0 0.0
  %1194 = vmatpush1.msra.mxu0 0.0
  %1195 = vmatprep.subr.mxu0 0.0
  %1196 = vmatpush1.msra.mxu0 0.0
  %1197 = vmatprep.subr.mxu0 0.0
  %1198 = vmatpush1.msra.mxu0 0.0
  %1199 = vmatprep.subr.mxu0 0.0
  %1200 = vmatpush1.msra.mxu0 0.0
  %1201 = vmatprep.subr.mxu0 0.0
  %1202 = vmatpush1.msra.mxu0 0.0
  %1203 = vmatprep.subr.mxu0 0.0
  %1204 = vmatpush1.msra.mxu0 0.0
  %1205 = vmatprep.subr.mxu0 0.0
  %1206 = vmatpush1.msra.mxu0 0.0
  %1207 = vmatprep.subr.mxu0 0.0
  %1208 = vmatpush1.msra.mxu0 0.0
  %1209 = vmatprep.subr.mxu0 0.0
  %1210 = vmatpush1.msra.mxu0 0.0
  %1211 = vmatprep.subr.mxu0 0.0
  %1212 = vmatpush1.msra.mxu0 0.0
  %1213 = vmatprep.subr.mxu0 0.0
  %1214 = vmatpush1.msra.mxu0 0.0
  %1215 = vmatprep.subr.mxu0 0.0
  %1216 = vmatpush1.msra.mxu0 0.0
  %1217 = vmatprep.subr.mxu0 0.0
  %1218 = vmatpush1.msra.mxu0 0.0
  %1219 = vmatprep.subr.mxu0 0.0
  %1220 = vmatpush1.msra.mxu0 0.0
  %1221 = vmatprep.subr.mxu0 0.0
  %1222 = vmatpush1.msra.mxu0 0.0
  %1223 = vmatprep.subr.mxu0 0.0
  %1224 = vmatpush1.msra.mxu0 0.0
  %1225 = vmatprep.subr.mxu0 0.0
  %1226 = vmatpush1.msra.mxu0 0.0
  %1227 = vmatprep.subr.mxu0 0.0
  %1228 = vmatpush1.msra.mxu0 0.0
  %1229 = vmatprep.subr.mxu0 0.0
  %1230 = vmatpush1.msra.mxu0 0.0
  %1231 = vmatprep.subr.mxu0 0.0
  %1232 = vmatpush1.msra.mxu0 0.0
  %1233 = vmatprep.subr.mxu0 0.0
  %1234 = vmatpush1.msra.mxu0 0.0
  %1235 = vmatprep.subr.mxu0 0.0
  %1236 = vmatpush1.msra.mxu0 0.0
  %1237 = vmatprep.subr.mxu0 0.0
  %1238 = vmatpush1.msra.mxu0 0.0
  %1239 = vmatprep.subr.mxu0 0.0
  %1240 = vmatpush1.msra.mxu0 0.0
  %1241 = vmatprep.subr.mxu0 0.0
  %1242 = vmatpush1.msra.mxu0 0.0
  %1243 = vmatprep.subr.mxu0 0.0
  %1244 = vmatpush1.msra.mxu0 0.0
  %1245 = vmatprep.subr.mxu0 0.0
  %1246 = vmatpush1.msra.mxu0 0.0
  %1247 = vmatprep.mubr.f32.mxu0 0.0
  %1248 = vmatmul.mubr.f32.gmra.mrb[0].mxu0 %v917
  %v1249 = vpop.f32.mrb[0].mxu0
  %v1250 = vadd.f32 %v1165, %v1249
  %v1251 = vpop.f32.mrb[0].mxu0
  %1252 = vmatprep.mubr.f32.mxu0 0.0
  %1253 = vmatmul.mubr.f32.gmra.mrb[0].mxu0 %v920
  %v1254 = vpop.f32.mrb[0].mxu0
  %v1255 = vadd.f32 %v1170, %v1254
  %v1256 = vpop.f32.mrb[0].mxu0
  %1257 = vmatprep.mubr.f32.mxu0 0.0
  %1258 = vmatmul.mubr.f32.gmra.mrb[0].mxu0 %v923
  %v1259 = vpop.f32.mrb[0].mxu0
  %v1260 = vadd.f32 %v1175, %v1259
  %v1261 = vpop.f32.mrb[0].mxu0
  %1262 = vmatprep.mubr.f32.mxu0 0.0
  %1263 = vmatmul.mubr.f32.gmra.mrb[0].mxu0 %v926
  %v1264 = vpop.f32.mrb[0].mxu0
  %v1265 = vadd.f32 %v1180, %v1264
  %v1266 = vpop.f32.mrb[0].mxu0
  %1267 = vdwg.mxu0
  %v1268 = vld [vmem:[%s3] sm:$0xff]
  %v1269 = vld [vmem:[%s3 + $0x8] sm:$0xff]
  %v1270 = vld [vmem:[%s3 + $0x10] sm:$0xff]
  %v1271 = vld [vmem:[%s3 + $0x18] sm:$0xff]
  %v1272 = vld [vmem:[%s3 + $0x20] sm:$0xff]
  %v1273 = vld [vmem:[%s3 + $0x28] sm:$0xff]
  %v1274 = vld [vmem:[%s3 + $0x30] sm:$0xff]
  %v1275 = vld [vmem:[%s3 + $0x38] sm:$0xff]
  %v1276 = vld [vmem:[%s3 + $0x40] sm:$0xff]
  %v1277 = vld [vmem:[%s3 + $0x48] sm:$0xff]
  %v1278 = vld [vmem:[%s3 + $0x50] sm:$0xff]
  %v1279 = vld [vmem:[%s3 + $0x58] sm:$0xff]
  %v1280 = vld [vmem:[%s3 + $0x60] sm:$0xff]
  %v1281 = vld [vmem:[%s3 + $0x68] sm:$0xff]
  %v1282 = vld [vmem:[%s3 + $0x70] sm:$0xff]
  %v1283 = vld [vmem:[%s3 + $0x78] sm:$0xff]
  %v1284 = vld [vmem:[%s3 + $0x80] sm:$0xff]
  %v1285 = vld [vmem:[%s3 + $0x88] sm:$0xff]
  %v1286 = vld [vmem:[%s3 + $0x90] sm:$0xff]
  %v1287 = vld [vmem:[%s3 + $0x98] sm:$0xff]
  %v1288 = vld [vmem:[%s3 + $0xa0] sm:$0xff]
  %v1289 = vld [vmem:[%s3 + $0xa8] sm:$0xff]
  %v1290 = vld [vmem:[%s3 + $0xb0] sm:$0xff]
  %v1291 = vld [vmem:[%s3 + $0xb8] sm:$0xff]
  %v1292 = vld [vmem:[%s3 + $0xc0] sm:$0xff]
  %v1293 = vld [vmem:[%s3 + $0xc8] sm:$0xff]
  %v1294 = vld [vmem:[%s3 + $0xd0] sm:$0xff]
  %v1295 = vld [vmem:[%s3 + $0xd8] sm:$0xff]
  %v1297 = vsel %vm151, %v1274, 0
  %v1300 = vsel %vm151, %v1281, 0
  %v1303 = vsel %vm151, %v1288, 0
  %v1306 = vsel %vm151, %v1295, 0
  %1308 = vmatprep.subr.mxu0 0.0
  %1309 = vmatpush1.msra.mxu0 %v23
  %1310 = vmatprep.subr.mxu0 0.0
  %1311 = vmatpush1.msra.mxu0 %v24
  %1312 = vmatprep.subr.mxu0 0.0
  %1313 = vmatpush1.msra.mxu0 %v25
  %1314 = vmatprep.subr.mxu0 0.0
  %1315 = vmatpush1.msra.mxu0 %v26
  %1316 = vmatprep.subr.mxu0 0.0
  %1317 = vmatpush1.msra.mxu0 %v27
  %1318 = vmatprep.subr.mxu0 0.0
  %1319 = vmatpush1.msra.mxu0 %v28
  %1320 = vmatprep.subr.mxu0 0.0
  %1321 = vmatpush1.msra.mxu0 %v29
  %1322 = vmatprep.subr.mxu0 0.0
  %1323 = vmatpush1.msra.mxu0 %v30
  %1324 = vmatprep.subr.mxu0 0.0
  %1325 = vmatpush1.msra.mxu0 %v31
  %1326 = vmatprep.subr.mxu0 0.0
  %1327 = vmatpush1.msra.mxu0 %v32
  %1328 = vmatprep.subr.mxu0 0.0
  %1329 = vmatpush1.msra.mxu0 %v33
  %1330 = vmatprep.subr.mxu0 0.0
  %1331 = vmatpush1.msra.mxu0 %v34
  %1332 = vmatprep.subr.mxu0 0.0
  %1333 = vmatpush1.msra.mxu0 %v35
  %1334 = vmatprep.subr.mxu0 0.0
  %1335 = vmatpush1.msra.mxu0 %v36
  %1336 = vmatprep.subr.mxu0 0.0
  %1337 = vmatpush1.msra.mxu0 %v37
  %1338 = vmatprep.subr.mxu0 0.0
  %1339 = vmatpush1.msra.mxu0 %v38
  %1340 = vmatprep.subr.mxu0 0.0
  %1341 = vmatpush1.msra.mxu0 %v39
  %1342 = vmatprep.subr.mxu0 0.0
  %1343 = vmatpush1.msra.mxu0 %v40
  %1344 = vmatprep.subr.mxu0 0.0
  %1345 = vmatpush1.msra.mxu0 %v41
  %1346 = vmatprep.subr.mxu0 0.0
  %1347 = vmatpush1.msra.mxu0 %v42
  %1348 = vmatprep.subr.mxu0 0.0
  %1349 = vmatpush1.msra.mxu0 %v43
  %1350 = vmatprep.subr.mxu0 0.0
  %1351 = vmatpush1.msra.mxu0 %v44
  %1352 = vmatprep.subr.mxu0 0.0
  %1353 = vmatpush1.msra.mxu0 %v45
  %1354 = vmatprep.subr.mxu0 0.0
  %1355 = vmatpush1.msra.mxu0 %v46
  %1356 = vmatprep.subr.mxu0 0.0
  %1357 = vmatpush1.msra.mxu0 %v47
  %1358 = vmatprep.subr.mxu0 0.0
  %1359 = vmatpush1.msra.mxu0 %v48
  %1360 = vmatprep.subr.mxu0 0.0
  %1361 = vmatpush1.msra.mxu0 %v49
  %1362 = vmatprep.subr.mxu0 0.0
  %1363 = vmatpush1.msra.mxu0 %v50
  %1364 = vmatprep.subr.mxu0 0.0
  %1365 = vmatpush1.msra.mxu0 %v51
  %1366 = vmatprep.subr.mxu0 0.0
  %1367 = vmatpush1.msra.mxu0 %v52
  %1368 = vmatprep.subr.mxu0 0.0
  %1369 = vmatpush1.msra.mxu0 %v53
  %1370 = vmatprep.subr.mxu0 0.0
  %1371 = vmatpush1.msra.mxu0 %v54
  %1372 = vmatprep.mubr.f32.mxu0 %v1269
  %1373 = vmatmul.mubr.f32.gmra.mrb[0].mxu0 %v1268
  %v1374 = vpop.f32.mrb[0].mxu0
  %v1375 = vadd.f32 0.0, %v1374
  %v1376 = vpop.f32.mrb[0].mxu0
  %1377 = vmatprep.mubr.f32.mxu0 %v1276
  %1378 = vmatmul.mubr.f32.gmra.mrb[0].mxu0 %v1275
  %v1379 = vpop.f32.mrb[0].mxu0
  %v1380 = vadd.f32 0.0, %v1379
  %v1381 = vpop.f32.mrb[0].mxu0
  %1382 = vmatprep.mubr.f32.mxu0 %v1283
  %1383 = vmatmul.mubr.f32.gmra.mrb[0].mxu0 %v1282
  %v1384 = vpop.f32.mrb[0].mxu0
  %v1385 = vadd.f32 0.0, %v1384
  %v1386 = vpop.f32.mrb[0].mxu0
  %1387 = vmatprep.mubr.f32.mxu0 %v1290
  %1388 = vmatmul.mubr.f32.gmra.mrb[0].mxu0 %v1289
  %v1389 = vpop.f32.mrb[0].mxu0
  %v1390 = vadd.f32 0.0, %v1389
  %v1391 = vpop.f32.mrb[0].mxu0
  %1392 = vdwg.mxu0
  %1393 = vmatprep.subr.mxu0 0.0
  %1394 = vmatpush1.msra.mxu0 %v55
  %1395 = vmatprep.subr.mxu0 0.0
  %1396 = vmatpush1.msra.mxu0 %v56
  %1397 = vmatprep.subr.mxu0 0.0
  %1398 = vmatpush1.msra.mxu0 %v57
  %1399 = vmatprep.subr.mxu0 0.0
  %1400 = vmatpush1.msra.mxu0 %v58
  %1401 = vmatprep.subr.mxu0 0.0
  %1402 = vmatpush1.msra.mxu0 %v59
  %1403 = vmatprep.subr.mxu0 0.0
  %1404 = vmatpush1.msra.mxu0 %v60
  %1405 = vmatprep.subr.mxu0 0.0
  %1406 = vmatpush1.msra.mxu0 %v61
  %1407 = vmatprep.subr.mxu0 0.0
  %1408 = vmatpush1.msra.mxu0 %v62
  %1409 = vmatprep.subr.mxu0 0.0
  %1410 = vmatpush1.msra.mxu0 %v63
  %1411 = vmatprep.subr.mxu0 0.0
  %1412 = vmatpush1.msra.mxu0 %v64
  %1413 = vmatprep.subr.mxu0 0.0
  %1414 = vmatpush1.msra.mxu0 %v65
  %1415 = vmatprep.subr.mxu0 0.0
  %1416 = vmatpush1.msra.mxu0 %v66
  %1417 = vmatprep.subr.mxu0 0.0
  %1418 = vmatpush1.msra.mxu0 %v67
  %1419 = vmatprep.subr.mxu0 0.0
  %1420 = vmatpush1.msra.mxu0 %v68
  %1421 = vmatprep.subr.mxu0 0.0
  %1422 = vmatpush1.msra.mxu0 %v69
  %1423 = vmatprep.subr.mxu0 0.0
  %1424 = vmatpush1.msra.mxu0 %v70
  %1425 = vmatprep.subr.mxu0 0.0
  %1426 = vmatpush1.msra.mxu0 %v71
  %1427 = vmatprep.subr.mxu0 0.0
  %1428 = vmatpush1.msra.mxu0 %v72
  %1429 = vmatprep.subr.mxu0 0.0
  %1430 = vmatpush1.msra.mxu0 %v73
  %1431 = vmatprep.subr.mxu0 0.0
  %1432 = vmatpush1.msra.mxu0 %v74
  %1433 = vmatprep.subr.mxu0 0.0
  %1434 = vmatpush1.msra.mxu0 %v75
  %1435 = vmatprep.subr.mxu0 0.0
  %1436 = vmatpush1.msra.mxu0 %v76
  %1437 = vmatprep.subr.mxu0 0.0
  %1438 = vmatpush1.msra.mxu0 %v77
  %1439 = vmatprep.subr.mxu0 0.0
  %1440 = vmatpush1.msra.mxu0 %v78
  %1441 = vmatprep.subr.mxu0 0.0
  %1442 = vmatpush1.msra.mxu0 %v79
  %1443 = vmatprep.subr.mxu0 0.0
  %1444 = vmatpush1.msra.mxu0 %v80
  %1445 = vmatprep.subr.mxu0 0.0
  %1446 = vmatpush1.msra.mxu0 %v81
  %1447 = vmatprep.subr.mxu0 0.0
  %1448 = vmatpush1.msra.mxu0 %v82
  %1449 = vmatprep.subr.mxu0 0.0
  %1450 = vmatpush1.msra.mxu0 %v83
  %1451 = vmatprep.subr.mxu0 0.0
  %1452 = vmatpush1.msra.mxu0 %v84
  %1453 = vmatprep.subr.mxu0 0.0
  %1454 = vmatpush1.msra.mxu0 %v85
  %1455 = vmatprep.subr.mxu0 0.0
  %1456 = vmatpush1.msra.mxu0 %v86
  %1457 = vmatprep.mubr.f32.mxu0 %v1271
  %1458 = vmatmul.mubr.f32.gmra.mrb[0].mxu0 %v1270
  %v1459 = vpop.f32.mrb[0].mxu0
  %v1460 = vadd.f32 %v1375, %v1459
  %v1461 = vpop.f32.mrb[0].mxu0
  %1462 = vmatprep.mubr.f32.mxu0 %v1278
  %1463 = vmatmul.mubr.f32.gmra.mrb[0].mxu0 %v1277
  %v1464 = vpop.f32.mrb[0].mxu0
  %v1465 = vadd.f32 %v1380, %v1464
  %v1466 = vpop.f32.mrb[0].mxu0
  %1467 = vmatprep.mubr.f32.mxu0 %v1285
  %1468 = vmatmul.mubr.f32.gmra.mrb[0].mxu0 %v1284
  %v1469 = vpop.f32.mrb[0].mxu0
  %v1470 = vadd.f32 %v1385, %v1469
  %v1471 = vpop.f32.mrb[0].mxu0
  %1472 = vmatprep.mubr.f32.mxu0 %v1292
  %1473 = vmatmul.mubr.f32.gmra.mrb[0].mxu0 %v1291
  %v1474 = vpop.f32.mrb[0].mxu0
  %v1475 = vadd.f32 %v1390, %v1474
  %v1476 = vpop.f32.mrb[0].mxu0
  %1477 = vdwg.mxu0
  %1478 = vmatprep.subr.mxu0 0.0
  %1479 = vmatpush1.msra.mxu0 %v87
  %1480 = vmatprep.subr.mxu0 0.0
  %1481 = vmatpush1.msra.mxu0 %v88
  %1482 = vmatprep.subr.mxu0 0.0
  %1483 = vmatpush1.msra.mxu0 %v89
  %1484 = vmatprep.subr.mxu0 0.0
  %1485 = vmatpush1.msra.mxu0 %v90
  %1486 = vmatprep.subr.mxu0 0.0
  %1487 = vmatpush1.msra.mxu0 %v91
  %1488 = vmatprep.subr.mxu0 0.0
  %1489 = vmatpush1.msra.mxu0 %v92
  %1490 = vmatprep.subr.mxu0 0.0
  %1491 = vmatpush1.msra.mxu0 %v93
  %1492 = vmatprep.subr.mxu0 0.0
  %1493 = vmatpush1.msra.mxu0 %v94
  %1494 = vmatprep.subr.mxu0 0.0
  %1495 = vmatpush1.msra.mxu0 %v95
  %1496 = vmatprep.subr.mxu0 0.0
  %1497 = vmatpush1.msra.mxu0 %v96
  %1498 = vmatprep.subr.mxu0 0.0
  %1499 = vmatpush1.msra.mxu0 %v97
  %1500 = vmatprep.subr.mxu0 0.0
  %1501 = vmatpush1.msra.mxu0 %v98
  %1502 = vmatprep.subr.mxu0 0.0
  %1503 = vmatpush1.msra.mxu0 %v99
  %1504 = vmatprep.subr.mxu0 0.0
  %1505 = vmatpush1.msra.mxu0 %v100
  %1506 = vmatprep.subr.mxu0 0.0
  %1507 = vmatpush1.msra.mxu0 %v101
  %1508 = vmatprep.subr.mxu0 0.0
  %1509 = vmatpush1.msra.mxu0 %v102
  %1510 = vmatprep.subr.mxu0 0.0
  %1511 = vmatpush1.msra.mxu0 %v103
  %1512 = vmatprep.subr.mxu0 0.0
  %1513 = vmatpush1.msra.mxu0 %v104
  %1514 = vmatprep.subr.mxu0 0.0
  %1515 = vmatpush1.msra.mxu0 %v105
  %1516 = vmatprep.subr.mxu0 0.0
  %1517 = vmatpush1.msra.mxu0 %v106
  %1518 = vmatprep.subr.mxu0 0.0
  %1519 = vmatpush1.msra.mxu0 %v107
  %1520 = vmatprep.subr.mxu0 0.0
  %1521 = vmatpush1.msra.mxu0 %v108
  %1522 = vmatprep.subr.mxu0 0.0
  %1523 = vmatpush1.msra.mxu0 %v109
  %1524 = vmatprep.subr.mxu0 0.0
  %1525 = vmatpush1.msra.mxu0 %v110
  %1526 = vmatprep.subr.mxu0 0.0
  %1527 = vmatpush1.msra.mxu0 %v111
  %1528 = vmatprep.subr.mxu0 0.0
  %1529 = vmatpush1.msra.mxu0 %v112
  %1530 = vmatprep.subr.mxu0 0.0
  %1531 = vmatpush1.msra.mxu0 %v113
  %1532 = vmatprep.subr.mxu0 0.0
  %1533 = vmatpush1.msra.mxu0 %v114
  %1534 = vmatprep.subr.mxu0 0.0
  %1535 = vmatpush1.msra.mxu0 %v115
  %1536 = vmatprep.subr.mxu0 0.0
  %1537 = vmatpush1.msra.mxu0 %v116
  %1538 = vmatprep.subr.mxu0 0.0
  %1539 = vmatpush1.msra.mxu0 %v117
  %1540 = vmatprep.subr.mxu0 0.0
  %1541 = vmatpush1.msra.mxu0 %v118
  %1542 = vmatprep.mubr.f32.mxu0 %v1273
  %1543 = vmatmul.mubr.f32.gmra.mrb[0].mxu0 %v1272
  %v1544 = vpop.f32.mrb[0].mxu0
  %v1545 = vadd.f32 %v1460, %v1544
  %v1546 = vpop.f32.mrb[0].mxu0
  %1547 = vmatprep.mubr.f32.mxu0 %v1280
  %1548 = vmatmul.mubr.f32.gmra.mrb[0].mxu0 %v1279
  %v1549 = vpop.f32.mrb[0].mxu0
  %v1550 = vadd.f32 %v1465, %v1549
  %v1551 = vpop.f32.mrb[0].mxu0
  %1552 = vmatprep.mubr.f32.mxu0 %v1287
  %1553 = vmatmul.mubr.f32.gmra.mrb[0].mxu0 %v1286
  %v1554 = vpop.f32.mrb[0].mxu0
  %v1555 = vadd.f32 %v1470, %v1554
  %v1556 = vpop.f32.mrb[0].mxu0
  %1557 = vmatprep.mubr.f32.mxu0 %v1294
  %1558 = vmatmul.mubr.f32.gmra.mrb[0].mxu0 %v1293
  %v1559 = vpop.f32.mrb[0].mxu0
  %v1560 = vadd.f32 %v1475, %v1559
  %v1561 = vpop.f32.mrb[0].mxu0
  %1562 = vdwg.mxu0
  %1563 = vmatprep.subr.mxu0 0.0
  %1564 = vmatpush1.msra.mxu0 %v119
  %1565 = vmatprep.subr.mxu0 0.0
  %1566 = vmatpush1.msra.mxu0 %v120
  %1567 = vmatprep.subr.mxu0 0.0
  %1568 = vmatpush1.msra.mxu0 %v121
  %1569 = vmatprep.subr.mxu0 0.0
  %1570 = vmatpush1.msra.mxu0 %v122
  %1571 = vmatprep.subr.mxu0 0.0
  %1572 = vmatpush1.msra.mxu0 0.0
  %1573 = vmatprep.subr.mxu0 0.0
  %1574 = vmatpush1.msra.mxu0 0.0
  %1575 = vmatprep.subr.mxu0 0.0
  %1576 = vmatpush1.msra.mxu0 0.0
  %1577 = vmatprep.subr.mxu0 0.0
  %1578 = vmatpush1.msra.mxu0 0.0
  %1579 = vmatprep.subr.mxu0 0.0
  %1580 = vmatpush1.msra.mxu0 0.0
  %1581 = vmatprep.subr.mxu0 0.0
  %1582 = vmatpush1.msra.mxu0 0.0
  %1583 = vmatprep.subr.mxu0 0.0
  %1584 = vmatpush1.msra.mxu0 0.0
  %1585 = vmatprep.subr.mxu0 0.0
  %1586 = vmatpush1.msra.mxu0 0.0
  %1587 = vmatprep.subr.mxu0 0.0
  %1588 = vmatpush1.msra.mxu0 0.0
  %1589 = vmatprep.subr.mxu0 0.0
  %1590 = vmatpush1.msra.mxu0 0.0
  %1591 = vmatprep.subr.mxu0 0.0
  %1592 = vmatpush1.msra.mxu0 0.0
  %1593 = vmatprep.subr.mxu0 0.0
  %1594 = vmatpush1.msra.mxu0 0.0
  %1595 = vmatprep.subr.mxu0 0.0
  %1596 = vmatpush1.msra.mxu0 0.0
  %1597 = vmatprep.subr.mxu0 0.0
  %1598 = vmatpush1.msra.mxu0 0.0
  %1599 = vmatprep.subr.mxu0 0.0
  %1600 = vmatpush1.msra.mxu0 0.0
  %1601 = vmatprep.subr.mxu0 0.0
  %1602 = vmatpush1.msra.mxu0 0.0
  %1603 = vmatprep.subr.mxu0 0.0
  %1604 = vmatpush1.msra.mxu0 0.0
  %1605 = vmatprep.subr.mxu0 0.0
  %1606 = vmatpush1.msra.mxu0 0.0
  %1607 = vmatprep.subr.mxu0 0.0
  %1608 = vmatpush1.msra.mxu0 0.0
  %1609 = vmatprep.subr.mxu0 0.0
  %1610 = vmatpush1.msra.mxu0 0.0
  %1611 = vmatprep.subr.mxu0 0.0
  %1612 = vmatpush1.msra.mxu0 0.0
  %1613 = vmatprep.subr.mxu0 0.0
  %1614 = vmatpush1.msra.mxu0 0.0
  %1615 = vmatprep.subr.mxu0 0.0
  %1616 = vmatpush1.msra.mxu0 0.0
  %1617 = vmatprep.subr.mxu0 0.0
  %1618 = vmatpush1.msra.mxu0 0.0
  %1619 = vmatprep.subr.mxu0 0.0
  %1620 = vmatpush1.msra.mxu0 0.0
  %1621 = vmatprep.subr.mxu0 0.0
  %1622 = vmatpush1.msra.mxu0 0.0
  %1623 = vmatprep.subr.mxu0 0.0
  %1624 = vmatpush1.msra.mxu0 0.0
  %1625 = vmatprep.subr.mxu0 0.0
  %1626 = vmatpush1.msra.mxu0 0.0
  %1627 = vmatprep.mubr.f32.mxu0 0.0
  %1628 = vmatmul.mubr.f32.gmra.mrb[0].mxu0 %v1297
  %v1629 = vpop.f32.mrb[0].mxu0
  %v1630 = vadd.f32 %v1545, %v1629
  %v1631 = vpop.f32.mrb[0].mxu0
  %1632 = vmatprep.mubr.f32.mxu0 0.0
  %1633 = vmatmul.mubr.f32.gmra.mrb[0].mxu0 %v1300
  %v1634 = vpop.f32.mrb[0].mxu0
  %v1635 = vadd.f32 %v1550, %v1634
  %v1636 = vpop.f32.mrb[0].mxu0
  %1637 = vmatprep.mubr.f32.mxu0 0.0
  %1638 = vmatmul.mubr.f32.gmra.mrb[0].mxu0 %v1303
  %v1639 = vpop.f32.mrb[0].mxu0
  %v1640 = vadd.f32 %v1555, %v1639
  %v1641 = vpop.f32.mrb[0].mxu0
  %1642 = vmatprep.mubr.f32.mxu0 0.0
  %1643 = vmatmul.mubr.f32.gmra.mrb[0].mxu0 %v1306
  %v1644 = vpop.f32.mrb[0].mxu0
  %v1645 = vadd.f32 %v1560, %v1644
  %v1646 = vpop.f32.mrb[0].mxu0
  %1647 = vdwg.mxu0
  %v1648 = vmax.f32 %v1250, %v1630
  %v1649 = vmax.f32 %v1255, %v1635
  %v1650 = vmax.f32 %v1260, %v1640
  %v1651 = vmax.f32 %v1265, %v1645
  %v1652 = vmax.f32 %v884, %v1648
  %v1653 = vmax.f32 %v885, %v1649
  %v1654 = vmax.f32 %v886, %v1650
  %v1655 = vmax.f32 %v887, %v1651
  %v1656 = vld [vmem:[%s5] sm:$0x1]
  %v1658 = vlaneseq
  %v1659 = vshrl.u32 %v1658, 7
  %v1660 = vsub.s32 0, %v1659
  %v1661 = vrot.slane %v1656, %v1660
  %v1663 = vadd.f32 %v1652, %v1661
  %v1664 = vadd.f32 %v1653, %v1661
  %v1665 = vadd.f32 %v1654, %v1661
  %v1666 = vadd.f32 %v1655, %v1661
  %v1667 = vmax.f32 %v1663, 0.0
  %v1668 = vmax.f32 %v1664, 0.0
  %v1669 = vmax.f32 %v1665, 0.0
  %v1670 = vmax.f32 %v1666, 0.0
  %vm1671 = vcmask 523264
  %1672 = vst.msk [vmem:[%s6] sm:$0xff] %vm1671, %v1667
  %1673 = vst.msk [vmem:[%s6 + $0x8] sm:$0xff] %vm1671, %v1668
  %1674 = vst.msk [vmem:[%s6 + $0x10] sm:$0xff] %vm1671, %v1669
  %1675 = vst.msk [vmem:[%s6 + $0x18] sm:$0xff] %vm1671, %v1670
  // Predicated region
  $region26: #{net_forward.4} parent=0 // pred_check
    _
  $region27: #{net_forward.4} parent=0 // pred_check_branch
    %1677 = sbr.rel (0) target = $region29
  $region28: #{net_forward.4} parent=0 // pred_region
    _
  $region29: #{net_forward.4} parent=0 // pred_fallthru
    _
  // Predicated region
  $region30: #{net_forward.4} parent=0 // pred_check
    _
  $region31: #{net_forward.4} parent=0 // pred_check_branch
    %1679 = sbr.rel (0) target = $region33
  $region32: #{net_forward.4} parent=0 // pred_region
    _
  $region33: #{net_forward.4} parent=0 // pred_fallthru
    _

</llo_original>
